<compile_context>
chip_gen: v5e
topology: v5e:2x2
jax: 0.10.0
libtpu: 0.0.40
codegen_flags: <defaults>
</compile_context>

<pallas_src>
import functools

import jax
import jax.numpy as jnp
from jax import lax
from jax.experimental import pallas as pl
from jax.experimental.pallas import tpu as pltpu

EPS = 1e-5


# ----------------------------- Pallas kernels ------------------------------
def pw_preact_kernel(x_ref, spre_ref, tpre_ref, w_ref, b_ref, spost_ref, tpost_ref, o_ref):
    # a2 = relu(bn2( relu(bn1(x)) @ W1 + b1 ))  -- fused pre/post activation, bf16 MXU operands.
    a = jnp.maximum(x_ref[...] * spre_ref[...] + tpre_ref[...], 0.0)
    y = jnp.dot(a.astype(jnp.bfloat16), w_ref[...],
                preferred_element_type=jnp.float32) + b_ref[...]
    o_ref[...] = jnp.maximum(y * spost_ref[...] + tpost_ref[...], 0.0).astype(o_ref.dtype)


def fused_tail_kernel(*refs, stride, th, wo, has_proj):
    # One output-row tile of: 3x3 conv (9 in-VMEM shifted taps, single K=9*Cmid dot)
    # -> bn3+relu -> 1x1 conv -> + skip (identity or fused 1x1 stride-s projection).
    if has_proj:
        (a2p_ref, xsk_ref, w2_ref, b2_ref, s3_ref, t3_ref,
         w3_ref, b3_ref, wsk_ref, bsk_ref, o_ref) = refs
    else:
        (a2p_ref, xsk_ref, w2_ref, b2_ref, s3_ref, t3_ref,
         w3_ref, b3_ref, o_ref) = refs

    r = pl.program_id(1)
    r0 = r * th                                  # first output row of this tile
    cmid = w2_ref.shape[1]

    if stride == 1:
        # a2p_ref: (Hp, Wp, Cmid); rows [r0, r0+th+2) carry the +/-1 halo.
        tile = a2p_ref[pl.ds(r0, th + 2), :, :]
        taps = [tile[ky:ky + th, kx:kx + wo, :]
                for ky in range(3) for kx in range(3)]
    else:
        # a2p_ref: (Hp, 2, Wph, Cmid) -- columns pre-split by parity in glue, so the
        # stride-2 tap gather is static indexing on major dims only.
        base = r0 * 2
        tile = a2p_ref[pl.ds(base, 2 * th + 2), :, :, :]          # (2th+2, 2, Wph, C)
        planes = []
        for cp in range(2):
            colp = tile[:, cp, :, :]                               # (2th+2, Wph, C)
            colp = colp.reshape(th + 1, 2, colp.shape[-2], cmid)
            planes.append((colp[:, 0, :, :], colp[:, 1, :, :]))    # row parity 0 / 1
        taps = [planes[kx % 2][ky % 2][ky // 2:ky // 2 + th, kx // 2:kx // 2 + wo, :]
                for ky in range(3) for kx in range(3)]

    # Single K = 9*Cmid contraction realizing the 3x3 conv; bn3+relu epilogue in f32.
    tapmat = jnp.concatenate([t.reshape(th * wo, cmid) for t in taps], axis=-1)
    y2 = jnp.dot(tapmat, w2_ref[...], preferred_element_type=jnp.float32) + b2_ref[...]
    a3 = jnp.maximum(y2 * s3_ref[...] + t3_ref[...], 0.0)

    # Final 1x1 conv + skip + residual, all fused (no HBM round trip for a3 / res).
    out = jnp.dot(a3.astype(jnp.bfloat16), w3_ref[...],
                  preferred_element_type=jnp.float32) + b3_ref[...]
    xs = xsk_ref[pl.ds(r0, th), :, :].reshape(th * wo, -1)
    if has_proj:
        out = out + (jnp.dot(xs.astype(jnp.bfloat16), wsk_ref[...],
                             preferred_element_type=jnp.float32) + bsk_ref[...])
    else:
        out = out + xs                                             # identity skip (f32)
    o_ref[...] = out


# ------------------------------ tile choosers -------------------------------
def _row_tile(m):
    # Largest tile (<= 512 rows) that divides m and leaves >= 2 grid steps; else pad m.
    for t in (512, 256, 128, 64, 32, 16, 8):
        if t <= m and m % t == 0 and m // t >= 2:
            return t, m
    if m % 8 == 0:
        return m, m
    mp = ((m + 127) // 128) * 128
    return 128, mp


def _out_row_tile(ho, wo, n, max_th=8):
    divs = [d for d in range(min(ho, max_th), 0, -1) if ho % d == 0]
    for d in divs:                       # prefer >= 4 total grid steps (2 cores on v7x)
        if (d * wo) % 8 == 0 and n * (ho // d) >= 4:
            return d
    for d in divs:
        if (d * wo) % 8 == 0:
            return d
    return ho


# ------------------------------ call wrappers -------------------------------
def pw_preact(x, s_pre, t_pre, w, b, s_post, t_post):
    m, cin = x.shape
    cmid = w.shape[1]
    tm, mp = _row_tile(m)
    xi = x if mp == m else jnp.pad(x, ((0, mp - m), (0, 0)))

    def rep(shape):
        nd = len(shape)
        return pl.BlockSpec(shape, lambda i, _nd=nd: (0,) * _nd)

    out = pl.pallas_call(
        pw_preact_kernel,
        out_shape=jax.ShapeDtypeStruct((mp, cmid), jnp.bfloat16),
        grid=(mp // tm,),
        in_specs=[pl.BlockSpec((tm, cin), lambda i: (i, 0)),
                  rep((1, cin)), rep((1, cin)),
                  rep((cin, cmid)), rep((1, cmid)),
                  rep((1, cmid)), rep((1, cmid))],
        out_specs=pl.BlockSpec((tm, cmid), lambda i: (i, 0)),
        compiler_params=pltpu.CompilerParams(dimension_semantics=("parallel",)),
    )(xi, s_pre[None, :], t_pre[None, :], w.astype(jnp.bfloat16), b[None, :],
      s_post[None, :], t_post[None, :])
    return out if mp == m else out[:m]


def fused_tail(a2p, xsk, w2r, b2, s3, t3, w3, b3, skip, *, stride, ho, wo):
    n = a2p.shape[0]
    cmid = a2p.shape[-1]
    csk = xsk.shape[-1]
    cout = w3.shape[1]
    th = _out_row_tile(ho, wo, n)
    n_rt = ho // th
    has_proj = skip is not None

    def rep(shape):
        nd = len(shape)
        return pl.BlockSpec(shape, lambda b, r, _nd=nd: (0,) * _nd)

    # Per-batch resident planes (block index constant along the row-tile axis).
    plane_spec = pl.BlockSpec((None,) + a2p.shape[1:],
                              lambda b, r, _nd=a2p.ndim: (b,) + (0,) * (_nd - 1))
    xsk_spec = pl.BlockSpec((None, ho, wo, csk), lambda b, r: (b, 0, 0, 0))

    in_specs = [plane_spec, xsk_spec,
                rep((9 * cmid, cmid)), rep((1, cmid)), rep((1, cmid)), rep((1, cmid)),
                rep((cmid, cout)), rep((1, cout))]
    args = [a2p, xsk, w2r, b2[None, :], s3[None, :], t3[None, :], w3, b3[None, :]]
    if has_proj:
        wsk, bsk = skip
        in_specs += [rep((csk, cout)), rep((1, cout))]
        args += [wsk, bsk[None, :]]

    kern = functools.partial(fused_tail_kernel, stride=stride, th=th, wo=wo,
                             has_proj=has_proj)
    out = pl.pallas_call(
        kern,
        out_shape=jax.ShapeDtypeStruct((n * ho * wo, cout), jnp.float32),
        grid=(n, n_rt),
        in_specs=in_specs,
        out_specs=pl.BlockSpec((th * wo, cout),
                               lambda b, r, _nrt=n_rt: (b * _nrt + r, 0)),
        compiler_params=pltpu.CompilerParams(
            dimension_semantics=("parallel", "parallel")),
    )(*args)
    return out.reshape(n, ho, wo, cout)


# ------------------------------- model glue ---------------------------------
def fold_bn(bn):
    scale = bn["gamma"] / jnp.sqrt(bn["var"] + EPS)
    shift = bn["beta"] - bn["mean"] * scale
    return scale, shift


def bottleneck_block(x, p, stride):
    # x: NHWC float32
    n, h, w_, cin = x.shape
    cmid = p["w1"].shape[1]
    cout = p["w3"].shape[1]
    s1, t1 = fold_bn(p["bn1"])
    s2, t2 = fold_bn(p["bn2"])
    s3, t3 = fold_bn(p["bn3"])
    ho = (h + 2 - 3) // stride + 1
    wo = (w_ + 2 - 3) // stride + 1

    # Stage 1: 1x1 conv with fused bn1+relu pre-act and bn2+relu post-act (bf16 output).
    a2 = pw_preact(x.reshape(-1, cin), s1, t1, p["w1"], p["b1"], s2, t2)
    a2 = a2.reshape(n, h, w_, cmid)

    # Zero-pad the activated tensor so the fused kernel reads halo'd tiles straight from
    # the resident VMEM plane (extra bottom/right pad covers odd sizes under stride 2).
    a2p = jnp.pad(a2, ((0, 0), (1, 1 + stride * ho - h), (1, 1 + stride * wo - w_), (0, 0)))
    if stride == 2:
        hp = a2p.shape[1]
        wph = a2p.shape[2] // 2
        # Split columns by parity (one small XLA transpose on bf16) so the kernel's
        # stride-2 tap gather uses only static major-dim indexing.
        a2p = a2p.reshape(n, hp, wph, 2, cmid).transpose(0, 1, 3, 2, 4)

    has_proj = (stride != 1) or (cin != cout)
    if has_proj:
        # Quarter-size (Ho, Wo) subsample feeding the fused projection-skip matmul.
        xsk = x[:, ::stride, ::stride, :][:, :ho, :wo, :]
        skip = (p["wsk"].astype(jnp.bfloat16), p["bsk"])
    else:
        xsk = x
        skip = None

    w2r = p["w2"].reshape(9 * cmid, cmid).astype(jnp.bfloat16)
    return fused_tail(a2p, xsk, w2r, p["b2"], s3, t3,
                      p["w3"].astype(jnp.bfloat16), p["b3"], skip,
                      stride=stride, ho=ho, wo=wo)


def transunet_encoder_conv_block(x_nchw, params):
    x = jnp.transpose(x_nchw, (0, 2, 3, 1)).astype(jnp.float32)   # NCHW -> NHWC
    for i, p in enumerate(params):
        x = bottleneck_block(x, p, 2 if i == 0 else 1)
    return jnp.transpose(x, (0, 3, 1, 2))                          # NHWC -> NCHW


# ----------------------------- parameter init --------------------------------
def init_bn(key, c):
    k1, k2, k3, k4 = jax.random.split(key, 4)
    return dict(gamma=1.0 + 0.1 * jax.random.normal(k1, (c,), jnp.float32),
                beta=0.1 * jax.random.normal(k2, (c,), jnp.float32),
                mean=0.1 * jax.random.normal(k3, (c,), jnp.float32),
                var=1.0 + 0.1 * jax.random.uniform(k4, (c,), jnp.float32))


def init_block(key, cin, cout, cmid, stride):
    ks = jax.random.split(key, 12)

    def w(k, shape, fan_in):
        return jax.random.normal(k, shape, jnp.float32) * (2.0 / fan_in) ** 0.5

    p = dict(
        bn1=init_bn(ks[0], cin),
        w1=w(ks[1], (cin, cmid), cin),
        b1=0.01 * jax.random.normal(ks[2], (cmid,), jnp.float32),
        bn2=init_bn(ks[3], cmid),
        w2=w(ks[4], (3, 3, cmid, cmid), 9 * cmid),
        b2=0.01 * jax.random.normal(ks[5], (cmid,), jnp.float32),
        bn3=init_bn(ks[6], cmid),
        w3=w(ks[7], (cmid, cout), cmid),
        b3=0.01 * jax.random.normal(ks[8], (cout,), jnp.float32),
    )
    if stride != 1 or cin != cout:
        p["wsk"] = w(ks[9], (cin, cout), cin)
        p["bsk"] = 0.01 * jax.random.normal(ks[10], (cout,), jnp.float32)
    return p


# ----------------------------- pure-JAX reference ----------------------------
def _ref_block(x, p, stride):
    # Mirrors the kernels' mixed precision: conv operands in bf16, f32 accumulation,
    # BN / ReLU / bias / residual math in f32, a2 stored in bf16.
    bf = jnp.bfloat16

    def bn(v, b):
        return (v - b["mean"]) / jnp.sqrt(b["var"] + EPS) * b["gamma"] + b["beta"]

    dn = ("NHWC", "HWIO", "NHWC")

    def conv(a, w, strides, pad):
        return lax.conv_general_dilated(a.astype(bf), w.astype(bf), strides, pad,
                                        dimension_numbers=dn,
                                        preferred_element_type=jnp.float32)

    a1 = jax.nn.relu(bn(x, p["bn1"]))
    y1 = conv(a1, p["w1"][None, None], (1, 1), "VALID") + p["b1"]
    a2 = jax.nn.relu(bn(y1, p["bn2"])).astype(bf).astype(jnp.float32)
    y2 = conv(a2, p["w2"], (stride, stride), ((1, 1), (1, 1))) + p["b2"]
    a3 = jax.nn.relu(bn(y2, p["bn3"]))
    y3 = conv(a3, p["w3"][None, None], (1, 1), "VALID") + p["b3"]
    if "wsk" in p:
        res = conv(x, p["wsk"][None, None], (stride, stride), "VALID") + p["bsk"]
    else:
        res = x
    return y3 + res


def _ref_model(x_nchw, params):
    x = jnp.transpose(x_nchw, (0, 2, 3, 1)).astype(jnp.float32)
    for i, p in enumerate(params):
        x = _ref_block(x, p, 2 if i == 0 else 1)
    return jnp.transpose(x, (0, 3, 1, 2))


# ----------------------------------- main ------------------------------------
if __name__ == "__main__":
    N, CIN, COUT, H, W, NUM_BLOCKS = 2, 4, 8, 16, 16, 2
    key = jax.random.PRNGKey(0)
    kx, kp = jax.random.split(key)
    x = jax.random.normal(kx, (N, CIN, H, W), jnp.float32)          # NCHW, like PyTorch

    bkeys = jax.random.split(kp, NUM_BLOCKS)
    params = [init_block(bkeys[i],
                         CIN if i == 0 else COUT,
                         COUT, COUT,
                         2 if i == 0 else 1)
              for i in range(NUM_BLOCKS)]

    out = jax.jit(transunet_encoder_conv_block)(x, params)
    out = jax.block_until_ready(out)

    ref = _ref_model(x, params)
    assert out.shape == ref.shape == (N, COUT, H // 2, W // 2), (out.shape, ref.shape)
    assert jnp.allclose(out, ref, rtol=2e-2, atol=2e-2), float(jnp.max(jnp.abs(out - ref)))
    print("KERNEL_OK")
</pallas_src>

<mosaic_0001>
module attributes {stable_mosaic.version = 11 : i64} {
  func.func @fused_tail_kernel(%arg0: i32, %arg1: i32, %arg2: memref<1x18x2x9x8xbf16, #tpu.memory_space<vmem>>, %arg3: memref<1x8x8x4xf32, #tpu.memory_space<vmem>>, %arg4: memref<72x8xbf16, #tpu.memory_space<vmem>>, %arg5: memref<1x8xf32, #tpu.memory_space<vmem>>, %arg6: memref<1x8xf32, #tpu.memory_space<vmem>>, %arg7: memref<1x8xf32, #tpu.memory_space<vmem>>, %arg8: memref<8x8xbf16, #tpu.memory_space<vmem>>, %arg9: memref<1x8xf32, #tpu.memory_space<vmem>>, %arg10: memref<4x8xbf16, #tpu.memory_space<vmem>>, %arg11: memref<1x8xf32, #tpu.memory_space<vmem>>, %arg12: memref<32x8xf32, #tpu.memory_space<vmem>>) attributes {dimension_semantics = [#tpu.dimension_semantics<parallel>, #tpu.dimension_semantics<parallel>], iteration_bounds = array<i64: 2, 2>, scalar_prefetch = 0 : i64, scratch_operands = 0 : i64, tpu.core_type = #tpu.core_type<tc>, window_params = [{transform_indices = @transform_0, window_bounds = array<i64: 1, 18, 2, 9, 8>}, {transform_indices = @transform_1, window_bounds = array<i64: 1, 8, 8, 4>}, {pipeline_mode = #tpu.pipeline_mode<synchronous>, transform_indices = @transform_2, window_bounds = array<i64: 72, 8>}, {pipeline_mode = #tpu.pipeline_mode<synchronous>, transform_indices = @transform_3, window_bounds = array<i64: 1, 8>}, {pipeline_mode = #tpu.pipeline_mode<synchronous>, transform_indices = @transform_4, window_bounds = array<i64: 1, 8>}, {pipeline_mode = #tpu.pipeline_mode<synchronous>, transform_indices = @transform_5, window_bounds = array<i64: 1, 8>}, {pipeline_mode = #tpu.pipeline_mode<synchronous>, transform_indices = @transform_6, window_bounds = array<i64: 8, 8>}, {pipeline_mode = #tpu.pipeline_mode<synchronous>, transform_indices = @transform_7, window_bounds = array<i64: 1, 8>}, {pipeline_mode = #tpu.pipeline_mode<synchronous>, transform_indices = @transform_8, window_bounds = array<i64: 4, 8>}, {pipeline_mode = #tpu.pipeline_mode<synchronous>, transform_indices = @transform_9, window_bounds = array<i64: 1, 8>}, {transform_indices = @transform_10, window_bounds = array<i64: 32, 8>}]} {
    %c4_i32 = arith.constant 4 : i32
    %0 = arith.muli %arg1, %c4_i32 : i32
    %c2_i32 = arith.constant 2 : i32
    %1 = arith.muli %0, %c2_i32 : i32
    %c0 = arith.constant 0 : index
    %2 = arith.index_cast %1 : i32 to index
    %c0_0 = arith.constant 0 : index
    %c0_1 = arith.constant 0 : index
    %c0_2 = arith.constant 0 : index
    %3 = vector.load %arg2[%c0, %2, %c0_0, %c0_1, %c0_2] : memref<1x18x2x9x8xbf16, #tpu.memory_space<vmem>>, vector<1x10x2x9x8xbf16>
    %4 = vector.shape_cast %3 : vector<1x10x2x9x8xbf16> to vector<10x2x9x8xbf16>
    %5 = vector.extract_strided_slice %4 {offsets = [0, 0, 0, 0], sizes = [10, 1, 9, 8], strides = [1, 1, 1, 1]} : vector<10x2x9x8xbf16> to vector<10x1x9x8xbf16>
    %6 = vector.shape_cast %5 : vector<10x1x9x8xbf16> to vector<10x9x8xbf16>
    %7 = vector.shape_cast %6 : vector<10x9x8xbf16> to vector<5x2x9x8xbf16>
    %8 = vector.extract_strided_slice %7 {offsets = [0, 0, 0, 0], sizes = [5, 1, 9, 8], strides = [1, 1, 1, 1]} : vector<5x2x9x8xbf16> to vector<5x1x9x8xbf16>
    %9 = vector.shape_cast %8 : vector<5x1x9x8xbf16> to vector<5x9x8xbf16>
    %10 = vector.extract_strided_slice %7 {offsets = [0, 1, 0, 0], sizes = [5, 1, 9, 8], strides = [1, 1, 1, 1]} : vector<5x2x9x8xbf16> to vector<5x1x9x8xbf16>
    %11 = vector.shape_cast %10 : vector<5x1x9x8xbf16> to vector<5x9x8xbf16>
    %12 = vector.extract_strided_slice %4 {offsets = [0, 1, 0, 0], sizes = [10, 1, 9, 8], strides = [1, 1, 1, 1]} : vector<10x2x9x8xbf16> to vector<10x1x9x8xbf16>
    %13 = vector.shape_cast %12 : vector<10x1x9x8xbf16> to vector<10x9x8xbf16>
    %14 = vector.shape_cast %13 : vector<10x9x8xbf16> to vector<5x2x9x8xbf16>
    %15 = vector.extract_strided_slice %14 {offsets = [0, 0, 0, 0], sizes = [5, 1, 9, 8], strides = [1, 1, 1, 1]} : vector<5x2x9x8xbf16> to vector<5x1x9x8xbf16>
    %16 = vector.shape_cast %15 : vector<5x1x9x8xbf16> to vector<5x9x8xbf16>
    %17 = vector.extract_strided_slice %14 {offsets = [0, 1, 0, 0], sizes = [5, 1, 9, 8], strides = [1, 1, 1, 1]} : vector<5x2x9x8xbf16> to vector<5x1x9x8xbf16>
    %18 = vector.shape_cast %17 : vector<5x1x9x8xbf16> to vector<5x9x8xbf16>
    %19 = vector.extract_strided_slice %9 {offsets = [0, 0, 0], sizes = [4, 8, 8], strides = [1, 1, 1]} : vector<5x9x8xbf16> to vector<4x8x8xbf16>
    %20 = vector.extract_strided_slice %16 {offsets = [0, 0, 0], sizes = [4, 8, 8], strides = [1, 1, 1]} : vector<5x9x8xbf16> to vector<4x8x8xbf16>
    %21 = vector.extract_strided_slice %9 {offsets = [0, 1, 0], sizes = [4, 8, 8], strides = [1, 1, 1]} : vector<5x9x8xbf16> to vector<4x8x8xbf16>
    %22 = vector.extract_strided_slice %11 {offsets = [0, 0, 0], sizes = [4, 8, 8], strides = [1, 1, 1]} : vector<5x9x8xbf16> to vector<4x8x8xbf16>
    %23 = vector.extract_strided_slice %18 {offsets = [0, 0, 0], sizes = [4, 8, 8], strides = [1, 1, 1]} : vector<5x9x8xbf16> to vector<4x8x8xbf16>
    %24 = vector.extract_strided_slice %11 {offsets = [0, 1, 0], sizes = [4, 8, 8], strides = [1, 1, 1]} : vector<5x9x8xbf16> to vector<4x8x8xbf16>
    %25 = vector.extract_strided_slice %9 {offsets = [1, 0, 0], sizes = [4, 8, 8], strides = [1, 1, 1]} : vector<5x9x8xbf16> to vector<4x8x8xbf16>
    %26 = vector.extract_strided_slice %16 {offsets = [1, 0, 0], sizes = [4, 8, 8], strides = [1, 1, 1]} : vector<5x9x8xbf16> to vector<4x8x8xbf16>
    %27 = vector.extract_strided_slice %9 {offsets = [1, 1, 0], sizes = [4, 8, 8], strides = [1, 1, 1]} : vector<5x9x8xbf16> to vector<4x8x8xbf16>
    %28 = vector.shape_cast %19 : vector<4x8x8xbf16> to vector<32x8xbf16>
    %29 = vector.shape_cast %20 : vector<4x8x8xbf16> to vector<32x8xbf16>
    %30 = vector.shape_cast %21 : vector<4x8x8xbf16> to vector<32x8xbf16>
    %31 = vector.shape_cast %22 : vector<4x8x8xbf16> to vector<32x8xbf16>
    %32 = vector.shape_cast %23 : vector<4x8x8xbf16> to vector<32x8xbf16>
    %33 = vector.shape_cast %24 : vector<4x8x8xbf16> to vector<32x8xbf16>
    %34 = vector.shape_cast %25 : vector<4x8x8xbf16> to vector<32x8xbf16>
    %35 = vector.shape_cast %26 : vector<4x8x8xbf16> to vector<32x8xbf16>
    %36 = vector.shape_cast %27 : vector<4x8x8xbf16> to vector<32x8xbf16>
    %37 = tpu.concatenate %28, %29, %30, %31, %32, %33, %34, %35, %36 in 1 : vector<32x8xbf16>, vector<32x8xbf16>, vector<32x8xbf16>, vector<32x8xbf16>, vector<32x8xbf16>, vector<32x8xbf16>, vector<32x8xbf16>, vector<32x8xbf16>, vector<32x8xbf16> -> vector<32x72xbf16>
    %c0_3 = arith.constant 0 : index
    %c0_4 = arith.constant 0 : index
    %38 = vector.load %arg4[%c0_3, %c0_4] : memref<72x8xbf16, #tpu.memory_space<vmem>>, vector<72x8xbf16>
    %cst = arith.constant dense<0.000000e+00> : vector<32x8xf32>
    %39 = tpu.matmul %37, %38, %cst {dimension_numbers = #tpu.dot_dimension_numbers<[1], [0], [0], [1], [0, 0, 1, 1], [], []>} : vector<32x72xbf16>, vector<72x8xbf16>, vector<32x8xf32> -> vector<32x8xf32>
    %c0_5 = arith.constant 0 : index
    %c0_6 = arith.constant 0 : index
    %40 = vector.load %arg5[%c0_5, %c0_6] : memref<1x8xf32, #tpu.memory_space<vmem>>, vector<1x8xf32>
    %41 = vector.broadcast %40 : vector<1x8xf32> to vector<32x8xf32>
    %42 = arith.addf %39, %41 : vector<32x8xf32>
    %c0_7 = arith.constant 0 : index
    %c0_8 = arith.constant 0 : index
    %43 = vector.load %arg6[%c0_7, %c0_8] : memref<1x8xf32, #tpu.memory_space<vmem>>, vector<1x8xf32>
    %44 = vector.broadcast %43 : vector<1x8xf32> to vector<32x8xf32>
    %45 = arith.mulf %42, %44 : vector<32x8xf32>
    %c0_9 = arith.constant 0 : index
    %c0_10 = arith.constant 0 : index
    %46 = vector.load %arg7[%c0_9, %c0_10] : memref<1x8xf32, #tpu.memory_space<vmem>>, vector<1x8xf32>
    %47 = vector.broadcast %46 : vector<1x8xf32> to vector<32x8xf32>
    %48 = arith.addf %45, %47 : vector<32x8xf32>
    %cst_11 = arith.constant 0.000000e+00 : f32
    %49 = vector.broadcast %cst_11 : f32 to vector<32x8xf32>
    %50 = arith.maximumf %48, %49 : vector<32x8xf32>
    %51 = arith.truncf %50 : vector<32x8xf32> to vector<32x8xbf16>
    %c0_12 = arith.constant 0 : index
    %c0_13 = arith.constant 0 : index
    %52 = vector.load %arg8[%c0_12, %c0_13] : memref<8x8xbf16, #tpu.memory_space<vmem>>, vector<8x8xbf16>
    %cst_14 = arith.constant dense<0.000000e+00> : vector<32x8xf32>
    %53 = tpu.matmul %51, %52, %cst_14 {dimension_numbers = #tpu.dot_dimension_numbers<[1], [0], [0], [1], [0, 0, 1, 1], [], []>} : vector<32x8xbf16>, vector<8x8xbf16>, vector<32x8xf32> -> vector<32x8xf32>
    %c0_15 = arith.constant 0 : index
    %c0_16 = arith.constant 0 : index
    %54 = vector.load %arg9[%c0_15, %c0_16] : memref<1x8xf32, #tpu.memory_space<vmem>>, vector<1x8xf32>
    %55 = vector.broadcast %54 : vector<1x8xf32> to vector<32x8xf32>
    %56 = arith.addf %53, %55 : vector<32x8xf32>
    %c0_17 = arith.constant 0 : index
    %57 = arith.index_cast %0 : i32 to index
    %c0_18 = arith.constant 0 : index
    %c0_19 = arith.constant 0 : index
    %58 = vector.load %arg3[%c0_17, %57, %c0_18, %c0_19] : memref<1x8x8x4xf32, #tpu.memory_space<vmem>>, vector<1x4x8x4xf32>
    %59 = vector.shape_cast %58 : vector<1x4x8x4xf32> to vector<4x8x4xf32>
    %60 = vector.shape_cast %59 : vector<4x8x4xf32> to vector<32x4xf32>
    %61 = arith.truncf %60 : vector<32x4xf32> to vector<32x4xbf16>
    %c0_20 = arith.constant 0 : index
    %c0_21 = arith.constant 0 : index
    %62 = vector.load %arg10[%c0_20, %c0_21] : memref<4x8xbf16, #tpu.memory_space<vmem>>, vector<4x8xbf16>
    %cst_22 = arith.constant dense<0.000000e+00> : vector<32x8xf32>
    %63 = tpu.matmul %61, %62, %cst_22 {dimension_numbers = #tpu.dot_dimension_numbers<[1], [0], [0], [1], [0, 0, 1, 1], [], []>} : vector<32x4xbf16>, vector<4x8xbf16>, vector<32x8xf32> -> vector<32x8xf32>
    %c0_23 = arith.constant 0 : index
    %c0_24 = arith.constant 0 : index
    %64 = vector.load %arg11[%c0_23, %c0_24] : memref<1x8xf32, #tpu.memory_space<vmem>>, vector<1x8xf32>
    %65 = vector.broadcast %64 : vector<1x8xf32> to vector<32x8xf32>
    %66 = arith.addf %63, %65 : vector<32x8xf32>
    %67 = arith.addf %56, %66 : vector<32x8xf32>
    %c0_25 = arith.constant 0 : index
    %c0_26 = arith.constant 0 : index
    %68 = vector.load %arg12[%c0_25, %c0_26] : memref<32x8xf32, #tpu.memory_space<vmem>>, vector<32x8xf32>
    tpu.vector_store %arg12[%c0_25, %c0_26], %67 {strides = array<i32>} : memref<32x8xf32, #tpu.memory_space<vmem>>, vector<32x8xf32>,
    return
  }
  func.func @transform_0(%arg0: i32, %arg1: i32) -> (i32, i32, i32, i32, i32) {
    %c0_i32 = arith.constant 0 : i32
    %c0_i32_0 = arith.constant 0 : i32
    %c0_i32_1 = arith.constant 0 : i32
    %c0_i32_2 = arith.constant 0 : i32
    %c0_i32_3 = arith.constant 0 : i32
    return %arg0, %c0_i32, %c0_i32_0, %c0_i32_1, %c0_i32_2 : i32, i32, i32, i32, i32
  }
  func.func @transform_1(%arg0: i32, %arg1: i32) -> (i32, i32, i32, i32) {
    %c0_i32 = arith.constant 0 : i32
    %c0_i32_0 = arith.constant 0 : i32
    %c0_i32_1 = arith.constant 0 : i32
    %c0_i32_2 = arith.constant 0 : i32
    return %arg0, %c0_i32, %c0_i32_0, %c0_i32_1 : i32, i32, i32, i32
  }
  func.func @transform_2(%arg0: i32, %arg1: i32) -> (i32, i32) {
    %c0_i32 = arith.constant 0 : i32
    %c0_i32_0 = arith.constant 0 : i32
    %c0_i32_1 = arith.constant 0 : i32
    return %c0_i32, %c0_i32_0 : i32, i32
  }
  func.func @transform_3(%arg0: i32, %arg1: i32) -> (i32, i32) {
    %c0_i32 = arith.constant 0 : i32
    %c0_i32_0 = arith.constant 0 : i32
    %c0_i32_1 = arith.constant 0 : i32
    return %c0_i32, %c0_i32_0 : i32, i32
  }
  func.func @transform_4(%arg0: i32, %arg1: i32) -> (i32, i32) {
    %c0_i32 = arith.constant 0 : i32
    %c0_i32_0 = arith.constant 0 : i32
    %c0_i32_1 = arith.constant 0 : i32
    return %c0_i32, %c0_i32_0 : i32, i32
  }
  func.func @transform_5(%arg0: i32, %arg1: i32) -> (i32, i32) {
    %c0_i32 = arith.constant 0 : i32
    %c0_i32_0 = arith.constant 0 : i32
    %c0_i32_1 = arith.constant 0 : i32
    return %c0_i32, %c0_i32_0 : i32, i32
  }
  func.func @transform_6(%arg0: i32, %arg1: i32) -> (i32, i32) {
    %c0_i32 = arith.constant 0 : i32
    %c0_i32_0 = arith.constant 0 : i32
    %c0_i32_1 = arith.constant 0 : i32
    return %c0_i32, %c0_i32_0 : i32, i32
  }
  func.func @transform_7(%arg0: i32, %arg1: i32) -> (i32, i32) {
    %c0_i32 = arith.constant 0 : i32
    %c0_i32_0 = arith.constant 0 : i32
    %c0_i32_1 = arith.constant 0 : i32
    return %c0_i32, %c0_i32_0 : i32, i32
  }
  func.func @transform_8(%arg0: i32, %arg1: i32) -> (i32, i32) {
    %c0_i32 = arith.constant 0 : i32
    %c0_i32_0 = arith.constant 0 : i32
    %c0_i32_1 = arith.constant 0 : i32
    return %c0_i32, %c0_i32_0 : i32, i32
  }
  func.func @transform_9(%arg0: i32, %arg1: i32) -> (i32, i32) {
    %c0_i32 = arith.constant 0 : i32
    %c0_i32_0 = arith.constant 0 : i32
    %c0_i32_1 = arith.constant 0 : i32
    return %c0_i32, %c0_i32_0 : i32, i32
  }
  func.func @transform_10(%arg0: i32, %arg1: i32) -> (i32, i32) {
    %c2_i32 = arith.constant 2 : i32
    %0 = arith.muli %arg0, %c2_i32 : i32
    %1 = arith.addi %0, %arg1 : i32
    %c0_i32 = arith.constant 0 : i32
    %c0_i32_0 = arith.constant 0 : i32
    return %1, %c0_i32 : i32, i32
  }
}

module attributes {stable_mosaic.version = 11 : i64} {
  func.func @pw_preact_kernel(%arg0: i32, %arg1: memref<256x4xf32, #tpu.memory_space<vmem>>, %arg2: memref<1x4xf32, #tpu.memory_space<vmem>>, %arg3: memref<1x4xf32, #tpu.memory_space<vmem>>, %arg4: memref<4x8xbf16, #tpu.memory_space<vmem>>, %arg5: memref<1x8xf32, #tpu.memory_space<vmem>>, %arg6: memref<1x8xf32, #tpu.memory_space<vmem>>, %arg7: memref<1x8xf32, #tpu.memory_space<vmem>>, %arg8: memref<256x8xbf16, #tpu.memory_space<vmem>>) attributes {dimension_semantics = [#tpu.dimension_semantics<parallel>], iteration_bounds = array<i64: 2>, scalar_prefetch = 0 : i64, scratch_operands = 0 : i64, tpu.core_type = #tpu.core_type<tc>, window_params = [{transform_indices = @transform_0, window_bounds = array<i64: 256, 4>}, {pipeline_mode = #tpu.pipeline_mode<synchronous>, transform_indices = @transform_1, window_bounds = array<i64: 1, 4>}, {pipeline_mode = #tpu.pipeline_mode<synchronous>, transform_indices = @transform_2, window_bounds = array<i64: 1, 4>}, {pipeline_mode = #tpu.pipeline_mode<synchronous>, transform_indices = @transform_3, window_bounds = array<i64: 4, 8>}, {pipeline_mode = #tpu.pipeline_mode<synchronous>, transform_indices = @transform_4, window_bounds = array<i64: 1, 8>}, {pipeline_mode = #tpu.pipeline_mode<synchronous>, transform_indices = @transform_5, window_bounds = array<i64: 1, 8>}, {pipeline_mode = #tpu.pipeline_mode<synchronous>, transform_indices = @transform_6, window_bounds = array<i64: 1, 8>}, {transform_indices = @transform_7, window_bounds = array<i64: 256, 8>}]} {
    %c0 = arith.constant 0 : index
    %c0_0 = arith.constant 0 : index
    %0 = vector.load %arg1[%c0, %c0_0] : memref<256x4xf32, #tpu.memory_space<vmem>>, vector<256x4xf32>
    %c0_1 = arith.constant 0 : index
    %c0_2 = arith.constant 0 : index
    %1 = vector.load %arg2[%c0_1, %c0_2] : memref<1x4xf32, #tpu.memory_space<vmem>>, vector<1x4xf32>
    %2 = vector.broadcast %1 : vector<1x4xf32> to vector<256x4xf32>
    %3 = arith.mulf %0, %2 : vector<256x4xf32>
    %c0_3 = arith.constant 0 : index
    %c0_4 = arith.constant 0 : index
    %4 = vector.load %arg3[%c0_3, %c0_4] : memref<1x4xf32, #tpu.memory_space<vmem>>, vector<1x4xf32>
    %5 = vector.broadcast %4 : vector<1x4xf32> to vector<256x4xf32>
    %6 = arith.addf %3, %5 : vector<256x4xf32>
    %cst = arith.constant 0.000000e+00 : f32
    %7 = vector.broadcast %cst : f32 to vector<256x4xf32>
    %8 = arith.maximumf %6, %7 : vector<256x4xf32>
    %9 = arith.truncf %8 : vector<256x4xf32> to vector<256x4xbf16>
    %c0_5 = arith.constant 0 : index
    %c0_6 = arith.constant 0 : index
    %10 = vector.load %arg4[%c0_5, %c0_6] : memref<4x8xbf16, #tpu.memory_space<vmem>>, vector<4x8xbf16>
    %cst_7 = arith.constant dense<0.000000e+00> : vector<256x8xf32>
    %11 = tpu.matmul %9, %10, %cst_7 {dimension_numbers = #tpu.dot_dimension_numbers<[1], [0], [0], [1], [0, 0, 1, 1], [], []>} : vector<256x4xbf16>, vector<4x8xbf16>, vector<256x8xf32> -> vector<256x8xf32>
    %c0_8 = arith.constant 0 : index
    %c0_9 = arith.constant 0 : index
    %12 = vector.load %arg5[%c0_8, %c0_9] : memref<1x8xf32, #tpu.memory_space<vmem>>, vector<1x8xf32>
    %13 = vector.broadcast %12 : vector<1x8xf32> to vector<256x8xf32>
    %14 = arith.addf %11, %13 : vector<256x8xf32>
    %c0_10 = arith.constant 0 : index
    %c0_11 = arith.constant 0 : index
    %15 = vector.load %arg6[%c0_10, %c0_11] : memref<1x8xf32, #tpu.memory_space<vmem>>, vector<1x8xf32>
    %16 = vector.broadcast %15 : vector<1x8xf32> to vector<256x8xf32>
    %17 = arith.mulf %14, %16 : vector<256x8xf32>
    %c0_12 = arith.constant 0 : index
    %c0_13 = arith.constant 0 : index
    %18 = vector.load %arg7[%c0_12, %c0_13] : memref<1x8xf32, #tpu.memory_space<vmem>>, vector<1x8xf32>
    %19 = vector.broadcast %18 : vector<1x8xf32> to vector<256x8xf32>
    %20 = arith.addf %17, %19 : vector<256x8xf32>
    %cst_14 = arith.constant 0.000000e+00 : f32
    %21 = vector.broadcast %cst_14 : f32 to vector<256x8xf32>
    %22 = arith.maximumf %20, %21 : vector<256x8xf32>
    %23 = arith.truncf %22 : vector<256x8xf32> to vector<256x8xbf16>
    %c0_15 = arith.constant 0 : index
    %c0_16 = arith.constant 0 : index
    %24 = vector.load %arg8[%c0_15, %c0_16] : memref<256x8xbf16, #tpu.memory_space<vmem>>, vector<256x8xbf16>
    tpu.vector_store %arg8[%c0_15, %c0_16], %23 {strides = array<i32>} : memref<256x8xbf16, #tpu.memory_space<vmem>>, vector<256x8xbf16>,
    return
  }
  func.func @transform_0(%arg0: i32) -> (i32, i32) {
    %c0_i32 = arith.constant 0 : i32
    %c0_i32_0 = arith.constant 0 : i32
    return %arg0, %c0_i32 : i32, i32
  }
  func.func @transform_1(%arg0: i32) -> (i32, i32) {
    %c0_i32 = arith.constant 0 : i32
    %c0_i32_0 = arith.constant 0 : i32
    %c0_i32_1 = arith.constant 0 : i32
    return %c0_i32, %c0_i32_0 : i32, i32
  }
  func.func @transform_2(%arg0: i32) -> (i32, i32) {
    %c0_i32 = arith.constant 0 : i32
    %c0_i32_0 = arith.constant 0 : i32
    %c0_i32_1 = arith.constant 0 : i32
    return %c0_i32, %c0_i32_0 : i32, i32
  }
  func.func @transform_3(%arg0: i32) -> (i32, i32) {
    %c0_i32 = arith.constant 0 : i32
    %c0_i32_0 = arith.constant 0 : i32
    %c0_i32_1 = arith.constant 0 : i32
    return %c0_i32, %c0_i32_0 : i32, i32
  }
  func.func @transform_4(%arg0: i32) -> (i32, i32) {
    %c0_i32 = arith.constant 0 : i32
    %c0_i32_0 = arith.constant 0 : i32
    %c0_i32_1 = arith.constant 0 : i32
    return %c0_i32, %c0_i32_0 : i32, i32
  }
  func.func @transform_5(%arg0: i32) -> (i32, i32) {
    %c0_i32 = arith.constant 0 : i32
    %c0_i32_0 = arith.constant 0 : i32
    %c0_i32_1 = arith.constant 0 : i32
    return %c0_i32, %c0_i32_0 : i32, i32
  }
  func.func @transform_6(%arg0: i32) -> (i32, i32) {
    %c0_i32 = arith.constant 0 : i32
    %c0_i32_0 = arith.constant 0 : i32
    %c0_i32_1 = arith.constant 0 : i32
    return %c0_i32, %c0_i32_0 : i32, i32
  }
  func.func @transform_7(%arg0: i32) -> (i32, i32) {
    %c0_i32 = arith.constant 0 : i32
    %c0_i32_0 = arith.constant 0 : i32
    return %arg0, %c0_i32 : i32, i32
  }
}

module attributes {stable_mosaic.version = 11 : i64} {
  func.func @pw_preact_kernel(%arg0: i32, %arg1: memref<64x8xf32, #tpu.memory_space<vmem>>, %arg2: memref<1x8xf32, #tpu.memory_space<vmem>>, %arg3: memref<1x8xf32, #tpu.memory_space<vmem>>, %arg4: memref<8x8xbf16, #tpu.memory_space<vmem>>, %arg5: memref<1x8xf32, #tpu.memory_space<vmem>>, %arg6: memref<1x8xf32, #tpu.memory_space<vmem>>, %arg7: memref<1x8xf32, #tpu.memory_space<vmem>>, %arg8: memref<64x8xbf16, #tpu.memory_space<vmem>>) attributes {dimension_semantics = [#tpu.dimension_semantics<parallel>], iteration_bounds = array<i64: 2>, scalar_prefetch = 0 : i64, scratch_operands = 0 : i64, tpu.core_type = #tpu.core_type<tc>, window_params = [{transform_indices = @transform_0, window_bounds = array<i64: 64, 8>}, {pipeline_mode = #tpu.pipeline_mode<synchronous>, transform_indices = @transform_1, window_bounds = array<i64: 1, 8>}, {pipeline_mode = #tpu.pipeline_mode<synchronous>, transform_indices = @transform_2, window_bounds = array<i64: 1, 8>}, {pipeline_mode = #tpu.pipeline_mode<synchronous>, transform_indices = @transform_3, window_bounds = array<i64: 8, 8>}, {pipeline_mode = #tpu.pipeline_mode<synchronous>, transform_indices = @transform_4, window_bounds = array<i64: 1, 8>}, {pipeline_mode = #tpu.pipeline_mode<synchronous>, transform_indices = @transform_5, window_bounds = array<i64: 1, 8>}, {pipeline_mode = #tpu.pipeline_mode<synchronous>, transform_indices = @transform_6, window_bounds = array<i64: 1, 8>}, {transform_indices = @transform_7, window_bounds = array<i64: 64, 8>}]} {
    %c0 = arith.constant 0 : index
    %c0_0 = arith.constant 0 : index
    %0 = vector.load %arg1[%c0, %c0_0] : memref<64x8xf32, #tpu.memory_space<vmem>>, vector<64x8xf32>
    %c0_1 = arith.constant 0 : index
    %c0_2 = arith.constant 0 : index
    %1 = vector.load %arg2[%c0_1, %c0_2] : memref<1x8xf32, #tpu.memory_space<vmem>>, vector<1x8xf32>
    %2 = vector.broadcast %1 : vector<1x8xf32> to vector<64x8xf32>
    %3 = arith.mulf %0, %2 : vector<64x8xf32>
    %c0_3 = arith.constant 0 : index
    %c0_4 = arith.constant 0 : index
    %4 = vector.load %arg3[%c0_3, %c0_4] : memref<1x8xf32, #tpu.memory_space<vmem>>, vector<1x8xf32>
    %5 = vector.broadcast %4 : vector<1x8xf32> to vector<64x8xf32>
    %6 = arith.addf %3, %5 : vector<64x8xf32>
    %cst = arith.constant 0.000000e+00 : f32
    %7 = vector.broadcast %cst : f32 to vector<64x8xf32>
    %8 = arith.maximumf %6, %7 : vector<64x8xf32>
    %9 = arith.truncf %8 : vector<64x8xf32> to vector<64x8xbf16>
    %c0_5 = arith.constant 0 : index
    %c0_6 = arith.constant 0 : index
    %10 = vector.load %arg4[%c0_5, %c0_6] : memref<8x8xbf16, #tpu.memory_space<vmem>>, vector<8x8xbf16>
    %cst_7 = arith.constant dense<0.000000e+00> : vector<64x8xf32>
    %11 = tpu.matmul %9, %10, %cst_7 {dimension_numbers = #tpu.dot_dimension_numbers<[1], [0], [0], [1], [0, 0, 1, 1], [], []>} : vector<64x8xbf16>, vector<8x8xbf16>, vector<64x8xf32> -> vector<64x8xf32>
    %c0_8 = arith.constant 0 : index
    %c0_9 = arith.constant 0 : index
    %12 = vector.load %arg5[%c0_8, %c0_9] : memref<1x8xf32, #tpu.memory_space<vmem>>, vector<1x8xf32>
    %13 = vector.broadcast %12 : vector<1x8xf32> to vector<64x8xf32>
    %14 = arith.addf %11, %13 : vector<64x8xf32>
    %c0_10 = arith.constant 0 : index
    %c0_11 = arith.constant 0 : index
    %15 = vector.load %arg6[%c0_10, %c0_11] : memref<1x8xf32, #tpu.memory_space<vmem>>, vector<1x8xf32>
    %16 = vector.broadcast %15 : vector<1x8xf32> to vector<64x8xf32>
    %17 = arith.mulf %14, %16 : vector<64x8xf32>
    %c0_12 = arith.constant 0 : index
    %c0_13 = arith.constant 0 : index
    %18 = vector.load %arg7[%c0_12, %c0_13] : memref<1x8xf32, #tpu.memory_space<vmem>>, vector<1x8xf32>
    %19 = vector.broadcast %18 : vector<1x8xf32> to vector<64x8xf32>
    %20 = arith.addf %17, %19 : vector<64x8xf32>
    %cst_14 = arith.constant 0.000000e+00 : f32
    %21 = vector.broadcast %cst_14 : f32 to vector<64x8xf32>
    %22 = arith.maximumf %20, %21 : vector<64x8xf32>
    %23 = arith.truncf %22 : vector<64x8xf32> to vector<64x8xbf16>
    %c0_15 = arith.constant 0 : index
    %c0_16 = arith.constant 0 : index
    %24 = vector.load %arg8[%c0_15, %c0_16] : memref<64x8xbf16, #tpu.memory_space<vmem>>, vector<64x8xbf16>
    tpu.vector_store %arg8[%c0_15, %c0_16], %23 {strides = array<i32>} : memref<64x8xbf16, #tpu.memory_space<vmem>>, vector<64x8xbf16>,
    return
  }
  func.func @transform_0(%arg0: i32) -> (i32, i32) {
    %c0_i32 = arith.constant 0 : i32
    %c0_i32_0 = arith.constant 0 : i32
    return %arg0, %c0_i32 : i32, i32
  }
  func.func @transform_1(%arg0: i32) -> (i32, i32) {
    %c0_i32 = arith.constant 0 : i32
    %c0_i32_0 = arith.constant 0 : i32
    %c0_i32_1 = arith.constant 0 : i32
    return %c0_i32, %c0_i32_0 : i32, i32
  }
  func.func @transform_2(%arg0: i32) -> (i32, i32) {
    %c0_i32 = arith.constant 0 : i32
    %c0_i32_0 = arith.constant 0 : i32
    %c0_i32_1 = arith.constant 0 : i32
    return %c0_i32, %c0_i32_0 : i32, i32
  }
  func.func @transform_3(%arg0: i32) -> (i32, i32) {
    %c0_i32 = arith.constant 0 : i32
    %c0_i32_0 = arith.constant 0 : i32
    %c0_i32_1 = arith.constant 0 : i32
    return %c0_i32, %c0_i32_0 : i32, i32
  }
  func.func @transform_4(%arg0: i32) -> (i32, i32) {
    %c0_i32 = arith.constant 0 : i32
    %c0_i32_0 = arith.constant 0 : i32
    %c0_i32_1 = arith.constant 0 : i32
    return %c0_i32, %c0_i32_0 : i32, i32
  }
  func.func @transform_5(%arg0: i32) -> (i32, i32) {
    %c0_i32 = arith.constant 0 : i32
    %c0_i32_0 = arith.constant 0 : i32
    %c0_i32_1 = arith.constant 0 : i32
    return %c0_i32, %c0_i32_0 : i32, i32
  }
  func.func @transform_6(%arg0: i32) -> (i32, i32) {
    %c0_i32 = arith.constant 0 : i32
    %c0_i32_0 = arith.constant 0 : i32
    %c0_i32_1 = arith.constant 0 : i32
    return %c0_i32, %c0_i32_0 : i32, i32
  }
  func.func @transform_7(%arg0: i32) -> (i32, i32) {
    %c0_i32 = arith.constant 0 : i32
    %c0_i32_0 = arith.constant 0 : i32
    return %arg0, %c0_i32 : i32, i32
  }
}

module attributes {stable_mosaic.version = 11 : i64} {
  func.func @fused_tail_kernel(%arg0: i32, %arg1: i32, %arg2: memref<1x10x10x8xbf16, #tpu.memory_space<vmem>>, %arg3: memref<1x8x8x8xf32, #tpu.memory_space<vmem>>, %arg4: memref<72x8xbf16, #tpu.memory_space<vmem>>, %arg5: memref<1x8xf32, #tpu.memory_space<vmem>>, %arg6: memref<1x8xf32, #tpu.memory_space<vmem>>, %arg7: memref<1x8xf32, #tpu.memory_space<vmem>>, %arg8: memref<8x8xbf16, #tpu.memory_space<vmem>>, %arg9: memref<1x8xf32, #tpu.memory_space<vmem>>, %arg10: memref<32x8xf32, #tpu.memory_space<vmem>>) attributes {dimension_semantics = [#tpu.dimension_semantics<parallel>, #tpu.dimension_semantics<parallel>], iteration_bounds = array<i64: 2, 2>, scalar_prefetch = 0 : i64, scratch_operands = 0 : i64, tpu.core_type = #tpu.core_type<tc>, window_params = [{transform_indices = @transform_0, window_bounds = array<i64: 1, 10, 10, 8>}, {transform_indices = @transform_1, window_bounds = array<i64: 1, 8, 8, 8>}, {pipeline_mode = #tpu.pipeline_mode<synchronous>, transform_indices = @transform_2, window_bounds = array<i64: 72, 8>}, {pipeline_mode = #tpu.pipeline_mode<synchronous>, transform_indices = @transform_3, window_bounds = array<i64: 1, 8>}, {pipeline_mode = #tpu.pipeline_mode<synchronous>, transform_indices = @transform_4, window_bounds = array<i64: 1, 8>}, {pipeline_mode = #tpu.pipeline_mode<synchronous>, transform_indices = @transform_5, window_bounds = array<i64: 1, 8>}, {pipeline_mode = #tpu.pipeline_mode<synchronous>, transform_indices = @transform_6, window_bounds = array<i64: 8, 8>}, {pipeline_mode = #tpu.pipeline_mode<synchronous>, transform_indices = @transform_7, window_bounds = array<i64: 1, 8>}, {transform_indices = @transform_8, window_bounds = array<i64: 32, 8>}]} {
    %c4_i32 = arith.constant 4 : i32
    %0 = arith.muli %arg1, %c4_i32 : i32
    %c0 = arith.constant 0 : index
    %1 = arith.index_cast %0 : i32 to index
    %c0_0 = arith.constant 0 : index
    %c0_1 = arith.constant 0 : index
    %2 = vector.load %arg2[%c0, %1, %c0_0, %c0_1] : memref<1x10x10x8xbf16, #tpu.memory_space<vmem>>, vector<1x6x10x8xbf16>
    %3 = vector.shape_cast %2 : vector<1x6x10x8xbf16> to vector<6x10x8xbf16>
    %4 = vector.extract_strided_slice %3 {offsets = [0, 0, 0], sizes = [4, 8, 8], strides = [1, 1, 1]} : vector<6x10x8xbf16> to vector<4x8x8xbf16>
    %5 = vector.extract_strided_slice %3 {offsets = [0, 1, 0], sizes = [4, 8, 8], strides = [1, 1, 1]} : vector<6x10x8xbf16> to vector<4x8x8xbf16>
    %6 = vector.extract_strided_slice %3 {offsets = [0, 2, 0], sizes = [4, 8, 8], strides = [1, 1, 1]} : vector<6x10x8xbf16> to vector<4x8x8xbf16>
    %7 = vector.extract_strided_slice %3 {offsets = [1, 0, 0], sizes = [4, 8, 8], strides = [1, 1, 1]} : vector<6x10x8xbf16> to vector<4x8x8xbf16>
    %8 = vector.extract_strided_slice %3 {offsets = [1, 1, 0], sizes = [4, 8, 8], strides = [1, 1, 1]} : vector<6x10x8xbf16> to vector<4x8x8xbf16>
    %9 = vector.extract_strided_slice %3 {offsets = [1, 2, 0], sizes = [4, 8, 8], strides = [1, 1, 1]} : vector<6x10x8xbf16> to vector<4x8x8xbf16>
    %10 = vector.extract_strided_slice %3 {offsets = [2, 0, 0], sizes = [4, 8, 8], strides = [1, 1, 1]} : vector<6x10x8xbf16> to vector<4x8x8xbf16>
    %11 = vector.extract_strided_slice %3 {offsets = [2, 1, 0], sizes = [4, 8, 8], strides = [1, 1, 1]} : vector<6x10x8xbf16> to vector<4x8x8xbf16>
    %12 = vector.extract_strided_slice %3 {offsets = [2, 2, 0], sizes = [4, 8, 8], strides = [1, 1, 1]} : vector<6x10x8xbf16> to vector<4x8x8xbf16>
    %13 = vector.shape_cast %4 : vector<4x8x8xbf16> to vector<32x8xbf16>
    %14 = vector.shape_cast %5 : vector<4x8x8xbf16> to vector<32x8xbf16>
    %15 = vector.shape_cast %6 : vector<4x8x8xbf16> to vector<32x8xbf16>
    %16 = vector.shape_cast %7 : vector<4x8x8xbf16> to vector<32x8xbf16>
    %17 = vector.shape_cast %8 : vector<4x8x8xbf16> to vector<32x8xbf16>
    %18 = vector.shape_cast %9 : vector<4x8x8xbf16> to vector<32x8xbf16>
    %19 = vector.shape_cast %10 : vector<4x8x8xbf16> to vector<32x8xbf16>
    %20 = vector.shape_cast %11 : vector<4x8x8xbf16> to vector<32x8xbf16>
    %21 = vector.shape_cast %12 : vector<4x8x8xbf16> to vector<32x8xbf16>
    %22 = tpu.concatenate %13, %14, %15, %16, %17, %18, %19, %20, %21 in 1 : vector<32x8xbf16>, vector<32x8xbf16>, vector<32x8xbf16>, vector<32x8xbf16>, vector<32x8xbf16>, vector<32x8xbf16>, vector<32x8xbf16>, vector<32x8xbf16>, vector<32x8xbf16> -> vector<32x72xbf16>
    %c0_2 = arith.constant 0 : index
    %c0_3 = arith.constant 0 : index
    %23 = vector.load %arg4[%c0_2, %c0_3] : memref<72x8xbf16, #tpu.memory_space<vmem>>, vector<72x8xbf16>
    %cst = arith.constant dense<0.000000e+00> : vector<32x8xf32>
    %24 = tpu.matmul %22, %23, %cst {dimension_numbers = #tpu.dot_dimension_numbers<[1], [0], [0], [1], [0, 0, 1, 1], [], []>} : vector<32x72xbf16>, vector<72x8xbf16>, vector<32x8xf32> -> vector<32x8xf32>
    %c0_4 = arith.constant 0 : index
    %c0_5 = arith.constant 0 : index
    %25 = vector.load %arg5[%c0_4, %c0_5] : memref<1x8xf32, #tpu.memory_space<vmem>>, vector<1x8xf32>
    %26 = vector.broadcast %25 : vector<1x8xf32> to vector<32x8xf32>
    %27 = arith.addf %24, %26 : vector<32x8xf32>
    %c0_6 = arith.constant 0 : index
    %c0_7 = arith.constant 0 : index
    %28 = vector.load %arg6[%c0_6, %c0_7] : memref<1x8xf32, #tpu.memory_space<vmem>>, vector<1x8xf32>
    %29 = vector.broadcast %28 : vector<1x8xf32> to vector<32x8xf32>
    %30 = arith.mulf %27, %29 : vector<32x8xf32>
    %c0_8 = arith.constant 0 : index
    %c0_9 = arith.constant 0 : index
    %31 = vector.load %arg7[%c0_8, %c0_9] : memref<1x8xf32, #tpu.memory_space<vmem>>, vector<1x8xf32>
    %32 = vector.broadcast %31 : vector<1x8xf32> to vector<32x8xf32>
    %33 = arith.addf %30, %32 : vector<32x8xf32>
    %cst_10 = arith.constant 0.000000e+00 : f32
    %34 = vector.broadcast %cst_10 : f32 to vector<32x8xf32>
    %35 = arith.maximumf %33, %34 : vector<32x8xf32>
    %36 = arith.truncf %35 : vector<32x8xf32> to vector<32x8xbf16>
    %c0_11 = arith.constant 0 : index
    %c0_12 = arith.constant 0 : index
    %37 = vector.load %arg8[%c0_11, %c0_12] : memref<8x8xbf16, #tpu.memory_space<vmem>>, vector<8x8xbf16>
    %cst_13 = arith.constant dense<0.000000e+00> : vector<32x8xf32>
    %38 = tpu.matmul %36, %37, %cst_13 {dimension_numbers = #tpu.dot_dimension_numbers<[1], [0], [0], [1], [0, 0, 1, 1], [], []>} : vector<32x8xbf16>, vector<8x8xbf16>, vector<32x8xf32> -> vector<32x8xf32>
    %c0_14 = arith.constant 0 : index
    %c0_15 = arith.constant 0 : index
    %39 = vector.load %arg9[%c0_14, %c0_15] : memref<1x8xf32, #tpu.memory_space<vmem>>, vector<1x8xf32>
    %40 = vector.broadcast %39 : vector<1x8xf32> to vector<32x8xf32>
    %41 = arith.addf %38, %40 : vector<32x8xf32>
    %c0_16 = arith.constant 0 : index
    %42 = arith.index_cast %0 : i32 to index
    %c0_17 = arith.constant 0 : index
    %c0_18 = arith.constant 0 : index
    %43 = vector.load %arg3[%c0_16, %42, %c0_17, %c0_18] : memref<1x8x8x8xf32, #tpu.memory_space<vmem>>, vector<1x4x8x8xf32>
    %44 = vector.shape_cast %43 : vector<1x4x8x8xf32> to vector<4x8x8xf32>
    %45 = vector.shape_cast %44 : vector<4x8x8xf32> to vector<32x8xf32>
    %46 = arith.addf %41, %45 : vector<32x8xf32>
    %c0_19 = arith.constant 0 : index
    %c0_20 = arith.constant 0 : index
    %47 = vector.load %arg10[%c0_19, %c0_20] : memref<32x8xf32, #tpu.memory_space<vmem>>, vector<32x8xf32>
    tpu.vector_store %arg10[%c0_19, %c0_20], %46 {strides = array<i32>} : memref<32x8xf32, #tpu.memory_space<vmem>>, vector<32x8xf32>,
    return
  }
  func.func @transform_0(%arg0: i32, %arg1: i32) -> (i32, i32, i32, i32) {
    %c0_i32 = arith.constant 0 : i32
    %c0_i32_0 = arith.constant 0 : i32
    %c0_i32_1 = arith.constant 0 : i32
    %c0_i32_2 = arith.constant 0 : i32
    return %arg0, %c0_i32, %c0_i32_0, %c0_i32_1 : i32, i32, i32, i32
  }
  func.func @transform_1(%arg0: i32, %arg1: i32) -> (i32, i32, i32, i32) {
    %c0_i32 = arith.constant 0 : i32
    %c0_i32_0 = arith.constant 0 : i32
    %c0_i32_1 = arith.constant 0 : i32
    %c0_i32_2 = arith.constant 0 : i32
    return %arg0, %c0_i32, %c0_i32_0, %c0_i32_1 : i32, i32, i32, i32
  }
  func.func @transform_2(%arg0: i32, %arg1: i32) -> (i32, i32) {
    %c0_i32 = arith.constant 0 : i32
    %c0_i32_0 = arith.constant 0 : i32
    %c0_i32_1 = arith.constant 0 : i32
    return %c0_i32, %c0_i32_0 : i32, i32
  }
  func.func @transform_3(%arg0: i32, %arg1: i32) -> (i32, i32) {
    %c0_i32 = arith.constant 0 : i32
    %c0_i32_0 = arith.constant 0 : i32
    %c0_i32_1 = arith.constant 0 : i32
    return %c0_i32, %c0_i32_0 : i32, i32
  }
  func.func @transform_4(%arg0: i32, %arg1: i32) -> (i32, i32) {
    %c0_i32 = arith.constant 0 : i32
    %c0_i32_0 = arith.constant 0 : i32
    %c0_i32_1 = arith.constant 0 : i32
    return %c0_i32, %c0_i32_0 : i32, i32
  }
  func.func @transform_5(%arg0: i32, %arg1: i32) -> (i32, i32) {
    %c0_i32 = arith.constant 0 : i32
    %c0_i32_0 = arith.constant 0 : i32
    %c0_i32_1 = arith.constant 0 : i32
    return %c0_i32, %c0_i32_0 : i32, i32
  }
  func.func @transform_6(%arg0: i32, %arg1: i32) -> (i32, i32) {
    %c0_i32 = arith.constant 0 : i32
    %c0_i32_0 = arith.constant 0 : i32
    %c0_i32_1 = arith.constant 0 : i32
    return %c0_i32, %c0_i32_0 : i32, i32
  }
  func.func @transform_7(%arg0: i32, %arg1: i32) -> (i32, i32) {
    %c0_i32 = arith.constant 0 : i32
    %c0_i32_0 = arith.constant 0 : i32
    %c0_i32_1 = arith.constant 0 : i32
    return %c0_i32, %c0_i32_0 : i32, i32
  }
  func.func @transform_8(%arg0: i32, %arg1: i32) -> (i32, i32) {
    %c2_i32 = arith.constant 2 : i32
    %0 = arith.muli %arg0, %c2_i32 : i32
    %1 = arith.addi %0, %arg1 : i32
    %c0_i32 = arith.constant 0 : i32
    %c0_i32_0 = arith.constant 0 : i32
    return %1, %c0_i32 : i32, i32
  }
}

</mosaic_0001>

<llo_original>
// kernel: transunet_encoder_conv_block.6
$region0: #{transunet_encoder_conv_block.6}
  #allocation0 [shape = 'u32[]', space=smem, size = 0x4, offset = 0x4, fixed_abs, tag = 'smem constant byte address 0x4 - core index']
  #allocation1 [shape = 'u32[72,128]{1,0:T(1,128)}', space=vmem, size = 0x9000, scoped, tag = 'internal scratch']
  %s0 = inlined_call_operand.vmem [shape: f32[128,8], index: 0, kind: input, shape index: {}]
  %s1 = inlined_call_operand.vmem [shape: f32[1,8], index: 1, kind: input, shape index: {}]
  %s2 = inlined_call_operand.vmem [shape: f32[1,8], index: 2, kind: input, shape index: {}]
  %s3 = inlined_call_operand.vmem [shape: bf16[8,8], index: 3, kind: input, shape index: {}]
  %s4 = inlined_call_operand.vmem [shape: f32[1,8], index: 4, kind: input, shape index: {}]
  %s5 = inlined_call_operand.vmem [shape: f32[1,8], index: 5, kind: input, shape index: {}]
  %s6 = inlined_call_operand.vmem [shape: f32[1,8], index: 6, kind: input, shape index: {}]
  %s7 = inlined_call_operand.vmem [shape: bf16[128,8], index: 7, kind: output, shape index: {}]
  %s8 = sld [smem:[#allocation0]]
  $region61: #{transunet_encoder_conv_block.6} parent=0
    _
  %s10 = ssub.s32 1, %s8
  %s11 = scalar_select 0, %s10, %s8
  loop: start=0, step=1, limit=4
  $region2: #{transunet_encoder_conv_block.6} parent=0 // loop_pre_header
    _
  $region3: #{transunet_encoder_conv_block.6} parent=0 // loop_header
    %s13 = sphi 0, %s17
    %p14 = scmp.ge.s32.totalorder %s13, 4
    %s23 = sphi 0, %s25
    %s26 = sphi 0, %s23
    %s27 = sphi 0, %s26
    %s43 = sphi 0, %s27
    %s47 = sphi 0, %s47
    %s49 = sphi 0, %s47
    %s50 = sphi 0, %s49
    %s64 = sphi 0, %s50
    %s68 = sphi 0, %s68
    %s70 = sphi 0, %s68
    %s71 = sphi 0, %s70
    %s85 = sphi 0, %s71
    %s89 = sphi 0, %s89
    %s91 = sphi 0, %s89
    %s92 = sphi 0, %s91
    %s106 = sphi 0, %s92
    %s110 = sphi 0, %s110
    %s112 = sphi 0, %s110
    %s113 = sphi 0, %s112
    %s127 = sphi 0, %s113
    %s131 = sphi 0, %s131
    %s133 = sphi 0, %s131
    %s134 = sphi 0, %s133
    %s148 = sphi 0, %s134
    %s152 = sphi 0, %s152
    %s154 = sphi 0, %s152
    %s155 = sphi 0, %s154
    %s169 = sphi 0, %s155
    %s175 = sphi 0, %s177
    %s178 = sphi 0, %s175
    %s179 = sphi 0, %s178
    %s195 = sphi 0, %s179
  $region4: #{transunet_encoder_conv_block.6} parent=0 // loop_header_branch
    %16 = sbr.rel (%p14) target = $region8
  $region5: #{transunet_encoder_conv_block.6} parent=0 // loop_body
    %s18 = ssub.s32 %s13, 1
    %s19 = ssub.s32 %s13, 2
    %s20 = sadd.s32 %s13, 1
    %s21 = ssub.s32 %s13, %s20
    %p22 = scmp.eq.s32.totalorder %s21, 0
    %s24 = sadd.s32 %s23, 1
    %s25 = scalar_select %p22, %s23, %s24
    %p28 = pneg %p22
    %p29 = scmp.eq.s32.totalorder %s13, 1
    %p30 = por %p28, %p29
    %p31 = scmp.ne.s32.totalorder %s23, %s26
    %p32 = scmp.eq.s32.totalorder %s13, 0
    %p33 = por %p31, %p32
    %p34 = scmp.ne.s32.totalorder %s23, %s26
    %p35 = scmp.eq.s32.totalorder %s18, 1
    %p36 = por %p34, %p35
    %p37 = scmp.ne.s32.totalorder %s26, %s27
    %p38 = scmp.eq.s32.totalorder %s18, 0
    %p39 = por %p37, %p38
    %p40 = scmp.ne.s32.totalorder %s26, %s27
    %p41 = scmp.eq.s32.totalorder %s19, 1
    %p42 = por %p40, %p41
    %p44 = scmp.ne.s32.totalorder %s27, %s43
    %p45 = scmp.eq.s32.totalorder %s19, 0
    %p46 = por %p44, %p45
    %s48 = sadd.s32 %s47, 1
    %p51 = scmp.eq.s32.totalorder %s13, 1
    %p52 = scmp.ne.s32.totalorder %s47, %s49
    %p53 = scmp.eq.s32.totalorder %s13, 0
    %p54 = por %p52, %p53
    %p55 = scmp.ne.s32.totalorder %s47, %s49
    %p56 = scmp.eq.s32.totalorder %s18, 1
    %p57 = por %p55, %p56
    %p58 = scmp.ne.s32.totalorder %s49, %s50
    %p59 = scmp.eq.s32.totalorder %s18, 0
    %p60 = por %p58, %p59
    %p61 = scmp.ne.s32.totalorder %s49, %s50
    %p62 = scmp.eq.s32.totalorder %s19, 1
    %p63 = por %p61, %p62
    %p65 = scmp.ne.s32.totalorder %s50, %s64
    %p66 = scmp.eq.s32.totalorder %s19, 0
    %p67 = por %p65, %p66
    %s69 = sadd.s32 %s68, 1
    %p72 = scmp.eq.s32.totalorder %s13, 1
    %p73 = scmp.ne.s32.totalorder %s68, %s70
    %p74 = scmp.eq.s32.totalorder %s13, 0
    %p75 = por %p73, %p74
    %p76 = scmp.ne.s32.totalorder %s68, %s70
    %p77 = scmp.eq.s32.totalorder %s18, 1
    %p78 = por %p76, %p77
    %p79 = scmp.ne.s32.totalorder %s70, %s71
    %p80 = scmp.eq.s32.totalorder %s18, 0
    %p81 = por %p79, %p80
    %p82 = scmp.ne.s32.totalorder %s70, %s71
    %p83 = scmp.eq.s32.totalorder %s19, 1
    %p84 = por %p82, %p83
    %p86 = scmp.ne.s32.totalorder %s71, %s85
    %p87 = scmp.eq.s32.totalorder %s19, 0
    %p88 = por %p86, %p87
    %s90 = sadd.s32 %s89, 1
    %p93 = scmp.eq.s32.totalorder %s13, 1
    %p94 = scmp.ne.s32.totalorder %s89, %s91
    %p95 = scmp.eq.s32.totalorder %s13, 0
    %p96 = por %p94, %p95
    %p97 = scmp.ne.s32.totalorder %s89, %s91
    %p98 = scmp.eq.s32.totalorder %s18, 1
    %p99 = por %p97, %p98
    %p100 = scmp.ne.s32.totalorder %s91, %s92
    %p101 = scmp.eq.s32.totalorder %s18, 0
    %p102 = por %p100, %p101
    %p103 = scmp.ne.s32.totalorder %s91, %s92
    %p104 = scmp.eq.s32.totalorder %s19, 1
    %p105 = por %p103, %p104
    %p107 = scmp.ne.s32.totalorder %s92, %s106
    %p108 = scmp.eq.s32.totalorder %s19, 0
    %p109 = por %p107, %p108
    %s111 = sadd.s32 %s110, 1
    %p114 = scmp.eq.s32.totalorder %s13, 1
    %p115 = scmp.ne.s32.totalorder %s110, %s112
    %p116 = scmp.eq.s32.totalorder %s13, 0
    %p117 = por %p115, %p116
    %p118 = scmp.ne.s32.totalorder %s110, %s112
    %p119 = scmp.eq.s32.totalorder %s18, 1
    %p120 = por %p118, %p119
    %p121 = scmp.ne.s32.totalorder %s112, %s113
    %p122 = scmp.eq.s32.totalorder %s18, 0
    %p123 = por %p121, %p122
    %p124 = scmp.ne.s32.totalorder %s112, %s113
    %p125 = scmp.eq.s32.totalorder %s19, 1
    %p126 = por %p124, %p125
    %p128 = scmp.ne.s32.totalorder %s113, %s127
    %p129 = scmp.eq.s32.totalorder %s19, 0
    %p130 = por %p128, %p129
    %s132 = sadd.s32 %s131, 1
    %p135 = scmp.eq.s32.totalorder %s13, 1
    %p136 = scmp.ne.s32.totalorder %s131, %s133
    %p137 = scmp.eq.s32.totalorder %s13, 0
    %p138 = por %p136, %p137
    %p139 = scmp.ne.s32.totalorder %s131, %s133
    %p140 = scmp.eq.s32.totalorder %s18, 1
    %p141 = por %p139, %p140
    %p142 = scmp.ne.s32.totalorder %s133, %s134
    %p143 = scmp.eq.s32.totalorder %s18, 0
    %p144 = por %p142, %p143
    %p145 = scmp.ne.s32.totalorder %s133, %s134
    %p146 = scmp.eq.s32.totalorder %s19, 1
    %p147 = por %p145, %p146
    %p149 = scmp.ne.s32.totalorder %s134, %s148
    %p150 = scmp.eq.s32.totalorder %s19, 0
    %p151 = por %p149, %p150
    %s153 = sadd.s32 %s152, 1
    %p156 = scmp.eq.s32.totalorder %s13, 1
    %p157 = scmp.ne.s32.totalorder %s152, %s154
    %p158 = scmp.eq.s32.totalorder %s13, 0
    %p159 = por %p157, %p158
    %p160 = scmp.ne.s32.totalorder %s152, %s154
    %p161 = scmp.eq.s32.totalorder %s18, 1
    %p162 = por %p160, %p161
    %p163 = scmp.ne.s32.totalorder %s154, %s155
    %p164 = scmp.eq.s32.totalorder %s18, 0
    %p165 = por %p163, %p164
    %p166 = scmp.ne.s32.totalorder %s154, %s155
    %p167 = scmp.eq.s32.totalorder %s19, 1
    %p168 = por %p166, %p167
    %p170 = scmp.ne.s32.totalorder %s155, %s169
    %p171 = scmp.eq.s32.totalorder %s19, 0
    %p172 = por %p170, %p171
    %s173 = ssub.s32 %s13, %s20
    %p174 = scmp.eq.s32.totalorder %s173, 0
    %s176 = sadd.s32 %s175, 1
    %s177 = scalar_select %p174, %s175, %s176
    %p180 = pneg %p174
    %p181 = scmp.eq.s32.totalorder %s13, 1
    %p182 = por %p180, %p181
    %p183 = scmp.ne.s32.totalorder %s175, %s178
    %p184 = scmp.eq.s32.totalorder %s13, 0
    %p185 = por %p183, %p184
    %p186 = scmp.ne.s32.totalorder %s175, %s178
    %p187 = scmp.eq.s32.totalorder %s18, 1
    %p188 = por %p186, %p187
    %p189 = scmp.ne.s32.totalorder %s178, %s179
    %p190 = scmp.eq.s32.totalorder %s18, 0
    %p191 = por %p189, %p190
    %p192 = scmp.ne.s32.totalorder %s178, %s179
    %p193 = scmp.eq.s32.totalorder %s19, 1
    %p194 = por %p192, %p193
    %p196 = scmp.ne.s32.totalorder %s179, %s195
    %p197 = scmp.eq.s32.totalorder %s19, 0
    %p198 = por %p196, %p197
    %p199 = scmp.le.s32.totalorder 1, %s13
    %p200 = scmp.lt.s32.totalorder %s13, 3
    %p201 = pnand %p199, %p200
    %p202 = pneg %p201
    // Predicated region
    $region9: #{transunet_encoder_conv_block.6} parent=5 // pred_check
      _
    $region10: #{transunet_encoder_conv_block.6} parent=5 // pred_check_branch
      %204 = sbr.rel (%p201) target = $region12
    $region11: #{transunet_encoder_conv_block.6} parent=5 // pred_region
      %s205 = ssub.s32 %s13, 1
      // Predicated region
      $region13: #{transunet_encoder_conv_block.6} parent=11 // pred_check
        %p206 = pneg %p60
      $region14: #{transunet_encoder_conv_block.6} parent=11 // pred_check_branch
        %208 = sbr.rel (%p206) target = $region16
      $region15: #{transunet_encoder_conv_block.6} parent=11 // pred_region
        _
      $region16: #{transunet_encoder_conv_block.6} parent=11 // pred_fallthru
        _
      // Predicated region
      $region17: #{transunet_encoder_conv_block.6} parent=11 // pred_check
        %p209 = pneg %p81
      $region18: #{transunet_encoder_conv_block.6} parent=11 // pred_check_branch
        %211 = sbr.rel (%p209) target = $region20
      $region19: #{transunet_encoder_conv_block.6} parent=11 // pred_region
        _
      $region20: #{transunet_encoder_conv_block.6} parent=11 // pred_fallthru
        _
      // Predicated region
      $region21: #{transunet_encoder_conv_block.6} parent=11 // pred_check
        %p212 = pneg %p102
      $region22: #{transunet_encoder_conv_block.6} parent=11 // pred_check_branch
        %214 = sbr.rel (%p212) target = $region24
      $region23: #{transunet_encoder_conv_block.6} parent=11 // pred_region
        _
      $region24: #{transunet_encoder_conv_block.6} parent=11 // pred_fallthru
        _
      // Predicated region
      $region25: #{transunet_encoder_conv_block.6} parent=11 // pred_check
        %p215 = pneg %p123
      $region26: #{transunet_encoder_conv_block.6} parent=11 // pred_check_branch
        %217 = sbr.rel (%p215) target = $region28
      $region27: #{transunet_encoder_conv_block.6} parent=11 // pred_region
        _
      $region28: #{transunet_encoder_conv_block.6} parent=11 // pred_fallthru
        _
      // Predicated region
      $region29: #{transunet_encoder_conv_block.6} parent=11 // pred_check
        %p218 = pneg %p144
      $region30: #{transunet_encoder_conv_block.6} parent=11 // pred_check_branch
        %220 = sbr.rel (%p218) target = $region32
      $region31: #{transunet_encoder_conv_block.6} parent=11 // pred_region
        _
      $region32: #{transunet_encoder_conv_block.6} parent=11 // pred_fallthru
        _
      // Predicated region
      $region33: #{transunet_encoder_conv_block.6} parent=11 // pred_check
        %p221 = pneg %p165
      $region34: #{transunet_encoder_conv_block.6} parent=11 // pred_check_branch
        %223 = sbr.rel (%p221) target = $region36
      $region35: #{transunet_encoder_conv_block.6} parent=11 // pred_region
        _
      $region36: #{transunet_encoder_conv_block.6} parent=11 // pred_fallthru
        _
    $region12: #{transunet_encoder_conv_block.6} parent=5 // pred_fallthru
      _
    %p224 = scmp.lt.s32.totalorder %s13, 2
    // Predicated region
    $region37: #{transunet_encoder_conv_block.6} parent=5 // pred_check
      %p225 = pneg %p224
    $region38: #{transunet_encoder_conv_block.6} parent=5 // pred_check_branch
      %227 = sbr.rel (%p225) target = $region40
    $region39: #{transunet_encoder_conv_block.6} parent=5 // pred_region
      // Predicated region
      $region41: #{transunet_encoder_conv_block.6} parent=39 // pred_check
        %p228 = pneg %p33
      $region42: #{transunet_encoder_conv_block.6} parent=39 // pred_check_branch
        %230 = sbr.rel (%p228) target = $region44
      $region43: #{transunet_encoder_conv_block.6} parent=39 // pred_region
        %s231 = smul.u32 8, %s13
        %p232 = scmp.lt.s32.totalorder %s231, 15
        %s233 = scalar_select %p232, %s231, 15
        %s234 = smul.addr %s233, 8
        %s235 = scalar_lea.vmem %s0, %s234
        %s236 = smul.u32 8, %s13
      $region44: #{transunet_encoder_conv_block.6} parent=39 // pred_fallthru
        _
    $region40: #{transunet_encoder_conv_block.6} parent=5 // pred_fallthru
      _
    %p237 = scmp.le.s32.totalorder 1, %s13
    %p238 = scmp.lt.s32.totalorder %s13, 3
    %p239 = pnand %p237, %p238
    %p240 = pneg %p239
    // Predicated region
    $region45: #{transunet_encoder_conv_block.6} parent=5 // pred_check
      _
    $region46: #{transunet_encoder_conv_block.6} parent=5 // pred_check_branch
      %242 = sbr.rel (%p239) target = $region48
    $region47: #{transunet_encoder_conv_block.6} parent=5 // pred_region
      %s243 = ssub.s32 %s13, 1
      %s244 = smul.u32 8, %s18
      %p245 = scmp.lt.s32.totalorder %s244, 15
      %s246 = scalar_select %p245, %s244, 15
      %s247 = smul.addr %s246, 8
      %s248 = scalar_lea.vmem %s0, %s247
      %p249 = pneg %p39
      %p250 = pneg %p36
      %p251 = pneg %p60
      %p252 = pneg %p57
      %p253 = pneg %p81
      %p254 = pneg %p78
      %p255 = pneg %p102
      %p256 = pneg %p99
      %p257 = pneg %p123
      %p258 = pneg %p120
      %p259 = pneg %p144
      %p260 = pneg %p141
      %p261 = pneg %p165
      %p262 = pneg %p162
      %p263 = pneg %p191
      %p264 = pneg %p188
      %s265 = smul.u32 8, %s18
      %p266 = scmp.lt.s32.totalorder %s265, 15
      %s267 = scalar_select %p266, %s265, 15
      %s268 = smul.addr %s267, 4
      %s269 = scalar_lea.vmem %s7, %s268
      %s270 = smul.u32 8, %s18
      %p271 = scmp.lt.s32.totalorder %s270, 15
      %s272 = scalar_select %p271, %s270, 15
      %s273 = smul.addr %s272, 8
      %s274 = scalar_lea.vmem %s0, %s273
      %s275 = smul.u32 8, %s18
      %s276 = smul.u32 8, %s18
      %p277 = scmp.lt.s32.totalorder %s276, 15
      %s278 = scalar_select %p277, %s276, 15
      %s279 = smul.addr %s278, 4
      %s280 = scalar_lea.vmem %s7, %s279
      %s281 = smul.u32 8, %s18
      %v283 = vld [vmem:[%s274] sm:$0xff]
      %v284 = vld [vmem:[%s274 + $0x8] sm:$0xff]
      %v285 = vld [vmem:[%s274 + $0x10] sm:$0xff]
      %v286 = vld [vmem:[%s274 + $0x18] sm:$0xff]
      %v287 = vld [vmem:[%s274 + $0x20] sm:$0xff]
      %v288 = vld [vmem:[%s274 + $0x28] sm:$0xff]
      %v289 = vld [vmem:[%s274 + $0x30] sm:$0xff]
      %v290 = vld [vmem:[%s274 + $0x38] sm:$0xff]
      %v291 = vld [vmem:[%s1] sm:$0x1]
      %v293 = vperm.slane %v291, 0
      %v295 = vmul.f32 %v283, %v293
      %v296 = vmul.f32 %v284, %v293
      %v297 = vmul.f32 %v285, %v293
      %v298 = vmul.f32 %v286, %v293
      %v299 = vmul.f32 %v287, %v293
      %v300 = vmul.f32 %v288, %v293
      %v301 = vmul.f32 %v289, %v293
      %v302 = vmul.f32 %v290, %v293
      %v303 = vld [vmem:[%s2] sm:$0x1]
      %v305 = vperm.slane %v303, 0
      %v307 = vadd.f32 %v295, %v305
      %v308 = vadd.f32 %v296, %v305
      %v309 = vadd.f32 %v297, %v305
      %v310 = vadd.f32 %v298, %v305
      %v311 = vadd.f32 %v299, %v305
      %v312 = vadd.f32 %v300, %v305
      %v313 = vadd.f32 %v301, %v305
      %v314 = vadd.f32 %v302, %v305
      %v315 = vmax.f32 %v307, 0.0
      %v316 = vmax.f32 %v308, 0.0
      %v317 = vmax.f32 %v309, 0.0
      %v318 = vmax.f32 %v310, 0.0
      %v319 = vmax.f32 %v311, 0.0
      %v320 = vmax.f32 %v312, 0.0
      %v321 = vmax.f32 %v313, 0.0
      %v322 = vmax.f32 %v314, 0.0
      %v323 = vpack.c.bf16 %v316, %v315
      %v324 = vpack.c.bf16 %v318, %v317
      %v325 = vpack.c.bf16 %v320, %v319
      %v326 = vpack.c.bf16 %v322, %v321
      %v327 = vld [vmem:[%s3] sm:$0xf]
      %v328 = vld [vmem:[%s4] sm:$0x1]
      %v330 = vperm.slane %v328, 0
      %vm332 = vcmask 64512
      %v334 = vsel %vm332, %v323, 0
      %v337 = vsel %vm332, %v324, 0
      %v340 = vsel %vm332, %v325, 0
      %v343 = vsel %vm332, %v326, 0
      %vm345 = vcmask 1043456
      %v347 = vsel %vm345, %v327, 0
      %349 = vmatpush.bf16.msra.mxu0 0
      %350 = vmatpush.bf16.msra.mxu0 0
      %351 = vmatpush.bf16.msra.mxu0 0
      %352 = vmatpush.bf16.msra.mxu0 0
      %353 = vmatpush.bf16.msra.mxu0 0
      %354 = vmatpush.bf16.msra.mxu0 0
      %355 = vmatpush.bf16.msra.mxu0 0
      %356 = vmatpush.bf16.msra.mxu0 %v347
      %357 = vmatmul.bf16.gmra.mxu0 %v334
      %v358 = vpop.f32.mrf.mxu0
      %v359 = vadd.f32 %v330, %v358
      %v360 = vpop.f32.mrf.mxu0
      %v361 = vadd.f32 %v330, %v360
      %362 = vmatmul.bf16.gmra.mxu0 %v337
      %v363 = vpop.f32.mrf.mxu0
      %v364 = vadd.f32 %v330, %v363
      %v365 = vpop.f32.mrf.mxu0
      %v366 = vadd.f32 %v330, %v365
      %367 = vmatmul.bf16.gmra.mxu0 %v340
      %v368 = vpop.f32.mrf.mxu0
      %v369 = vadd.f32 %v330, %v368
      %v370 = vpop.f32.mrf.mxu0
      %v371 = vadd.f32 %v330, %v370
      %372 = vmatmul.bf16.gmra.mxu0 %v343
      %v373 = vpop.f32.mrf.mxu0
      %v374 = vadd.f32 %v330, %v373
      %v375 = vpop.f32.mrf.mxu0
      %v376 = vadd.f32 %v330, %v375
      %377 = vdwg.mxu0
      %v378 = vld [vmem:[%s5] sm:$0x1]
      %v380 = vperm.slane %v378, 0
      %v382 = vmul.f32 %v359, %v380
      %v383 = vmul.f32 %v361, %v380
      %v384 = vmul.f32 %v364, %v380
      %v385 = vmul.f32 %v366, %v380
      %v386 = vmul.f32 %v369, %v380
      %v387 = vmul.f32 %v371, %v380
      %v388 = vmul.f32 %v374, %v380
      %v389 = vmul.f32 %v376, %v380
      %v390 = vld [vmem:[%s6] sm:$0x1]
      %v392 = vperm.slane %v390, 0
      %v394 = vadd.f32 %v382, %v392
      %v395 = vadd.f32 %v383, %v392
      %v396 = vadd.f32 %v384, %v392
      %v397 = vadd.f32 %v385, %v392
      %v398 = vadd.f32 %v386, %v392
      %v399 = vadd.f32 %v387, %v392
      %v400 = vadd.f32 %v388, %v392
      %v401 = vadd.f32 %v389, %v392
      %v402 = vmax.f32 %v394, 0.0
      %v403 = vmax.f32 %v395, 0.0
      %v404 = vmax.f32 %v396, 0.0
      %v405 = vmax.f32 %v397, 0.0
      %v406 = vmax.f32 %v398, 0.0
      %v407 = vmax.f32 %v399, 0.0
      %v408 = vmax.f32 %v400, 0.0
      %v409 = vmax.f32 %v401, 0.0
      %v410 = vpack.c.bf16 %v402, %v402
      %v411 = vpack.c.bf16 %v403, %v403
      %v412 = vpack.c.bf16 %v404, %v404
      %v413 = vpack.c.bf16 %v405, %v405
      %v414 = vpack.c.bf16 %v406, %v406
      %v415 = vpack.c.bf16 %v407, %v407
      %v416 = vpack.c.bf16 %v408, %v408
      %v417 = vpack.c.bf16 %v409, %v409
      %vm418 = vcmask 60416
      %419 = vst.msk [vmem:[%s280] sm:$0xf] %vm418, %v410
      %420 = vst.msk [vmem:[%s280 + $0x4] sm:$0xf] %vm418, %v411
      %421 = vst.msk [vmem:[%s280 + $0x8] sm:$0xf] %vm418, %v412
      %422 = vst.msk [vmem:[%s280 + $0xc] sm:$0xf] %vm418, %v413
      %423 = vst.msk [vmem:[%s280 + $0x10] sm:$0xf] %vm418, %v414
      %424 = vst.msk [vmem:[%s280 + $0x14] sm:$0xf] %vm418, %v415
      %425 = vst.msk [vmem:[%s280 + $0x18] sm:$0xf] %vm418, %v416
      %426 = vst.msk [vmem:[%s280 + $0x1c] sm:$0xf] %vm418, %v417
      %s427 = smul.u32 8, %s18
      %p428 = scmp.lt.s32.totalorder %s427, 15
      %s429 = scalar_select %p428, %s427, 15
      %s430 = smul.addr %s429, 4
      %s431 = scalar_lea.vmem %s7, %s430
      // Predicated region
      $region49: #{transunet_encoder_conv_block.6} parent=47 // pred_check
        %p432 = pneg %p188
      $region50: #{transunet_encoder_conv_block.6} parent=47 // pred_check_branch
        %434 = sbr.rel (%p432) target = $region52
      $region51: #{transunet_encoder_conv_block.6} parent=47 // pred_region
        %s435 = smul.u32 8, %s18
      $region52: #{transunet_encoder_conv_block.6} parent=47 // pred_fallthru
        _
    $region48: #{transunet_encoder_conv_block.6} parent=5 // pred_fallthru
      _
    %p436 = scmp.le.s32.totalorder 2, %s13
    // Predicated region
    $region53: #{transunet_encoder_conv_block.6} parent=5 // pred_check
      %p437 = pneg %p436
    $region54: #{transunet_encoder_conv_block.6} parent=5 // pred_check_branch
      %439 = sbr.rel (%p437) target = $region56
    $region55: #{transunet_encoder_conv_block.6} parent=5 // pred_region
      %s440 = ssub.s32 %s13, 2
      // Predicated region
      $region57: #{transunet_encoder_conv_block.6} parent=55 // pred_check
        %p441 = pneg %p194
      $region58: #{transunet_encoder_conv_block.6} parent=55 // pred_check_branch
        %443 = sbr.rel (%p441) target = $region60
      $region59: #{transunet_encoder_conv_block.6} parent=55 // pred_region
        %s444 = smul.u32 8, %s19
        %p445 = scmp.lt.s32.totalorder %s444, 15
        %s446 = scalar_select %p445, %s444, 15
        %s447 = smul.addr %s446, 4
        %s448 = scalar_lea.vmem %s7, %s447
      $region60: #{transunet_encoder_conv_block.6} parent=55 // pred_fallthru
        _
    $region56: #{transunet_encoder_conv_block.6} parent=5 // pred_fallthru
      _
  $region6: #{transunet_encoder_conv_block.6} parent=0 // loop_footer
    %s17 = sadd.s32 1, %s13
  $region7: #{transunet_encoder_conv_block.6} parent=0 // loop_footer_branch
    %12 = sbr.rel target = $region3
  $region8: #{transunet_encoder_conv_block.6} parent=0 // loop_exit
    _

// kernel: transunet_encoder_conv_block.5
$region0: #{transunet_encoder_conv_block.5}
  #allocation0 [shape = 'u32[]', space=smem, size = 0x4, offset = 0x4, fixed_abs, tag = 'smem constant byte address 0x4 - core index']
  #allocation1 [shape = 'u32[72,128]{1,0:T(1,128)}', space=vmem, size = 0x9000, scoped, tag = 'internal scratch']
  %s0 = inlined_call_operand.vmem [shape: bf16[2,18,2,9,8], index: 0, kind: input, shape index: {}]
  %s1 = inlined_call_operand.vmem [shape: f32[2,8,8,4], index: 1, kind: input, shape index: {}]
  %s2 = inlined_call_operand.vmem [shape: bf16[72,8], index: 2, kind: input, shape index: {}]
  %s3 = inlined_call_operand.vmem [shape: f32[1,8], index: 3, kind: input, shape index: {}]
  %s4 = inlined_call_operand.vmem [shape: f32[1,8], index: 4, kind: input, shape index: {}]
  %s5 = inlined_call_operand.vmem [shape: f32[1,8], index: 5, kind: input, shape index: {}]
  %s6 = inlined_call_operand.vmem [shape: bf16[8,8], index: 6, kind: input, shape index: {}]
  %s7 = inlined_call_operand.vmem [shape: f32[1,8], index: 7, kind: input, shape index: {}]
  %s8 = inlined_call_operand.vmem [shape: bf16[4,8], index: 8, kind: input, shape index: {}]
  %s9 = inlined_call_operand.vmem [shape: f32[1,8], index: 9, kind: input, shape index: {}]
  %s10 = inlined_call_operand.vmem [shape: f32[128,8], index: 10, kind: output, shape index: {}]
  %s11 = sld [smem:[#allocation0]]
  $region73: #{transunet_encoder_conv_block.5} parent=0
    _
  %s13 = ssub.s32 1, %s11
  %s14 = scalar_select 0, %s13, %s11
  loop: start=0, step=1, limit=6
  $region2: #{transunet_encoder_conv_block.5} parent=0 // loop_pre_header
    _
  $region3: #{transunet_encoder_conv_block.5} parent=0 // loop_header
    %s16 = sphi 0, %s20
    %p17 = scmp.ge.s32.totalorder %s16, 6
    %s23 = sphi 0, %s35
    %s24 = sphi 0, %s31
    %s25 = sphi 0, %s23
    %s26 = sphi 0, %s24
    %s27 = sphi 0, %s25
    %s28 = sphi 0, %s26
    %s38 = sphi 0, %s40
    %s41 = sphi 0, %s38
    %s42 = sphi 0, %s41
    %s58 = sphi 0, %s42
    %s64 = sphi 0, %s66
    %s67 = sphi 0, %s64
    %s68 = sphi 0, %s67
    %s84 = sphi 0, %s68
    %s88 = sphi 0, %s88
    %s90 = sphi 0, %s88
    %s91 = sphi 0, %s90
    %s105 = sphi 0, %s91
    %s109 = sphi 0, %s109
    %s111 = sphi 0, %s109
    %s112 = sphi 0, %s111
    %s126 = sphi 0, %s112
    %s130 = sphi 0, %s130
    %s132 = sphi 0, %s130
    %s133 = sphi 0, %s132
    %s147 = sphi 0, %s133
    %s151 = sphi 0, %s151
    %s153 = sphi 0, %s151
    %s154 = sphi 0, %s153
    %s168 = sphi 0, %s154
    %s172 = sphi 0, %s172
    %s174 = sphi 0, %s172
    %s175 = sphi 0, %s174
    %s189 = sphi 0, %s175
    %s193 = sphi 0, %s193
    %s195 = sphi 0, %s193
    %s196 = sphi 0, %s195
    %s210 = sphi 0, %s196
    %s214 = sphi 0, %s214
    %s216 = sphi 0, %s214
    %s217 = sphi 0, %s216
    %s231 = sphi 0, %s217
    %s235 = sphi 0, %s235
    %s237 = sphi 0, %s235
    %s238 = sphi 0, %s237
    %s252 = sphi 0, %s238
    %s262 = sphi 0, %s264
    %s265 = sphi 0, %s262
    %s266 = sphi 0, %s265
    %s282 = sphi 0, %s266
  $region4: #{transunet_encoder_conv_block.5} parent=0 // loop_header_branch
    %19 = sbr.rel (%p17) target = $region8
  $region5: #{transunet_encoder_conv_block.5} parent=0 // loop_body
    %s21 = ssub.s32 %s16, 1
    %s22 = ssub.s32 %s16, 2
    %s29 = sadd.s32 1, %s24
    %p30 = scmp.ge.s32.totalorder %s29, 2
    %s31 = scalar_select %p30, 0, %s29
    %s32 = sadd.s32 1, %s23
    %s33 = scalar_select %p30, %s32, %s23
    %p34 = scmp.ge.s32.totalorder %s33, 2
    %s35 = scalar_select %p34, 0, %s33
    %s36 = ssub.s32 %s23, %s35
    %p37 = scmp.eq.s32.totalorder %s36, 0
    %s39 = sadd.s32 %s38, 1
    %s40 = scalar_select %p37, %s38, %s39
    %p43 = pneg %p37
    %p44 = scmp.eq.s32.totalorder %s16, 3
    %p45 = por %p43, %p44
    %p46 = scmp.ne.s32.totalorder %s38, %s41
    %p47 = scmp.eq.s32.totalorder %s16, 0
    %p48 = por %p46, %p47
    %p49 = scmp.ne.s32.totalorder %s38, %s41
    %p50 = scmp.eq.s32.totalorder %s21, 3
    %p51 = por %p49, %p50
    %p52 = scmp.ne.s32.totalorder %s41, %s42
    %p53 = scmp.eq.s32.totalorder %s21, 0
    %p54 = por %p52, %p53
    %p55 = scmp.ne.s32.totalorder %s41, %s42
    %p56 = scmp.eq.s32.totalorder %s22, 3
    %p57 = por %p55, %p56
    %p59 = scmp.ne.s32.totalorder %s42, %s58
    %p60 = scmp.eq.s32.totalorder %s22, 0
    %p61 = por %p59, %p60
    %s62 = ssub.s32 %s23, %s35
    %p63 = scmp.eq.s32.totalorder %s62, 0
    %s65 = sadd.s32 %s64, 1
    %s66 = scalar_select %p63, %s64, %s65
    %p69 = pneg %p63
    %p70 = scmp.eq.s32.totalorder %s16, 3
    %p71 = por %p69, %p70
    %p72 = scmp.ne.s32.totalorder %s64, %s67
    %p73 = scmp.eq.s32.totalorder %s16, 0
    %p74 = por %p72, %p73
    %p75 = scmp.ne.s32.totalorder %s64, %s67
    %p76 = scmp.eq.s32.totalorder %s21, 3
    %p77 = por %p75, %p76
    %p78 = scmp.ne.s32.totalorder %s67, %s68
    %p79 = scmp.eq.s32.totalorder %s21, 0
    %p80 = por %p78, %p79
    %p81 = scmp.ne.s32.totalorder %s67, %s68
    %p82 = scmp.eq.s32.totalorder %s22, 3
    %p83 = por %p81, %p82
    %p85 = scmp.ne.s32.totalorder %s68, %s84
    %p86 = scmp.eq.s32.totalorder %s22, 0
    %p87 = por %p85, %p86
    %s89 = sadd.s32 %s88, 1
    %p92 = scmp.eq.s32.totalorder %s16, 3
    %p93 = scmp.ne.s32.totalorder %s88, %s90
    %p94 = scmp.eq.s32.totalorder %s16, 0
    %p95 = por %p93, %p94
    %p96 = scmp.ne.s32.totalorder %s88, %s90
    %p97 = scmp.eq.s32.totalorder %s21, 3
    %p98 = por %p96, %p97
    %p99 = scmp.ne.s32.totalorder %s90, %s91
    %p100 = scmp.eq.s32.totalorder %s21, 0
    %p101 = por %p99, %p100
    %p102 = scmp.ne.s32.totalorder %s90, %s91
    %p103 = scmp.eq.s32.totalorder %s22, 3
    %p104 = por %p102, %p103
    %p106 = scmp.ne.s32.totalorder %s91, %s105
    %p107 = scmp.eq.s32.totalorder %s22, 0
    %p108 = por %p106, %p107
    %s110 = sadd.s32 %s109, 1
    %p113 = scmp.eq.s32.totalorder %s16, 3
    %p114 = scmp.ne.s32.totalorder %s109, %s111
    %p115 = scmp.eq.s32.totalorder %s16, 0
    %p116 = por %p114, %p115
    %p117 = scmp.ne.s32.totalorder %s109, %s111
    %p118 = scmp.eq.s32.totalorder %s21, 3
    %p119 = por %p117, %p118
    %p120 = scmp.ne.s32.totalorder %s111, %s112
    %p121 = scmp.eq.s32.totalorder %s21, 0
    %p122 = por %p120, %p121
    %p123 = scmp.ne.s32.totalorder %s111, %s112
    %p124 = scmp.eq.s32.totalorder %s22, 3
    %p125 = por %p123, %p124
    %p127 = scmp.ne.s32.totalorder %s112, %s126
    %p128 = scmp.eq.s32.totalorder %s22, 0
    %p129 = por %p127, %p128
    %s131 = sadd.s32 %s130, 1
    %p134 = scmp.eq.s32.totalorder %s16, 3
    %p135 = scmp.ne.s32.totalorder %s130, %s132
    %p136 = scmp.eq.s32.totalorder %s16, 0
    %p137 = por %p135, %p136
    %p138 = scmp.ne.s32.totalorder %s130, %s132
    %p139 = scmp.eq.s32.totalorder %s21, 3
    %p140 = por %p138, %p139
    %p141 = scmp.ne.s32.totalorder %s132, %s133
    %p142 = scmp.eq.s32.totalorder %s21, 0
    %p143 = por %p141, %p142
    %p144 = scmp.ne.s32.totalorder %s132, %s133
    %p145 = scmp.eq.s32.totalorder %s22, 3
    %p146 = por %p144, %p145
    %p148 = scmp.ne.s32.totalorder %s133, %s147
    %p149 = scmp.eq.s32.totalorder %s22, 0
    %p150 = por %p148, %p149
    %s152 = sadd.s32 %s151, 1
    %p155 = scmp.eq.s32.totalorder %s16, 3
    %p156 = scmp.ne.s32.totalorder %s151, %s153
    %p157 = scmp.eq.s32.totalorder %s16, 0
    %p158 = por %p156, %p157
    %p159 = scmp.ne.s32.totalorder %s151, %s153
    %p160 = scmp.eq.s32.totalorder %s21, 3
    %p161 = por %p159, %p160
    %p162 = scmp.ne.s32.totalorder %s153, %s154
    %p163 = scmp.eq.s32.totalorder %s21, 0
    %p164 = por %p162, %p163
    %p165 = scmp.ne.s32.totalorder %s153, %s154
    %p166 = scmp.eq.s32.totalorder %s22, 3
    %p167 = por %p165, %p166
    %p169 = scmp.ne.s32.totalorder %s154, %s168
    %p170 = scmp.eq.s32.totalorder %s22, 0
    %p171 = por %p169, %p170
    %s173 = sadd.s32 %s172, 1
    %p176 = scmp.eq.s32.totalorder %s16, 3
    %p177 = scmp.ne.s32.totalorder %s172, %s174
    %p178 = scmp.eq.s32.totalorder %s16, 0
    %p179 = por %p177, %p178
    %p180 = scmp.ne.s32.totalorder %s172, %s174
    %p181 = scmp.eq.s32.totalorder %s21, 3
    %p182 = por %p180, %p181
    %p183 = scmp.ne.s32.totalorder %s174, %s175
    %p184 = scmp.eq.s32.totalorder %s21, 0
    %p185 = por %p183, %p184
    %p186 = scmp.ne.s32.totalorder %s174, %s175
    %p187 = scmp.eq.s32.totalorder %s22, 3
    %p188 = por %p186, %p187
    %p190 = scmp.ne.s32.totalorder %s175, %s189
    %p191 = scmp.eq.s32.totalorder %s22, 0
    %p192 = por %p190, %p191
    %s194 = sadd.s32 %s193, 1
    %p197 = scmp.eq.s32.totalorder %s16, 3
    %p198 = scmp.ne.s32.totalorder %s193, %s195
    %p199 = scmp.eq.s32.totalorder %s16, 0
    %p200 = por %p198, %p199
    %p201 = scmp.ne.s32.totalorder %s193, %s195
    %p202 = scmp.eq.s32.totalorder %s21, 3
    %p203 = por %p201, %p202
    %p204 = scmp.ne.s32.totalorder %s195, %s196
    %p205 = scmp.eq.s32.totalorder %s21, 0
    %p206 = por %p204, %p205
    %p207 = scmp.ne.s32.totalorder %s195, %s196
    %p208 = scmp.eq.s32.totalorder %s22, 3
    %p209 = por %p207, %p208
    %p211 = scmp.ne.s32.totalorder %s196, %s210
    %p212 = scmp.eq.s32.totalorder %s22, 0
    %p213 = por %p211, %p212
    %s215 = sadd.s32 %s214, 1
    %p218 = scmp.eq.s32.totalorder %s16, 3
    %p219 = scmp.ne.s32.totalorder %s214, %s216
    %p220 = scmp.eq.s32.totalorder %s16, 0
    %p221 = por %p219, %p220
    %p222 = scmp.ne.s32.totalorder %s214, %s216
    %p223 = scmp.eq.s32.totalorder %s21, 3
    %p224 = por %p222, %p223
    %p225 = scmp.ne.s32.totalorder %s216, %s217
    %p226 = scmp.eq.s32.totalorder %s21, 0
    %p227 = por %p225, %p226
    %p228 = scmp.ne.s32.totalorder %s216, %s217
    %p229 = scmp.eq.s32.totalorder %s22, 3
    %p230 = por %p228, %p229
    %p232 = scmp.ne.s32.totalorder %s217, %s231
    %p233 = scmp.eq.s32.totalorder %s22, 0
    %p234 = por %p232, %p233
    %s236 = sadd.s32 %s235, 1
    %p239 = scmp.eq.s32.totalorder %s16, 3
    %p240 = scmp.ne.s32.totalorder %s235, %s237
    %p241 = scmp.eq.s32.totalorder %s16, 0
    %p242 = por %p240, %p241
    %p243 = scmp.ne.s32.totalorder %s235, %s237
    %p244 = scmp.eq.s32.totalorder %s21, 3
    %p245 = por %p243, %p244
    %p246 = scmp.ne.s32.totalorder %s237, %s238
    %p247 = scmp.eq.s32.totalorder %s21, 0
    %p248 = por %p246, %p247
    %p249 = scmp.ne.s32.totalorder %s237, %s238
    %p250 = scmp.eq.s32.totalorder %s22, 3
    %p251 = por %p249, %p250
    %p253 = scmp.ne.s32.totalorder %s238, %s252
    %p254 = scmp.eq.s32.totalorder %s22, 0
    %p255 = por %p253, %p254
    %s256 = smul.u32 %s23, 2
    %s257 = sadd.s32 %s256, %s24
    %s258 = smul.u32 %s35, 2
    %s259 = sadd.s32 %s258, %s31
    %s260 = ssub.s32 %s257, %s259
    %p261 = scmp.eq.s32.totalorder %s260, 0
    %s263 = sadd.s32 %s262, 1
    %s264 = scalar_select %p261, %s262, %s263
    %p267 = pneg %p261
    %p268 = scmp.eq.s32.totalorder %s16, 3
    %p269 = por %p267, %p268
    %p270 = scmp.ne.s32.totalorder %s262, %s265
    %p271 = scmp.eq.s32.totalorder %s16, 0
    %p272 = por %p270, %p271
    %p273 = scmp.ne.s32.totalorder %s262, %s265
    %p274 = scmp.eq.s32.totalorder %s21, 3
    %p275 = por %p273, %p274
    %p276 = scmp.ne.s32.totalorder %s265, %s266
    %p277 = scmp.eq.s32.totalorder %s21, 0
    %p278 = por %p276, %p277
    %p279 = scmp.ne.s32.totalorder %s265, %s266
    %p280 = scmp.eq.s32.totalorder %s22, 3
    %p281 = por %p279, %p280
    %p283 = scmp.ne.s32.totalorder %s266, %s282
    %p284 = scmp.eq.s32.totalorder %s22, 0
    %p285 = por %p283, %p284
    %p286 = scmp.le.s32.totalorder 1, %s16
    %p287 = scmp.lt.s32.totalorder %s16, 5
    %p288 = pnand %p286, %p287
    %p289 = pneg %p288
    // Predicated region
    $region9: #{transunet_encoder_conv_block.5} parent=5 // pred_check
      _
    $region10: #{transunet_encoder_conv_block.5} parent=5 // pred_check_branch
      %291 = sbr.rel (%p288) target = $region12
    $region11: #{transunet_encoder_conv_block.5} parent=5 // pred_region
      %s292 = ssub.s32 %s16, 1
      // Predicated region
      $region13: #{transunet_encoder_conv_block.5} parent=11 // pred_check
        %p293 = pneg %p101
      $region14: #{transunet_encoder_conv_block.5} parent=11 // pred_check_branch
        %295 = sbr.rel (%p293) target = $region16
      $region15: #{transunet_encoder_conv_block.5} parent=11 // pred_region
        _
      $region16: #{transunet_encoder_conv_block.5} parent=11 // pred_fallthru
        _
      // Predicated region
      $region17: #{transunet_encoder_conv_block.5} parent=11 // pred_check
        %p296 = pneg %p122
      $region18: #{transunet_encoder_conv_block.5} parent=11 // pred_check_branch
        %298 = sbr.rel (%p296) target = $region20
      $region19: #{transunet_encoder_conv_block.5} parent=11 // pred_region
        _
      $region20: #{transunet_encoder_conv_block.5} parent=11 // pred_fallthru
        _
      // Predicated region
      $region21: #{transunet_encoder_conv_block.5} parent=11 // pred_check
        %p299 = pneg %p143
      $region22: #{transunet_encoder_conv_block.5} parent=11 // pred_check_branch
        %301 = sbr.rel (%p299) target = $region24
      $region23: #{transunet_encoder_conv_block.5} parent=11 // pred_region
        _
      $region24: #{transunet_encoder_conv_block.5} parent=11 // pred_fallthru
        _
      // Predicated region
      $region25: #{transunet_encoder_conv_block.5} parent=11 // pred_check
        %p302 = pneg %p164
      $region26: #{transunet_encoder_conv_block.5} parent=11 // pred_check_branch
        %304 = sbr.rel (%p302) target = $region28
      $region27: #{transunet_encoder_conv_block.5} parent=11 // pred_region
        _
      $region28: #{transunet_encoder_conv_block.5} parent=11 // pred_fallthru
        _
      // Predicated region
      $region29: #{transunet_encoder_conv_block.5} parent=11 // pred_check
        %p305 = pneg %p185
      $region30: #{transunet_encoder_conv_block.5} parent=11 // pred_check_branch
        %307 = sbr.rel (%p305) target = $region32
      $region31: #{transunet_encoder_conv_block.5} parent=11 // pred_region
        _
      $region32: #{transunet_encoder_conv_block.5} parent=11 // pred_fallthru
        _
      // Predicated region
      $region33: #{transunet_encoder_conv_block.5} parent=11 // pred_check
        %p308 = pneg %p206
      $region34: #{transunet_encoder_conv_block.5} parent=11 // pred_check_branch
        %310 = sbr.rel (%p308) target = $region36
      $region35: #{transunet_encoder_conv_block.5} parent=11 // pred_region
        _
      $region36: #{transunet_encoder_conv_block.5} parent=11 // pred_fallthru
        _
      // Predicated region
      $region37: #{transunet_encoder_conv_block.5} parent=11 // pred_check
        %p311 = pneg %p227
      $region38: #{transunet_encoder_conv_block.5} parent=11 // pred_check_branch
        %313 = sbr.rel (%p311) target = $region40
      $region39: #{transunet_encoder_conv_block.5} parent=11 // pred_region
        _
      $region40: #{transunet_encoder_conv_block.5} parent=11 // pred_fallthru
        _
      // Predicated region
      $region41: #{transunet_encoder_conv_block.5} parent=11 // pred_check
        %p314 = pneg %p248
      $region42: #{transunet_encoder_conv_block.5} parent=11 // pred_check_branch
        %316 = sbr.rel (%p314) target = $region44
      $region43: #{transunet_encoder_conv_block.5} parent=11 // pred_region
        _
      $region44: #{transunet_encoder_conv_block.5} parent=11 // pred_fallthru
        _
    $region12: #{transunet_encoder_conv_block.5} parent=5 // pred_fallthru
      _
    %p317 = scmp.lt.s32.totalorder %s16, 4
    // Predicated region
    $region45: #{transunet_encoder_conv_block.5} parent=5 // pred_check
      %p318 = pneg %p317
    $region46: #{transunet_encoder_conv_block.5} parent=5 // pred_check_branch
      %320 = sbr.rel (%p318) target = $region48
    $region47: #{transunet_encoder_conv_block.5} parent=5 // pred_region
      // Predicated region
      $region49: #{transunet_encoder_conv_block.5} parent=47 // pred_check
        %p321 = pneg %p48
      $region50: #{transunet_encoder_conv_block.5} parent=47 // pred_check_branch
        %323 = sbr.rel (%p321) target = $region52
      $region51: #{transunet_encoder_conv_block.5} parent=47 // pred_region
        %p324 = scmp.lt.s32.totalorder %s23, 1
        %s325 = scalar_select %p324, %s23, 1
        %s326 = smul.addr %s325, 72
        %s327 = smul.addr %s326, 4
        %s328 = scalar_lea.vmem %s0, %s327
      $region52: #{transunet_encoder_conv_block.5} parent=47 // pred_fallthru
        _
      // Predicated region
      $region53: #{transunet_encoder_conv_block.5} parent=47 // pred_check
        %p329 = pneg %p74
      $region54: #{transunet_encoder_conv_block.5} parent=47 // pred_check_branch
        %331 = sbr.rel (%p329) target = $region56
      $region55: #{transunet_encoder_conv_block.5} parent=47 // pred_region
        %p332 = scmp.lt.s32.totalorder %s23, 1
        %s333 = scalar_select %p332, %s23, 1
        %s334 = smul.addr %s333, 8
        %s335 = smul.addr %s334, 8
        %s336 = scalar_lea.vmem %s1, %s335
      $region56: #{transunet_encoder_conv_block.5} parent=47 // pred_fallthru
        _
    $region48: #{transunet_encoder_conv_block.5} parent=5 // pred_fallthru
      _
    %p337 = scmp.le.s32.totalorder 1, %s16
    %p338 = scmp.lt.s32.totalorder %s16, 5
    %p339 = pnand %p337, %p338
    %p340 = pneg %p339
    // Predicated region
    $region57: #{transunet_encoder_conv_block.5} parent=5 // pred_check
      _
    $region58: #{transunet_encoder_conv_block.5} parent=5 // pred_check_branch
      %342 = sbr.rel (%p339) target = $region60
    $region59: #{transunet_encoder_conv_block.5} parent=5 // pred_region
      %s343 = ssub.s32 %s16, 1
      %p344 = scmp.lt.s32.totalorder %s25, 1
      %s345 = scalar_select %p344, %s25, 1
      %s346 = smul.addr %s345, 72
      %s347 = smul.addr %s346, 4
      %s348 = scalar_lea.vmem %s0, %s347
      %p349 = pneg %p54
      %p350 = pneg %p51
      %p351 = scmp.lt.s32.totalorder %s25, 1
      %s352 = scalar_select %p351, %s25, 1
      %s353 = smul.addr %s352, 8
      %s354 = smul.addr %s353, 8
      %s355 = scalar_lea.vmem %s1, %s354
      %p356 = pneg %p80
      %p357 = pneg %p77
      %p358 = pneg %p101
      %p359 = pneg %p98
      %p360 = pneg %p122
      %p361 = pneg %p119
      %p362 = pneg %p143
      %p363 = pneg %p140
      %p364 = pneg %p164
      %p365 = pneg %p161
      %p366 = pneg %p185
      %p367 = pneg %p182
      %p368 = pneg %p206
      %p369 = pneg %p203
      %p370 = pneg %p227
      %p371 = pneg %p224
      %p372 = pneg %p248
      %p373 = pneg %p245
      %p374 = pneg %p278
      %p375 = pneg %p275
      %s376 = smul.u32 %s25, 2
      %s377 = sadd.s32 %s376, %s26
      %s378 = smul.u32 4, %s377
      %p379 = scmp.lt.s32.totalorder %s378, 15
      %s380 = scalar_select %p379, %s378, 15
      %s381 = smul.addr %s380, 8
      %s382 = scalar_lea.vmem %s10, %s381
      %p383 = scmp.lt.s32.totalorder %s25, 1
      %s384 = scalar_select %p383, %s25, 1
      %s385 = smul.addr %s384, 72
      %s386 = smul.addr %s385, 4
      %s387 = scalar_lea.vmem %s0, %s386
      %p388 = scmp.lt.s32.totalorder %s25, 1
      %s389 = scalar_select %p388, %s25, 1
      %s390 = smul.addr %s389, 8
      %s391 = smul.addr %s390, 8
      %s392 = scalar_lea.vmem %s1, %s391
      %s393 = smul.u32 %s25, 2
      %s394 = sadd.s32 %s393, %s26
      %s395 = smul.u32 4, %s394
      %p396 = scmp.lt.s32.totalorder %s395, 15
      %s397 = scalar_select %p396, %s395, 15
      %s398 = smul.addr %s397, 8
      %s399 = scalar_lea.vmem %s10, %s398
      %s400 = smul.u32 %s25, 2
      %s401 = sadd.s32 %s400, %s26
      %s402 = smul.u32 4, %s401
      %s404 = smul.u32 %s26, 4
      %s405 = smul.u32 %s26, 8
      %s406 = smul.u32 %s405, 4
      %s407 = smul.addr %s406, 4
      %s408 = scalar_lea.vmem %s387, %s407
      %v409 = vld [vmem:[%s408] sm:$0xf]
      %v410 = vld [vmem:[%s408 + $0x4] sm:$0x1]
      %v411 = vld [vmem:[%s408 + $0x8] sm:$0xf]
      %v412 = vld [vmem:[%s408 + $0x10] sm:$0xf]
      %v413 = vld [vmem:[%s408 + $0x14] sm:$0x1]
      %v414 = vld [vmem:[%s408 + $0x18] sm:$0xf]
      %v415 = vld [vmem:[%s408 + $0x20] sm:$0xf]
      %v416 = vld [vmem:[%s408 + $0x24] sm:$0x1]
      %v417 = vld [vmem:[%s408 + $0x28] sm:$0xf]
      %v418 = vld [vmem:[%s408 + $0x30] sm:$0xf]
      %v419 = vld [vmem:[%s408 + $0x34] sm:$0x1]
      %v420 = vld [vmem:[%s408 + $0x38] sm:$0xf]
      %v421 = vld [vmem:[%s408 + $0x40] sm:$0xf]
      %v422 = vld [vmem:[%s408 + $0x44] sm:$0x1]
      %v423 = vld [vmem:[%s408 + $0x48] sm:$0xf]
      %v424 = vld [vmem:[%s408 + $0x50] sm:$0xf]
      %v425 = vld [vmem:[%s408 + $0x54] sm:$0x1]
      %v426 = vld [vmem:[%s408 + $0x58] sm:$0xf]
      %v427 = vld [vmem:[%s408 + $0x60] sm:$0xf]
      %v428 = vld [vmem:[%s408 + $0x64] sm:$0x1]
      %v429 = vld [vmem:[%s408 + $0x68] sm:$0xf]
      %v430 = vld [vmem:[%s408 + $0x70] sm:$0xf]
      %v431 = vld [vmem:[%s408 + $0x74] sm:$0x1]
      %v432 = vld [vmem:[%s408 + $0x78] sm:$0xf]
      %v433 = vld [vmem:[%s408 + $0x80] sm:$0xf]
      %v434 = vld [vmem:[%s408 + $0x84] sm:$0x1]
      %v435 = vld [vmem:[%s408 + $0x88] sm:$0xf]
      %vm436 = vsmask.f32 3328
      %vm437 = vsmask.f32 7440
      %vm438 = vmor %vm436, %vm437
      %v440 = vshrl.u32 %v409, 16
      %v442 = vrot.slane %v440, 4
      %v443 = vshll.u32 %v409, 16
      %v445 = vrot.slane %v443, 5
      %v446 = vor.u32 %v442, %v445
      %v447 = vrot.slane %v446, 4
      %v449 = vshll.u32 %v410, 16
      %v451 = vrot.slane %v449, 5
      %v452 = vsel %vm438, %v447, %v451
      %v454 = vshrl.u32 %v415, 16
      %v456 = vrot.slane %v454, 4
      %v457 = vshll.u32 %v415, 16
      %v459 = vrot.slane %v457, 5
      %v460 = vor.u32 %v456, %v459
      %v461 = vrot.slane %v460, 4
      %v463 = vshll.u32 %v416, 16
      %v465 = vrot.slane %v463, 5
      %v466 = vsel %vm438, %v461, %v465
      %v468 = vshrl.u32 %v421, 16
      %v470 = vrot.slane %v468, 4
      %v471 = vshll.u32 %v421, 16
      %v473 = vrot.slane %v471, 5
      %v474 = vor.u32 %v470, %v473
      %v475 = vrot.slane %v474, 4
      %v477 = vshll.u32 %v422, 16
      %v479 = vrot.slane %v477, 5
      %v480 = vsel %vm438, %v475, %v479
      %v482 = vshrl.u32 %v427, 16
      %v484 = vrot.slane %v482, 4
      %v485 = vshll.u32 %v427, 16
      %v487 = vrot.slane %v485, 5
      %v488 = vor.u32 %v484, %v487
      %v489 = vrot.slane %v488, 4
      %v491 = vshll.u32 %v428, 16
      %v493 = vrot.slane %v491, 5
      %v494 = vsel %vm438, %v489, %v493
      %v496 = vshrl.u32 %v412, 16
      %v498 = vrot.slane %v496, 4
      %v499 = vshll.u32 %v412, 16
      %v501 = vrot.slane %v499, 5
      %v502 = vor.u32 %v498, %v501
      %v503 = vrot.slane %v502, 4
      %v505 = vshll.u32 %v413, 16
      %v507 = vrot.slane %v505, 5
      %v508 = vsel %vm438, %v503, %v507
      %v510 = vshrl.u32 %v418, 16
      %v512 = vrot.slane %v510, 4
      %v513 = vshll.u32 %v418, 16
      %v515 = vrot.slane %v513, 5
      %v516 = vor.u32 %v512, %v515
      %v517 = vrot.slane %v516, 4
      %v519 = vshll.u32 %v419, 16
      %v521 = vrot.slane %v519, 5
      %v522 = vsel %vm438, %v517, %v521
      %v524 = vshrl.u32 %v424, 16
      %v526 = vrot.slane %v524, 4
      %v527 = vshll.u32 %v424, 16
      %v529 = vrot.slane %v527, 5
      %v530 = vor.u32 %v526, %v529
      %v531 = vrot.slane %v530, 4
      %v533 = vshll.u32 %v425, 16
      %v535 = vrot.slane %v533, 5
      %v536 = vsel %vm438, %v531, %v535
      %v538 = vshrl.u32 %v430, 16
      %v540 = vrot.slane %v538, 4
      %v541 = vshll.u32 %v430, 16
      %v543 = vrot.slane %v541, 5
      %v544 = vor.u32 %v540, %v543
      %v545 = vrot.slane %v544, 4
      %v547 = vshll.u32 %v431, 16
      %v549 = vrot.slane %v547, 5
      %v550 = vsel %vm438, %v545, %v549
      %v552 = vshrl.u32 %v433, 16
      %v554 = vrot.slane %v552, 4
      %v555 = vshll.u32 %v433, 16
      %v557 = vrot.slane %v555, 5
      %v558 = vor.u32 %v554, %v557
      %v559 = vrot.slane %v558, 4
      %v561 = vshll.u32 %v434, 16
      %v563 = vrot.slane %v561, 5
      %v564 = vsel %vm438, %v559, %v563
      %v569 = vunpack.c.l.b16 %v409
      %v570 = vunpack.c.l.b16 %v415
      %v571 = vunpack.c.l.b16 %v421
      %v572 = vunpack.c.l.b16 %v427
      %v573 = vpack.c.b16 %v570, %v569
      %v574 = vpack.c.b16 %v572, %v571
      %v579 = vunpack.c.l.b16 %v411
      %v580 = vunpack.c.l.b16 %v417
      %v581 = vunpack.c.l.b16 %v423
      %v582 = vunpack.c.l.b16 %v429
      %v583 = vpack.c.b16 %v580, %v579
      %v584 = vpack.c.b16 %v582, %v581
      %585 = vrot.lane.b32.xlu0 %v583, 8
      %v586 = vpop.permute.xlu0 %585
      %587 = vrot.lane.b32.xlu0 %v584, 8
      %v588 = vpop.permute.xlu0 %587
      %v589 = vunpack.c.l.b16 %v452
      %v590 = vunpack.c.l.b16 %v466
      %v591 = vunpack.c.l.b16 %v480
      %v592 = vunpack.c.l.b16 %v494
      %v593 = vpack.c.b16 %v590, %v589
      %v594 = vpack.c.b16 %v592, %v591
      %595 = vrot.lane.b32.xlu0 %v593, 16
      %v596 = vpop.permute.xlu0 %595
      %597 = vrot.lane.b32.xlu0 %v594, 16
      %v598 = vpop.permute.xlu0 %597
      %v603 = vunpack.c.l.b16 %v412
      %v604 = vunpack.c.l.b16 %v418
      %v605 = vunpack.c.l.b16 %v424
      %v606 = vunpack.c.l.b16 %v430
      %v607 = vpack.c.b16 %v604, %v603
      %v608 = vpack.c.b16 %v606, %v605
      %609 = vrot.lane.b32.xlu0 %v607, 24
      %v610 = vpop.permute.xlu0 %609
      %611 = vrot.lane.b32.xlu0 %v608, 24
      %v612 = vpop.permute.xlu0 %611
      %v617 = vunpack.c.l.b16 %v414
      %v618 = vunpack.c.l.b16 %v420
      %v619 = vunpack.c.l.b16 %v426
      %v620 = vunpack.c.l.b16 %v432
      %v621 = vpack.c.b16 %v618, %v617
      %v622 = vpack.c.b16 %v620, %v619
      %623 = vrot.lane.b32.xlu0 %v621, 32
      %v624 = vpop.permute.xlu0 %623
      %625 = vrot.lane.b32.xlu0 %v622, 32
      %v626 = vpop.permute.xlu0 %625
      %v627 = vunpack.c.l.b16 %v508
      %v628 = vunpack.c.l.b16 %v522
      %v629 = vunpack.c.l.b16 %v536
      %v630 = vunpack.c.l.b16 %v550
      %v631 = vpack.c.b16 %v628, %v627
      %v632 = vpack.c.b16 %v630, %v629
      %633 = vrot.lane.b32.xlu0 %v631, 40
      %v634 = vpop.permute.xlu0 %633
      %635 = vrot.lane.b32.xlu0 %v632, 40
      %v636 = vpop.permute.xlu0 %635
      %v638 = vunpack.c.l.b16 %v433
      %v639 = vpack.c.b16 %v571, %v570
      %v640 = vpack.c.b16 %v638, %v572
      %641 = vrot.lane.b32.xlu0 %v639, 48
      %v642 = vpop.permute.xlu0 %641
      %643 = vrot.lane.b32.xlu0 %v640, 48
      %v644 = vpop.permute.xlu0 %643
      %v646 = vunpack.c.l.b16 %v435
      %v647 = vpack.c.b16 %v581, %v580
      %v648 = vpack.c.b16 %v646, %v582
      %649 = vrot.lane.b32.xlu0 %v647, 56
      %v650 = vpop.permute.xlu0 %649
      %651 = vrot.lane.b32.xlu0 %v648, 56
      %v652 = vpop.permute.xlu0 %651
      %v653 = vunpack.c.l.b16 %v564
      %v654 = vpack.c.b16 %v591, %v590
      %v655 = vpack.c.b16 %v653, %v592
      %656 = vrot.lane.b32.xlu0 %v654, 64
      %v657 = vpop.permute.xlu0 %656
      %658 = vrot.lane.b32.xlu0 %v655, 64
      %v659 = vpop.permute.xlu0 %658
      %vm660 = vcmask 64512
      %v663 = vsel %vm660, %v573, %v586
      %v666 = vsel %vm660, %v574, %v588
      %vm667 = vcmask 130048
      %v669 = vsel %vm667, %v663, %v596
      %v671 = vsel %vm667, %v666, %v598
      %vm672 = vcmask 195584
      %v674 = vsel %vm672, %v669, %v610
      %v676 = vsel %vm672, %v671, %v612
      %vm677 = vcmask 261120
      %v679 = vsel %vm677, %v674, %v624
      %v681 = vsel %vm677, %v676, %v626
      %vm682 = vcmask 326656
      %v684 = vsel %vm682, %v679, %v634
      %v686 = vsel %vm682, %v681, %v636
      %vm687 = vcmask 392192
      %v689 = vsel %vm687, %v684, %v642
      %v691 = vsel %vm687, %v686, %v644
      %vm692 = vcmask 457728
      %v694 = vsel %vm692, %v689, %v650
      %v696 = vsel %vm692, %v691, %v652
      %vm697 = vcmask 523264
      %v699 = vsel %vm697, %v694, %v657
      %v701 = vsel %vm697, %v696, %v659
      %v702 = vld [vmem:[%s2] sm:$0xf]
      %v703 = vld [vmem:[%s2 + $0x4] sm:$0xf]
      %v704 = vld [vmem:[%s2 + $0x8] sm:$0xf]
      %v705 = vld [vmem:[%s2 + $0xc] sm:$0xf]
      %v706 = vld [vmem:[%s2 + $0x10] sm:$0xf]
      %v707 = vld [vmem:[%s2 + $0x14] sm:$0xf]
      %v708 = vld [vmem:[%s2 + $0x18] sm:$0xf]
      %v709 = vld [vmem:[%s2 + $0x1c] sm:$0xf]
      %v710 = vld [vmem:[%s2 + $0x20] sm:$0xf]
      %v711 = vld [vmem:[%s3] sm:$0x1]
      %v713 = vperm.slane %v711, 0
      %v724 = vunpack.c.l.b16 %v702
      %v725 = vunpack.c.l.b16 %v703
      %v726 = vunpack.c.l.b16 %v704
      %v727 = vunpack.c.l.b16 %v705
      %v728 = vunpack.c.l.b16 %v706
      %v729 = vunpack.c.l.b16 %v707
      %v730 = vunpack.c.l.b16 %v708
      %v731 = vunpack.c.l.b16 %v709
      %v732 = vunpack.c.l.b16 %v710
      %v733 = vpack.c.b16 %v725, %v724
      %v734 = vpack.c.b16 %v727, %v726
      %v735 = vpack.c.b16 %v729, %v728
      %v736 = vpack.c.b16 %v731, %v730
      %v737 = vpack.c.b16 %v732, %v732
      %vm742 = vcmask 588800
      %v743 = vsel %vm742, %v699, 0
      %v745 = vsel %vm742, %v701, 0
      %vm747 = vcmask 1043456
      %v749 = vsel %vm747, %v737, 0
      %751 = vmatpush.bf16.msra.mxu0 0
      %752 = vmatpush.bf16.msra.mxu0 0
      %753 = vmatpush.bf16.msra.mxu0 0
      %754 = vmatpush.bf16.msra.mxu0 %v749
      %755 = vmatpush.bf16.msra.mxu0 %v736
      %756 = vmatpush.bf16.msra.mxu0 %v735
      %757 = vmatpush.bf16.msra.mxu0 %v734
      %758 = vmatpush.bf16.msra.mxu0 %v733
      %759 = vmatmul.bf16.gmra.mxu0 %v743
      %v760 = vpop.f32.mrf.mxu0
      %v761 = vadd.f32 %v713, %v760
      %v762 = vpop.f32.mrf.mxu0
      %v763 = vadd.f32 %v713, %v762
      %764 = vmatmul.bf16.gmra.mxu0 %v745
      %v765 = vpop.f32.mrf.mxu0
      %v766 = vadd.f32 %v713, %v765
      %v767 = vpop.f32.mrf.mxu0
      %v768 = vadd.f32 %v713, %v767
      %769 = vdwg.mxu0
      %v770 = vld [vmem:[%s4] sm:$0x1]
      %v772 = vperm.slane %v770, 0
      %v774 = vmul.f32 %v761, %v772
      %v775 = vmul.f32 %v763, %v772
      %v776 = vmul.f32 %v766, %v772
      %v777 = vmul.f32 %v768, %v772
      %v778 = vld [vmem:[%s5] sm:$0x1]
      %v780 = vperm.slane %v778, 0
      %v782 = vadd.f32 %v774, %v780
      %v783 = vadd.f32 %v775, %v780
      %v784 = vadd.f32 %v776, %v780
      %v785 = vadd.f32 %v777, %v780
      %v786 = vmax.f32 %v782, 0.0
      %v787 = vmax.f32 %v783, 0.0
      %v788 = vmax.f32 %v784, 0.0
      %v789 = vmax.f32 %v785, 0.0
      %v790 = vpack.c.bf16 %v787, %v786
      %v791 = vpack.c.bf16 %v789, %v788
      %v792 = vld [vmem:[%s6] sm:$0xf]
      %v793 = vld [vmem:[%s7] sm:$0x1]
      %v795 = vperm.slane %v793, 0
      %v798 = vsel %vm660, %v790, 0
      %v801 = vsel %vm660, %v791, 0
      %v804 = vsel %vm747, %v792, 0
      %806 = vmatpush.bf16.msra.mxu0 0
      %807 = vmatpush.bf16.msra.mxu0 0
      %808 = vmatpush.bf16.msra.mxu0 0
      %809 = vmatpush.bf16.msra.mxu0 0
      %810 = vmatpush.bf16.msra.mxu0 0
      %811 = vmatpush.bf16.msra.mxu0 0
      %812 = vmatpush.bf16.msra.mxu0 0
      %813 = vmatpush.bf16.msra.mxu0 %v804
      %814 = vmatmul.bf16.gmra.mxu0 %v798
      %v815 = vpop.f32.mrf.mxu0
      %v816 = vadd.f32 %v795, %v815
      %v817 = vpop.f32.mrf.mxu0
      %v818 = vadd.f32 %v795, %v817
      %819 = vmatmul.bf16.gmra.mxu0 %v801
      %v820 = vpop.f32.mrf.mxu0
      %v821 = vadd.f32 %v795, %v820
      %v822 = vpop.f32.mrf.mxu0
      %v823 = vadd.f32 %v795, %v822
      %824 = vdwg.mxu0
      %s825 = smul.u32 %s404, 8
      %s826 = scalar_lea.vmem %s392, %s825
      %v827 = vld [vmem:[%s826] sm:$0xff]
      %v828 = vld [vmem:[%s826 + $0x8] sm:$0xff]
      %v829 = vld [vmem:[%s826 + $0x10] sm:$0xff]
      %v830 = vld [vmem:[%s826 + $0x18] sm:$0xff]
      %v831 = vpack.c.bf16 %v828, %v827
      %v832 = vpack.c.bf16 %v830, %v829
      %v833 = vld [vmem:[%s8] sm:$0x3]
      %v834 = vld [vmem:[%s9] sm:$0x1]
      %v836 = vperm.slane %v834, 0
      %vm838 = vcmask 31744
      %v840 = vsel %vm838, %v831, 0
      %v843 = vsel %vm838, %v832, 0
      %vm845 = vcmask 1041408
      %v847 = vsel %vm845, %v833, 0
      %849 = vmatpush.bf16.msra.mxu0 0
      %850 = vmatpush.bf16.msra.mxu0 0
      %851 = vmatpush.bf16.msra.mxu0 0
      %852 = vmatpush.bf16.msra.mxu0 0
      %853 = vmatpush.bf16.msra.mxu0 0
      %854 = vmatpush.bf16.msra.mxu0 0
      %855 = vmatpush.bf16.msra.mxu0 0
      %856 = vmatpush.bf16.msra.mxu0 %v847
      %857 = vmatmul.bf16.gmra.mxu0 %v840
      %v858 = vpop.f32.mrf.mxu0
      %v859 = vadd.f32 %v836, %v858
      %v860 = vpop.f32.mrf.mxu0
      %v861 = vadd.f32 %v836, %v860
      %862 = vmatmul.bf16.gmra.mxu0 %v843
      %v863 = vpop.f32.mrf.mxu0
      %v864 = vadd.f32 %v836, %v863
      %v865 = vpop.f32.mrf.mxu0
      %v866 = vadd.f32 %v836, %v865
      %867 = vdwg.mxu0
      %v868 = vadd.f32 %v816, %v859
      %v869 = vadd.f32 %v818, %v861
      %v870 = vadd.f32 %v821, %v864
      %v871 = vadd.f32 %v823, %v866
      %872 = vst.msk [vmem:[%s399] sm:$0xff] %vm660, %v868
      %873 = vst.msk [vmem:[%s399 + $0x8] sm:$0xff] %vm660, %v869
      %874 = vst.msk [vmem:[%s399 + $0x10] sm:$0xff] %vm660, %v870
      %875 = vst.msk [vmem:[%s399 + $0x18] sm:$0xff] %vm660, %v871
      %s876 = smul.u32 %s25, 2
      %s877 = sadd.s32 %s876, %s26
      %s878 = smul.u32 4, %s877
      %p879 = scmp.lt.s32.totalorder %s878, 15
      %s880 = scalar_select %p879, %s878, 15
      %s881 = smul.addr %s880, 8
      %s882 = scalar_lea.vmem %s10, %s881
      // Predicated region
      $region61: #{transunet_encoder_conv_block.5} parent=59 // pred_check
        %p883 = pneg %p275
      $region62: #{transunet_encoder_conv_block.5} parent=59 // pred_check_branch
        %885 = sbr.rel (%p883) target = $region64
      $region63: #{transunet_encoder_conv_block.5} parent=59 // pred_region
        %s886 = smul.u32 %s25, 2
        %s887 = sadd.s32 %s886, %s26
        %s888 = smul.u32 4, %s887
      $region64: #{transunet_encoder_conv_block.5} parent=59 // pred_fallthru
        _
    $region60: #{transunet_encoder_conv_block.5} parent=5 // pred_fallthru
      _
    %p889 = scmp.le.s32.totalorder 2, %s16
    // Predicated region
    $region65: #{transunet_encoder_conv_block.5} parent=5 // pred_check
      %p890 = pneg %p889
    $region66: #{transunet_encoder_conv_block.5} parent=5 // pred_check_branch
      %892 = sbr.rel (%p890) target = $region68
    $region67: #{transunet_encoder_conv_block.5} parent=5 // pred_region
      %s893 = ssub.s32 %s16, 2
      // Predicated region
      $region69: #{transunet_encoder_conv_block.5} parent=67 // pred_check
        %p894 = pneg %p281
      $region70: #{transunet_encoder_conv_block.5} parent=67 // pred_check_branch
        %896 = sbr.rel (%p894) target = $region72
      $region71: #{transunet_encoder_conv_block.5} parent=67 // pred_region
        %s897 = smul.u32 %s27, 2
        %s898 = sadd.s32 %s897, %s28
        %s899 = smul.u32 4, %s898
        %p900 = scmp.lt.s32.totalorder %s899, 15
        %s901 = scalar_select %p900, %s899, 15
        %s902 = smul.addr %s901, 8
        %s903 = scalar_lea.vmem %s10, %s902
      $region72: #{transunet_encoder_conv_block.5} parent=67 // pred_fallthru
        _
    $region68: #{transunet_encoder_conv_block.5} parent=5 // pred_fallthru
      _
  $region6: #{transunet_encoder_conv_block.5} parent=0 // loop_footer
    %s20 = sadd.s32 1, %s16
  $region7: #{transunet_encoder_conv_block.5} parent=0 // loop_footer_branch
    %15 = sbr.rel target = $region3
  $region8: #{transunet_encoder_conv_block.5} parent=0 // loop_exit
    _

// kernel: transunet_encoder_conv_block.4
$region0: #{transunet_encoder_conv_block.4}
  #allocation0 [shape = 'u32[]', space=smem, size = 0x4, offset = 0x4, fixed_abs, tag = 'smem constant byte address 0x4 - core index']
  #allocation1 [shape = 'u32[72,128]{1,0:T(1,128)}', space=vmem, size = 0x9000, scoped, tag = 'internal scratch']
  %s0 = inlined_call_operand.vmem [shape: f32[512,4], index: 0, kind: input, shape index: {}]
  %s1 = inlined_call_operand.vmem [shape: f32[1,4], index: 1, kind: input, shape index: {}]
  %s2 = inlined_call_operand.vmem [shape: f32[1,4], index: 2, kind: input, shape index: {}]
  %s3 = inlined_call_operand.vmem [shape: bf16[4,8], index: 3, kind: input, shape index: {}]
  %s4 = inlined_call_operand.vmem [shape: f32[1,8], index: 4, kind: input, shape index: {}]
  %s5 = inlined_call_operand.vmem [shape: f32[1,8], index: 5, kind: input, shape index: {}]
  %s6 = inlined_call_operand.vmem [shape: f32[1,8], index: 6, kind: input, shape index: {}]
  %s7 = inlined_call_operand.vmem [shape: bf16[512,8], index: 7, kind: output, shape index: {}]
  %s8 = sld [smem:[#allocation0]]
  $region61: #{transunet_encoder_conv_block.4} parent=0
    _
  %s10 = ssub.s32 1, %s8
  %s11 = scalar_select 0, %s10, %s8
  loop: start=0, step=1, limit=4
  $region2: #{transunet_encoder_conv_block.4} parent=0 // loop_pre_header
    _
  $region3: #{transunet_encoder_conv_block.4} parent=0 // loop_header
    %s13 = sphi 0, %s17
    %p14 = scmp.ge.s32.totalorder %s13, 4
    %s23 = sphi 0, %s25
    %s26 = sphi 0, %s23
    %s27 = sphi 0, %s26
    %s43 = sphi 0, %s27
    %s47 = sphi 0, %s47
    %s49 = sphi 0, %s47
    %s50 = sphi 0, %s49
    %s64 = sphi 0, %s50
    %s68 = sphi 0, %s68
    %s70 = sphi 0, %s68
    %s71 = sphi 0, %s70
    %s85 = sphi 0, %s71
    %s89 = sphi 0, %s89
    %s91 = sphi 0, %s89
    %s92 = sphi 0, %s91
    %s106 = sphi 0, %s92
    %s110 = sphi 0, %s110
    %s112 = sphi 0, %s110
    %s113 = sphi 0, %s112
    %s127 = sphi 0, %s113
    %s131 = sphi 0, %s131
    %s133 = sphi 0, %s131
    %s134 = sphi 0, %s133
    %s148 = sphi 0, %s134
    %s152 = sphi 0, %s152
    %s154 = sphi 0, %s152
    %s155 = sphi 0, %s154
    %s169 = sphi 0, %s155
    %s175 = sphi 0, %s177
    %s178 = sphi 0, %s175
    %s179 = sphi 0, %s178
    %s195 = sphi 0, %s179
  $region4: #{transunet_encoder_conv_block.4} parent=0 // loop_header_branch
    %16 = sbr.rel (%p14) target = $region8
  $region5: #{transunet_encoder_conv_block.4} parent=0 // loop_body
    %s18 = ssub.s32 %s13, 1
    %s19 = ssub.s32 %s13, 2
    %s20 = sadd.s32 %s13, 1
    %s21 = ssub.s32 %s13, %s20
    %p22 = scmp.eq.s32.totalorder %s21, 0
    %s24 = sadd.s32 %s23, 1
    %s25 = scalar_select %p22, %s23, %s24
    %p28 = pneg %p22
    %p29 = scmp.eq.s32.totalorder %s13, 1
    %p30 = por %p28, %p29
    %p31 = scmp.ne.s32.totalorder %s23, %s26
    %p32 = scmp.eq.s32.totalorder %s13, 0
    %p33 = por %p31, %p32
    %p34 = scmp.ne.s32.totalorder %s23, %s26
    %p35 = scmp.eq.s32.totalorder %s18, 1
    %p36 = por %p34, %p35
    %p37 = scmp.ne.s32.totalorder %s26, %s27
    %p38 = scmp.eq.s32.totalorder %s18, 0
    %p39 = por %p37, %p38
    %p40 = scmp.ne.s32.totalorder %s26, %s27
    %p41 = scmp.eq.s32.totalorder %s19, 1
    %p42 = por %p40, %p41
    %p44 = scmp.ne.s32.totalorder %s27, %s43
    %p45 = scmp.eq.s32.totalorder %s19, 0
    %p46 = por %p44, %p45
    %s48 = sadd.s32 %s47, 1
    %p51 = scmp.eq.s32.totalorder %s13, 1
    %p52 = scmp.ne.s32.totalorder %s47, %s49
    %p53 = scmp.eq.s32.totalorder %s13, 0
    %p54 = por %p52, %p53
    %p55 = scmp.ne.s32.totalorder %s47, %s49
    %p56 = scmp.eq.s32.totalorder %s18, 1
    %p57 = por %p55, %p56
    %p58 = scmp.ne.s32.totalorder %s49, %s50
    %p59 = scmp.eq.s32.totalorder %s18, 0
    %p60 = por %p58, %p59
    %p61 = scmp.ne.s32.totalorder %s49, %s50
    %p62 = scmp.eq.s32.totalorder %s19, 1
    %p63 = por %p61, %p62
    %p65 = scmp.ne.s32.totalorder %s50, %s64
    %p66 = scmp.eq.s32.totalorder %s19, 0
    %p67 = por %p65, %p66
    %s69 = sadd.s32 %s68, 1
    %p72 = scmp.eq.s32.totalorder %s13, 1
    %p73 = scmp.ne.s32.totalorder %s68, %s70
    %p74 = scmp.eq.s32.totalorder %s13, 0
    %p75 = por %p73, %p74
    %p76 = scmp.ne.s32.totalorder %s68, %s70
    %p77 = scmp.eq.s32.totalorder %s18, 1
    %p78 = por %p76, %p77
    %p79 = scmp.ne.s32.totalorder %s70, %s71
    %p80 = scmp.eq.s32.totalorder %s18, 0
    %p81 = por %p79, %p80
    %p82 = scmp.ne.s32.totalorder %s70, %s71
    %p83 = scmp.eq.s32.totalorder %s19, 1
    %p84 = por %p82, %p83
    %p86 = scmp.ne.s32.totalorder %s71, %s85
    %p87 = scmp.eq.s32.totalorder %s19, 0
    %p88 = por %p86, %p87
    %s90 = sadd.s32 %s89, 1
    %p93 = scmp.eq.s32.totalorder %s13, 1
    %p94 = scmp.ne.s32.totalorder %s89, %s91
    %p95 = scmp.eq.s32.totalorder %s13, 0
    %p96 = por %p94, %p95
    %p97 = scmp.ne.s32.totalorder %s89, %s91
    %p98 = scmp.eq.s32.totalorder %s18, 1
    %p99 = por %p97, %p98
    %p100 = scmp.ne.s32.totalorder %s91, %s92
    %p101 = scmp.eq.s32.totalorder %s18, 0
    %p102 = por %p100, %p101
    %p103 = scmp.ne.s32.totalorder %s91, %s92
    %p104 = scmp.eq.s32.totalorder %s19, 1
    %p105 = por %p103, %p104
    %p107 = scmp.ne.s32.totalorder %s92, %s106
    %p108 = scmp.eq.s32.totalorder %s19, 0
    %p109 = por %p107, %p108
    %s111 = sadd.s32 %s110, 1
    %p114 = scmp.eq.s32.totalorder %s13, 1
    %p115 = scmp.ne.s32.totalorder %s110, %s112
    %p116 = scmp.eq.s32.totalorder %s13, 0
    %p117 = por %p115, %p116
    %p118 = scmp.ne.s32.totalorder %s110, %s112
    %p119 = scmp.eq.s32.totalorder %s18, 1
    %p120 = por %p118, %p119
    %p121 = scmp.ne.s32.totalorder %s112, %s113
    %p122 = scmp.eq.s32.totalorder %s18, 0
    %p123 = por %p121, %p122
    %p124 = scmp.ne.s32.totalorder %s112, %s113
    %p125 = scmp.eq.s32.totalorder %s19, 1
    %p126 = por %p124, %p125
    %p128 = scmp.ne.s32.totalorder %s113, %s127
    %p129 = scmp.eq.s32.totalorder %s19, 0
    %p130 = por %p128, %p129
    %s132 = sadd.s32 %s131, 1
    %p135 = scmp.eq.s32.totalorder %s13, 1
    %p136 = scmp.ne.s32.totalorder %s131, %s133
    %p137 = scmp.eq.s32.totalorder %s13, 0
    %p138 = por %p136, %p137
    %p139 = scmp.ne.s32.totalorder %s131, %s133
    %p140 = scmp.eq.s32.totalorder %s18, 1
    %p141 = por %p139, %p140
    %p142 = scmp.ne.s32.totalorder %s133, %s134
    %p143 = scmp.eq.s32.totalorder %s18, 0
    %p144 = por %p142, %p143
    %p145 = scmp.ne.s32.totalorder %s133, %s134
    %p146 = scmp.eq.s32.totalorder %s19, 1
    %p147 = por %p145, %p146
    %p149 = scmp.ne.s32.totalorder %s134, %s148
    %p150 = scmp.eq.s32.totalorder %s19, 0
    %p151 = por %p149, %p150
    %s153 = sadd.s32 %s152, 1
    %p156 = scmp.eq.s32.totalorder %s13, 1
    %p157 = scmp.ne.s32.totalorder %s152, %s154
    %p158 = scmp.eq.s32.totalorder %s13, 0
    %p159 = por %p157, %p158
    %p160 = scmp.ne.s32.totalorder %s152, %s154
    %p161 = scmp.eq.s32.totalorder %s18, 1
    %p162 = por %p160, %p161
    %p163 = scmp.ne.s32.totalorder %s154, %s155
    %p164 = scmp.eq.s32.totalorder %s18, 0
    %p165 = por %p163, %p164
    %p166 = scmp.ne.s32.totalorder %s154, %s155
    %p167 = scmp.eq.s32.totalorder %s19, 1
    %p168 = por %p166, %p167
    %p170 = scmp.ne.s32.totalorder %s155, %s169
    %p171 = scmp.eq.s32.totalorder %s19, 0
    %p172 = por %p170, %p171
    %s173 = ssub.s32 %s13, %s20
    %p174 = scmp.eq.s32.totalorder %s173, 0
    %s176 = sadd.s32 %s175, 1
    %s177 = scalar_select %p174, %s175, %s176
    %p180 = pneg %p174
    %p181 = scmp.eq.s32.totalorder %s13, 1
    %p182 = por %p180, %p181
    %p183 = scmp.ne.s32.totalorder %s175, %s178
    %p184 = scmp.eq.s32.totalorder %s13, 0
    %p185 = por %p183, %p184
    %p186 = scmp.ne.s32.totalorder %s175, %s178
    %p187 = scmp.eq.s32.totalorder %s18, 1
    %p188 = por %p186, %p187
    %p189 = scmp.ne.s32.totalorder %s178, %s179
    %p190 = scmp.eq.s32.totalorder %s18, 0
    %p191 = por %p189, %p190
    %p192 = scmp.ne.s32.totalorder %s178, %s179
    %p193 = scmp.eq.s32.totalorder %s19, 1
    %p194 = por %p192, %p193
    %p196 = scmp.ne.s32.totalorder %s179, %s195
    %p197 = scmp.eq.s32.totalorder %s19, 0
    %p198 = por %p196, %p197
    %p199 = scmp.le.s32.totalorder 1, %s13
    %p200 = scmp.lt.s32.totalorder %s13, 3
    %p201 = pnand %p199, %p200
    %p202 = pneg %p201
    // Predicated region
    $region9: #{transunet_encoder_conv_block.4} parent=5 // pred_check
      _
    $region10: #{transunet_encoder_conv_block.4} parent=5 // pred_check_branch
      %204 = sbr.rel (%p201) target = $region12
    $region11: #{transunet_encoder_conv_block.4} parent=5 // pred_region
      %s205 = ssub.s32 %s13, 1
      // Predicated region
      $region13: #{transunet_encoder_conv_block.4} parent=11 // pred_check
        %p206 = pneg %p60
      $region14: #{transunet_encoder_conv_block.4} parent=11 // pred_check_branch
        %208 = sbr.rel (%p206) target = $region16
      $region15: #{transunet_encoder_conv_block.4} parent=11 // pred_region
        _
      $region16: #{transunet_encoder_conv_block.4} parent=11 // pred_fallthru
        _
      // Predicated region
      $region17: #{transunet_encoder_conv_block.4} parent=11 // pred_check
        %p209 = pneg %p81
      $region18: #{transunet_encoder_conv_block.4} parent=11 // pred_check_branch
        %211 = sbr.rel (%p209) target = $region20
      $region19: #{transunet_encoder_conv_block.4} parent=11 // pred_region
        _
      $region20: #{transunet_encoder_conv_block.4} parent=11 // pred_fallthru
        _
      // Predicated region
      $region21: #{transunet_encoder_conv_block.4} parent=11 // pred_check
        %p212 = pneg %p102
      $region22: #{transunet_encoder_conv_block.4} parent=11 // pred_check_branch
        %214 = sbr.rel (%p212) target = $region24
      $region23: #{transunet_encoder_conv_block.4} parent=11 // pred_region
        _
      $region24: #{transunet_encoder_conv_block.4} parent=11 // pred_fallthru
        _
      // Predicated region
      $region25: #{transunet_encoder_conv_block.4} parent=11 // pred_check
        %p215 = pneg %p123
      $region26: #{transunet_encoder_conv_block.4} parent=11 // pred_check_branch
        %217 = sbr.rel (%p215) target = $region28
      $region27: #{transunet_encoder_conv_block.4} parent=11 // pred_region
        _
      $region28: #{transunet_encoder_conv_block.4} parent=11 // pred_fallthru
        _
      // Predicated region
      $region29: #{transunet_encoder_conv_block.4} parent=11 // pred_check
        %p218 = pneg %p144
      $region30: #{transunet_encoder_conv_block.4} parent=11 // pred_check_branch
        %220 = sbr.rel (%p218) target = $region32
      $region31: #{transunet_encoder_conv_block.4} parent=11 // pred_region
        _
      $region32: #{transunet_encoder_conv_block.4} parent=11 // pred_fallthru
        _
      // Predicated region
      $region33: #{transunet_encoder_conv_block.4} parent=11 // pred_check
        %p221 = pneg %p165
      $region34: #{transunet_encoder_conv_block.4} parent=11 // pred_check_branch
        %223 = sbr.rel (%p221) target = $region36
      $region35: #{transunet_encoder_conv_block.4} parent=11 // pred_region
        _
      $region36: #{transunet_encoder_conv_block.4} parent=11 // pred_fallthru
        _
    $region12: #{transunet_encoder_conv_block.4} parent=5 // pred_fallthru
      _
    %p224 = scmp.lt.s32.totalorder %s13, 2
    // Predicated region
    $region37: #{transunet_encoder_conv_block.4} parent=5 // pred_check
      %p225 = pneg %p224
    $region38: #{transunet_encoder_conv_block.4} parent=5 // pred_check_branch
      %227 = sbr.rel (%p225) target = $region40
    $region39: #{transunet_encoder_conv_block.4} parent=5 // pred_region
      // Predicated region
      $region41: #{transunet_encoder_conv_block.4} parent=39 // pred_check
        %p228 = pneg %p33
      $region42: #{transunet_encoder_conv_block.4} parent=39 // pred_check_branch
        %230 = sbr.rel (%p228) target = $region44
      $region43: #{transunet_encoder_conv_block.4} parent=39 // pred_region
        %s231 = smul.u32 32, %s13
        %p232 = scmp.lt.s32.totalorder %s231, 63
        %s233 = scalar_select %p232, %s231, 63
        %s234 = smul.addr %s233, 8
        %s235 = scalar_lea.vmem %s0, %s234
        %s236 = smul.u32 32, %s13
      $region44: #{transunet_encoder_conv_block.4} parent=39 // pred_fallthru
        _
    $region40: #{transunet_encoder_conv_block.4} parent=5 // pred_fallthru
      _
    %p237 = scmp.le.s32.totalorder 1, %s13
    %p238 = scmp.lt.s32.totalorder %s13, 3
    %p239 = pnand %p237, %p238
    %p240 = pneg %p239
    // Predicated region
    $region45: #{transunet_encoder_conv_block.4} parent=5 // pred_check
      _
    $region46: #{transunet_encoder_conv_block.4} parent=5 // pred_check_branch
      %242 = sbr.rel (%p239) target = $region48
    $region47: #{transunet_encoder_conv_block.4} parent=5 // pred_region
      %s243 = ssub.s32 %s13, 1
      %s244 = smul.u32 32, %s18
      %p245 = scmp.lt.s32.totalorder %s244, 63
      %s246 = scalar_select %p245, %s244, 63
      %s247 = smul.addr %s246, 8
      %s248 = scalar_lea.vmem %s0, %s247
      %p249 = pneg %p39
      %p250 = pneg %p36
      %p251 = pneg %p60
      %p252 = pneg %p57
      %p253 = pneg %p81
      %p254 = pneg %p78
      %p255 = pneg %p102
      %p256 = pneg %p99
      %p257 = pneg %p123
      %p258 = pneg %p120
      %p259 = pneg %p144
      %p260 = pneg %p141
      %p261 = pneg %p165
      %p262 = pneg %p162
      %p263 = pneg %p191
      %p264 = pneg %p188
      %s265 = smul.u32 32, %s18
      %p266 = scmp.lt.s32.totalorder %s265, 63
      %s267 = scalar_select %p266, %s265, 63
      %s268 = smul.addr %s267, 4
      %s269 = scalar_lea.vmem %s7, %s268
      %s270 = smul.u32 32, %s18
      %p271 = scmp.lt.s32.totalorder %s270, 63
      %s272 = scalar_select %p271, %s270, 63
      %s273 = smul.addr %s272, 8
      %s274 = scalar_lea.vmem %s0, %s273
      %s275 = smul.u32 32, %s18
      %s276 = smul.u32 32, %s18
      %p277 = scmp.lt.s32.totalorder %s276, 63
      %s278 = scalar_select %p277, %s276, 63
      %s279 = smul.addr %s278, 4
      %s280 = scalar_lea.vmem %s7, %s279
      %s281 = smul.u32 32, %s18
      %v283 = vld [vmem:[%s274] sm:$0xff]
      %v284 = vld [vmem:[%s274 + $0x8] sm:$0xff]
      %v285 = vld [vmem:[%s274 + $0x10] sm:$0xff]
      %v286 = vld [vmem:[%s274 + $0x18] sm:$0xff]
      %v287 = vld [vmem:[%s274 + $0x20] sm:$0xff]
      %v288 = vld [vmem:[%s274 + $0x28] sm:$0xff]
      %v289 = vld [vmem:[%s274 + $0x30] sm:$0xff]
      %v290 = vld [vmem:[%s274 + $0x38] sm:$0xff]
      %v291 = vld [vmem:[%s274 + $0x40] sm:$0xff]
      %v292 = vld [vmem:[%s274 + $0x48] sm:$0xff]
      %v293 = vld [vmem:[%s274 + $0x50] sm:$0xff]
      %v294 = vld [vmem:[%s274 + $0x58] sm:$0xff]
      %v295 = vld [vmem:[%s274 + $0x60] sm:$0xff]
      %v296 = vld [vmem:[%s274 + $0x68] sm:$0xff]
      %v297 = vld [vmem:[%s274 + $0x70] sm:$0xff]
      %v298 = vld [vmem:[%s274 + $0x78] sm:$0xff]
      %v299 = vld [vmem:[%s274 + $0x80] sm:$0xff]
      %v300 = vld [vmem:[%s274 + $0x88] sm:$0xff]
      %v301 = vld [vmem:[%s274 + $0x90] sm:$0xff]
      %v302 = vld [vmem:[%s274 + $0x98] sm:$0xff]
      %v303 = vld [vmem:[%s274 + $0xa0] sm:$0xff]
      %v304 = vld [vmem:[%s274 + $0xa8] sm:$0xff]
      %v305 = vld [vmem:[%s274 + $0xb0] sm:$0xff]
      %v306 = vld [vmem:[%s274 + $0xb8] sm:$0xff]
      %v307 = vld [vmem:[%s274 + $0xc0] sm:$0xff]
      %v308 = vld [vmem:[%s274 + $0xc8] sm:$0xff]
      %v309 = vld [vmem:[%s274 + $0xd0] sm:$0xff]
      %v310 = vld [vmem:[%s274 + $0xd8] sm:$0xff]
      %v311 = vld [vmem:[%s274 + $0xe0] sm:$0xff]
      %v312 = vld [vmem:[%s274 + $0xe8] sm:$0xff]
      %v313 = vld [vmem:[%s274 + $0xf0] sm:$0xff]
      %v314 = vld [vmem:[%s274 + $0xf8] sm:$0xff]
      %v315 = vld [vmem:[%s1] sm:$0x1]
      %v317 = vperm.slane %v315, 0
      %v319 = vmul.f32 %v283, %v317
      %v320 = vmul.f32 %v284, %v317
      %v321 = vmul.f32 %v285, %v317
      %v322 = vmul.f32 %v286, %v317
      %v323 = vmul.f32 %v287, %v317
      %v324 = vmul.f32 %v288, %v317
      %v325 = vmul.f32 %v289, %v317
      %v326 = vmul.f32 %v290, %v317
      %v327 = vmul.f32 %v291, %v317
      %v328 = vmul.f32 %v292, %v317
      %v329 = vmul.f32 %v293, %v317
      %v330 = vmul.f32 %v294, %v317
      %v331 = vmul.f32 %v295, %v317
      %v332 = vmul.f32 %v296, %v317
      %v333 = vmul.f32 %v297, %v317
      %v334 = vmul.f32 %v298, %v317
      %v335 = vmul.f32 %v299, %v317
      %v336 = vmul.f32 %v300, %v317
      %v337 = vmul.f32 %v301, %v317
      %v338 = vmul.f32 %v302, %v317
      %v339 = vmul.f32 %v303, %v317
      %v340 = vmul.f32 %v304, %v317
      %v341 = vmul.f32 %v305, %v317
      %v342 = vmul.f32 %v306, %v317
      %v343 = vmul.f32 %v307, %v317
      %v344 = vmul.f32 %v308, %v317
      %v345 = vmul.f32 %v309, %v317
      %v346 = vmul.f32 %v310, %v317
      %v347 = vmul.f32 %v311, %v317
      %v348 = vmul.f32 %v312, %v317
      %v349 = vmul.f32 %v313, %v317
      %v350 = vmul.f32 %v314, %v317
      %v351 = vld [vmem:[%s2] sm:$0x1]
      %v353 = vperm.slane %v351, 0
      %v355 = vadd.f32 %v319, %v353
      %v356 = vadd.f32 %v320, %v353
      %v357 = vadd.f32 %v321, %v353
      %v358 = vadd.f32 %v322, %v353
      %v359 = vadd.f32 %v323, %v353
      %v360 = vadd.f32 %v324, %v353
      %v361 = vadd.f32 %v325, %v353
      %v362 = vadd.f32 %v326, %v353
      %v363 = vadd.f32 %v327, %v353
      %v364 = vadd.f32 %v328, %v353
      %v365 = vadd.f32 %v329, %v353
      %v366 = vadd.f32 %v330, %v353
      %v367 = vadd.f32 %v331, %v353
      %v368 = vadd.f32 %v332, %v353
      %v369 = vadd.f32 %v333, %v353
      %v370 = vadd.f32 %v334, %v353
      %v371 = vadd.f32 %v335, %v353
      %v372 = vadd.f32 %v336, %v353
      %v373 = vadd.f32 %v337, %v353
      %v374 = vadd.f32 %v338, %v353
      %v375 = vadd.f32 %v339, %v353
      %v376 = vadd.f32 %v340, %v353
      %v377 = vadd.f32 %v341, %v353
      %v378 = vadd.f32 %v342, %v353
      %v379 = vadd.f32 %v343, %v353
      %v380 = vadd.f32 %v344, %v353
      %v381 = vadd.f32 %v345, %v353
      %v382 = vadd.f32 %v346, %v353
      %v383 = vadd.f32 %v347, %v353
      %v384 = vadd.f32 %v348, %v353
      %v385 = vadd.f32 %v349, %v353
      %v386 = vadd.f32 %v350, %v353
      %v387 = vmax.f32 %v355, 0.0
      %v388 = vmax.f32 %v356, 0.0
      %v389 = vmax.f32 %v357, 0.0
      %v390 = vmax.f32 %v358, 0.0
      %v391 = vmax.f32 %v359, 0.0
      %v392 = vmax.f32 %v360, 0.0
      %v393 = vmax.f32 %v361, 0.0
      %v394 = vmax.f32 %v362, 0.0
      %v395 = vmax.f32 %v363, 0.0
      %v396 = vmax.f32 %v364, 0.0
      %v397 = vmax.f32 %v365, 0.0
      %v398 = vmax.f32 %v366, 0.0
      %v399 = vmax.f32 %v367, 0.0
      %v400 = vmax.f32 %v368, 0.0
      %v401 = vmax.f32 %v369, 0.0
      %v402 = vmax.f32 %v370, 0.0
      %v403 = vmax.f32 %v371, 0.0
      %v404 = vmax.f32 %v372, 0.0
      %v405 = vmax.f32 %v373, 0.0
      %v406 = vmax.f32 %v374, 0.0
      %v407 = vmax.f32 %v375, 0.0
      %v408 = vmax.f32 %v376, 0.0
      %v409 = vmax.f32 %v377, 0.0
      %v410 = vmax.f32 %v378, 0.0
      %v411 = vmax.f32 %v379, 0.0
      %v412 = vmax.f32 %v380, 0.0
      %v413 = vmax.f32 %v381, 0.0
      %v414 = vmax.f32 %v382, 0.0
      %v415 = vmax.f32 %v383, 0.0
      %v416 = vmax.f32 %v384, 0.0
      %v417 = vmax.f32 %v385, 0.0
      %v418 = vmax.f32 %v386, 0.0
      %v419 = vpack.c.bf16 %v388, %v387
      %v420 = vpack.c.bf16 %v390, %v389
      %v421 = vpack.c.bf16 %v392, %v391
      %v422 = vpack.c.bf16 %v394, %v393
      %v423 = vpack.c.bf16 %v396, %v395
      %v424 = vpack.c.bf16 %v398, %v397
      %v425 = vpack.c.bf16 %v400, %v399
      %v426 = vpack.c.bf16 %v402, %v401
      %v427 = vpack.c.bf16 %v404, %v403
      %v428 = vpack.c.bf16 %v406, %v405
      %v429 = vpack.c.bf16 %v408, %v407
      %v430 = vpack.c.bf16 %v410, %v409
      %v431 = vpack.c.bf16 %v412, %v411
      %v432 = vpack.c.bf16 %v414, %v413
      %v433 = vpack.c.bf16 %v416, %v415
      %v434 = vpack.c.bf16 %v418, %v417
      %v435 = vld [vmem:[%s3] sm:$0x3]
      %v436 = vld [vmem:[%s4] sm:$0x1]
      %v438 = vperm.slane %v436, 0
      %vm440 = vcmask 31744
      %v442 = vsel %vm440, %v419, 0
      %v445 = vsel %vm440, %v420, 0
      %v448 = vsel %vm440, %v421, 0
      %v451 = vsel %vm440, %v422, 0
      %v454 = vsel %vm440, %v423, 0
      %v457 = vsel %vm440, %v424, 0
      %v460 = vsel %vm440, %v425, 0
      %v463 = vsel %vm440, %v426, 0
      %v466 = vsel %vm440, %v427, 0
      %v469 = vsel %vm440, %v428, 0
      %v472 = vsel %vm440, %v429, 0
      %v475 = vsel %vm440, %v430, 0
      %v478 = vsel %vm440, %v431, 0
      %v481 = vsel %vm440, %v432, 0
      %v484 = vsel %vm440, %v433, 0
      %v487 = vsel %vm440, %v434, 0
      %vm489 = vcmask 1041408
      %v491 = vsel %vm489, %v435, 0
      %493 = vmatpush.bf16.msra.mxu0 0
      %494 = vmatpush.bf16.msra.mxu0 0
      %495 = vmatpush.bf16.msra.mxu0 0
      %496 = vmatpush.bf16.msra.mxu0 0
      %497 = vmatpush.bf16.msra.mxu0 0
      %498 = vmatpush.bf16.msra.mxu0 0
      %499 = vmatpush.bf16.msra.mxu0 0
      %500 = vmatpush.bf16.msra.mxu0 %v491
      %501 = vmatmul.bf16.gmra.mxu0 %v442
      %v502 = vpop.f32.mrf.mxu0
      %v503 = vadd.f32 %v438, %v502
      %v504 = vpop.f32.mrf.mxu0
      %v505 = vadd.f32 %v438, %v504
      %506 = vmatmul.bf16.gmra.mxu0 %v445
      %v507 = vpop.f32.mrf.mxu0
      %v508 = vadd.f32 %v438, %v507
      %v509 = vpop.f32.mrf.mxu0
      %v510 = vadd.f32 %v438, %v509
      %511 = vmatmul.bf16.gmra.mxu0 %v448
      %v512 = vpop.f32.mrf.mxu0
      %v513 = vadd.f32 %v438, %v512
      %v514 = vpop.f32.mrf.mxu0
      %v515 = vadd.f32 %v438, %v514
      %516 = vmatmul.bf16.gmra.mxu0 %v451
      %v517 = vpop.f32.mrf.mxu0
      %v518 = vadd.f32 %v438, %v517
      %v519 = vpop.f32.mrf.mxu0
      %v520 = vadd.f32 %v438, %v519
      %521 = vmatmul.bf16.gmra.mxu0 %v454
      %v522 = vpop.f32.mrf.mxu0
      %v523 = vadd.f32 %v438, %v522
      %v524 = vpop.f32.mrf.mxu0
      %v525 = vadd.f32 %v438, %v524
      %526 = vmatmul.bf16.gmra.mxu0 %v457
      %v527 = vpop.f32.mrf.mxu0
      %v528 = vadd.f32 %v438, %v527
      %v529 = vpop.f32.mrf.mxu0
      %v530 = vadd.f32 %v438, %v529
      %531 = vmatmul.bf16.gmra.mxu0 %v460
      %v532 = vpop.f32.mrf.mxu0
      %v533 = vadd.f32 %v438, %v532
      %v534 = vpop.f32.mrf.mxu0
      %v535 = vadd.f32 %v438, %v534
      %536 = vmatmul.bf16.gmra.mxu0 %v463
      %v537 = vpop.f32.mrf.mxu0
      %v538 = vadd.f32 %v438, %v537
      %v539 = vpop.f32.mrf.mxu0
      %v540 = vadd.f32 %v438, %v539
      %541 = vmatmul.bf16.gmra.mxu0 %v466
      %v542 = vpop.f32.mrf.mxu0
      %v543 = vadd.f32 %v438, %v542
      %v544 = vpop.f32.mrf.mxu0
      %v545 = vadd.f32 %v438, %v544
      %546 = vmatmul.bf16.gmra.mxu0 %v469
      %v547 = vpop.f32.mrf.mxu0
      %v548 = vadd.f32 %v438, %v547
      %v549 = vpop.f32.mrf.mxu0
      %v550 = vadd.f32 %v438, %v549
      %551 = vmatmul.bf16.gmra.mxu0 %v472
      %v552 = vpop.f32.mrf.mxu0
      %v553 = vadd.f32 %v438, %v552
      %v554 = vpop.f32.mrf.mxu0
      %v555 = vadd.f32 %v438, %v554
      %556 = vmatmul.bf16.gmra.mxu0 %v475
      %v557 = vpop.f32.mrf.mxu0
      %v558 = vadd.f32 %v438, %v557
      %v559 = vpop.f32.mrf.mxu0
      %v560 = vadd.f32 %v438, %v559
      %561 = vmatmul.bf16.gmra.mxu0 %v478
      %v562 = vpop.f32.mrf.mxu0
      %v563 = vadd.f32 %v438, %v562
      %v564 = vpop.f32.mrf.mxu0
      %v565 = vadd.f32 %v438, %v564
      %566 = vmatmul.bf16.gmra.mxu0 %v481
      %v567 = vpop.f32.mrf.mxu0
      %v568 = vadd.f32 %v438, %v567
      %v569 = vpop.f32.mrf.mxu0
      %v570 = vadd.f32 %v438, %v569
      %571 = vmatmul.bf16.gmra.mxu0 %v484
      %v572 = vpop.f32.mrf.mxu0
      %v573 = vadd.f32 %v438, %v572
      %v574 = vpop.f32.mrf.mxu0
      %v575 = vadd.f32 %v438, %v574
      %576 = vmatmul.bf16.gmra.mxu0 %v487
      %v577 = vpop.f32.mrf.mxu0
      %v578 = vadd.f32 %v438, %v577
      %v579 = vpop.f32.mrf.mxu0
      %v580 = vadd.f32 %v438, %v579
      %581 = vdwg.mxu0
      %v582 = vld [vmem:[%s5] sm:$0x1]
      %v584 = vperm.slane %v582, 0
      %v586 = vmul.f32 %v503, %v584
      %v587 = vmul.f32 %v505, %v584
      %v588 = vmul.f32 %v508, %v584
      %v589 = vmul.f32 %v510, %v584
      %v590 = vmul.f32 %v513, %v584
      %v591 = vmul.f32 %v515, %v584
      %v592 = vmul.f32 %v518, %v584
      %v593 = vmul.f32 %v520, %v584
      %v594 = vmul.f32 %v523, %v584
      %v595 = vmul.f32 %v525, %v584
      %v596 = vmul.f32 %v528, %v584
      %v597 = vmul.f32 %v530, %v584
      %v598 = vmul.f32 %v533, %v584
      %v599 = vmul.f32 %v535, %v584
      %v600 = vmul.f32 %v538, %v584
      %v601 = vmul.f32 %v540, %v584
      %v602 = vmul.f32 %v543, %v584
      %v603 = vmul.f32 %v545, %v584
      %v604 = vmul.f32 %v548, %v584
      %v605 = vmul.f32 %v550, %v584
      %v606 = vmul.f32 %v553, %v584
      %v607 = vmul.f32 %v555, %v584
      %v608 = vmul.f32 %v558, %v584
      %v609 = vmul.f32 %v560, %v584
      %v610 = vmul.f32 %v563, %v584
      %v611 = vmul.f32 %v565, %v584
      %v612 = vmul.f32 %v568, %v584
      %v613 = vmul.f32 %v570, %v584
      %v614 = vmul.f32 %v573, %v584
      %v615 = vmul.f32 %v575, %v584
      %v616 = vmul.f32 %v578, %v584
      %v617 = vmul.f32 %v580, %v584
      %v618 = vld [vmem:[%s6] sm:$0x1]
      %v620 = vperm.slane %v618, 0
      %v622 = vadd.f32 %v586, %v620
      %v623 = vadd.f32 %v587, %v620
      %v624 = vadd.f32 %v588, %v620
      %v625 = vadd.f32 %v589, %v620
      %v626 = vadd.f32 %v590, %v620
      %v627 = vadd.f32 %v591, %v620
      %v628 = vadd.f32 %v592, %v620
      %v629 = vadd.f32 %v593, %v620
      %v630 = vadd.f32 %v594, %v620
      %v631 = vadd.f32 %v595, %v620
      %v632 = vadd.f32 %v596, %v620
      %v633 = vadd.f32 %v597, %v620
      %v634 = vadd.f32 %v598, %v620
      %v635 = vadd.f32 %v599, %v620
      %v636 = vadd.f32 %v600, %v620
      %v637 = vadd.f32 %v601, %v620
      %v638 = vadd.f32 %v602, %v620
      %v639 = vadd.f32 %v603, %v620
      %v640 = vadd.f32 %v604, %v620
      %v641 = vadd.f32 %v605, %v620
      %v642 = vadd.f32 %v606, %v620
      %v643 = vadd.f32 %v607, %v620
      %v644 = vadd.f32 %v608, %v620
      %v645 = vadd.f32 %v609, %v620
      %v646 = vadd.f32 %v610, %v620
      %v647 = vadd.f32 %v611, %v620
      %v648 = vadd.f32 %v612, %v620
      %v649 = vadd.f32 %v613, %v620
      %v650 = vadd.f32 %v614, %v620
      %v651 = vadd.f32 %v615, %v620
      %v652 = vadd.f32 %v616, %v620
      %v653 = vadd.f32 %v617, %v620
      %v654 = vmax.f32 %v622, 0.0
      %v655 = vmax.f32 %v623, 0.0
      %v656 = vmax.f32 %v624, 0.0
      %v657 = vmax.f32 %v625, 0.0
      %v658 = vmax.f32 %v626, 0.0
      %v659 = vmax.f32 %v627, 0.0
      %v660 = vmax.f32 %v628, 0.0
      %v661 = vmax.f32 %v629, 0.0
      %v662 = vmax.f32 %v630, 0.0
      %v663 = vmax.f32 %v631, 0.0
      %v664 = vmax.f32 %v632, 0.0
      %v665 = vmax.f32 %v633, 0.0
      %v666 = vmax.f32 %v634, 0.0
      %v667 = vmax.f32 %v635, 0.0
      %v668 = vmax.f32 %v636, 0.0
      %v669 = vmax.f32 %v637, 0.0
      %v670 = vmax.f32 %v638, 0.0
      %v671 = vmax.f32 %v639, 0.0
      %v672 = vmax.f32 %v640, 0.0
      %v673 = vmax.f32 %v641, 0.0
      %v674 = vmax.f32 %v642, 0.0
      %v675 = vmax.f32 %v643, 0.0
      %v676 = vmax.f32 %v644, 0.0
      %v677 = vmax.f32 %v645, 0.0
      %v678 = vmax.f32 %v646, 0.0
      %v679 = vmax.f32 %v647, 0.0
      %v680 = vmax.f32 %v648, 0.0
      %v681 = vmax.f32 %v649, 0.0
      %v682 = vmax.f32 %v650, 0.0
      %v683 = vmax.f32 %v651, 0.0
      %v684 = vmax.f32 %v652, 0.0
      %v685 = vmax.f32 %v653, 0.0
      %v686 = vpack.c.bf16 %v654, %v654
      %v687 = vpack.c.bf16 %v655, %v655
      %v688 = vpack.c.bf16 %v656, %v656
      %v689 = vpack.c.bf16 %v657, %v657
      %v690 = vpack.c.bf16 %v658, %v658
      %v691 = vpack.c.bf16 %v659, %v659
      %v692 = vpack.c.bf16 %v660, %v660
      %v693 = vpack.c.bf16 %v661, %v661
      %v694 = vpack.c.bf16 %v662, %v662
      %v695 = vpack.c.bf16 %v663, %v663
      %v696 = vpack.c.bf16 %v664, %v664
      %v697 = vpack.c.bf16 %v665, %v665
      %v698 = vpack.c.bf16 %v666, %v666
      %v699 = vpack.c.bf16 %v667, %v667
      %v700 = vpack.c.bf16 %v668, %v668
      %v701 = vpack.c.bf16 %v669, %v669
      %v702 = vpack.c.bf16 %v670, %v670
      %v703 = vpack.c.bf16 %v671, %v671
      %v704 = vpack.c.bf16 %v672, %v672
      %v705 = vpack.c.bf16 %v673, %v673
      %v706 = vpack.c.bf16 %v674, %v674
      %v707 = vpack.c.bf16 %v675, %v675
      %v708 = vpack.c.bf16 %v676, %v676
      %v709 = vpack.c.bf16 %v677, %v677
      %v710 = vpack.c.bf16 %v678, %v678
      %v711 = vpack.c.bf16 %v679, %v679
      %v712 = vpack.c.bf16 %v680, %v680
      %v713 = vpack.c.bf16 %v681, %v681
      %v714 = vpack.c.bf16 %v682, %v682
      %v715 = vpack.c.bf16 %v683, %v683
      %v716 = vpack.c.bf16 %v684, %v684
      %v717 = vpack.c.bf16 %v685, %v685
      %vm718 = vcmask 60416
      %719 = vst.msk [vmem:[%s280] sm:$0xf] %vm718, %v686
      %720 = vst.msk [vmem:[%s280 + $0x4] sm:$0xf] %vm718, %v687
      %721 = vst.msk [vmem:[%s280 + $0x8] sm:$0xf] %vm718, %v688
      %722 = vst.msk [vmem:[%s280 + $0xc] sm:$0xf] %vm718, %v689
      %723 = vst.msk [vmem:[%s280 + $0x10] sm:$0xf] %vm718, %v690
      %724 = vst.msk [vmem:[%s280 + $0x14] sm:$0xf] %vm718, %v691
      %725 = vst.msk [vmem:[%s280 + $0x18] sm:$0xf] %vm718, %v692
      %726 = vst.msk [vmem:[%s280 + $0x1c] sm:$0xf] %vm718, %v693
      %727 = vst.msk [vmem:[%s280 + $0x20] sm:$0xf] %vm718, %v694
      %728 = vst.msk [vmem:[%s280 + $0x24] sm:$0xf] %vm718, %v695
      %729 = vst.msk [vmem:[%s280 + $0x28] sm:$0xf] %vm718, %v696
      %730 = vst.msk [vmem:[%s280 + $0x2c] sm:$0xf] %vm718, %v697
      %731 = vst.msk [vmem:[%s280 + $0x30] sm:$0xf] %vm718, %v698
      %732 = vst.msk [vmem:[%s280 + $0x34] sm:$0xf] %vm718, %v699
      %733 = vst.msk [vmem:[%s280 + $0x38] sm:$0xf] %vm718, %v700
      %734 = vst.msk [vmem:[%s280 + $0x3c] sm:$0xf] %vm718, %v701
      %735 = vst.msk [vmem:[%s280 + $0x40] sm:$0xf] %vm718, %v702
      %736 = vst.msk [vmem:[%s280 + $0x44] sm:$0xf] %vm718, %v703
      %737 = vst.msk [vmem:[%s280 + $0x48] sm:$0xf] %vm718, %v704
      %738 = vst.msk [vmem:[%s280 + $0x4c] sm:$0xf] %vm718, %v705
      %739 = vst.msk [vmem:[%s280 + $0x50] sm:$0xf] %vm718, %v706
      %740 = vst.msk [vmem:[%s280 + $0x54] sm:$0xf] %vm718, %v707
      %741 = vst.msk [vmem:[%s280 + $0x58] sm:$0xf] %vm718, %v708
      %742 = vst.msk [vmem:[%s280 + $0x5c] sm:$0xf] %vm718, %v709
      %743 = vst.msk [vmem:[%s280 + $0x60] sm:$0xf] %vm718, %v710
      %744 = vst.msk [vmem:[%s280 + $0x64] sm:$0xf] %vm718, %v711
      %745 = vst.msk [vmem:[%s280 + $0x68] sm:$0xf] %vm718, %v712
      %746 = vst.msk [vmem:[%s280 + $0x6c] sm:$0xf] %vm718, %v713
      %747 = vst.msk [vmem:[%s280 + $0x70] sm:$0xf] %vm718, %v714
      %748 = vst.msk [vmem:[%s280 + $0x74] sm:$0xf] %vm718, %v715
      %749 = vst.msk [vmem:[%s280 + $0x78] sm:$0xf] %vm718, %v716
      %750 = vst.msk [vmem:[%s280 + $0x7c] sm:$0xf] %vm718, %v717
      %s751 = smul.u32 32, %s18
      %p752 = scmp.lt.s32.totalorder %s751, 63
      %s753 = scalar_select %p752, %s751, 63
      %s754 = smul.addr %s753, 4
      %s755 = scalar_lea.vmem %s7, %s754
      // Predicated region
      $region49: #{transunet_encoder_conv_block.4} parent=47 // pred_check
        %p756 = pneg %p188
      $region50: #{transunet_encoder_conv_block.4} parent=47 // pred_check_branch
        %758 = sbr.rel (%p756) target = $region52
      $region51: #{transunet_encoder_conv_block.4} parent=47 // pred_region
        %s759 = smul.u32 32, %s18
      $region52: #{transunet_encoder_conv_block.4} parent=47 // pred_fallthru
        _
    $region48: #{transunet_encoder_conv_block.4} parent=5 // pred_fallthru
      _
    %p760 = scmp.le.s32.totalorder 2, %s13
    // Predicated region
    $region53: #{transunet_encoder_conv_block.4} parent=5 // pred_check
      %p761 = pneg %p760
    $region54: #{transunet_encoder_conv_block.4} parent=5 // pred_check_branch
      %763 = sbr.rel (%p761) target = $region56
    $region55: #{transunet_encoder_conv_block.4} parent=5 // pred_region
      %s764 = ssub.s32 %s13, 2
      // Predicated region
      $region57: #{transunet_encoder_conv_block.4} parent=55 // pred_check
        %p765 = pneg %p194
      $region58: #{transunet_encoder_conv_block.4} parent=55 // pred_check_branch
        %767 = sbr.rel (%p765) target = $region60
      $region59: #{transunet_encoder_conv_block.4} parent=55 // pred_region
        %s768 = smul.u32 32, %s19
        %p769 = scmp.lt.s32.totalorder %s768, 63
        %s770 = scalar_select %p769, %s768, 63
        %s771 = smul.addr %s770, 4
        %s772 = scalar_lea.vmem %s7, %s771
      $region60: #{transunet_encoder_conv_block.4} parent=55 // pred_fallthru
        _
    $region56: #{transunet_encoder_conv_block.4} parent=5 // pred_fallthru
      _
  $region6: #{transunet_encoder_conv_block.4} parent=0 // loop_footer
    %s17 = sadd.s32 1, %s13
  $region7: #{transunet_encoder_conv_block.4} parent=0 // loop_footer_branch
    %12 = sbr.rel target = $region3
  $region8: #{transunet_encoder_conv_block.4} parent=0 // loop_exit
    _

// kernel: transunet_encoder_conv_block.7
$region0: #{transunet_encoder_conv_block.7}
  #allocation0 [shape = 'u32[]', space=smem, size = 0x4, offset = 0x4, fixed_abs, tag = 'smem constant byte address 0x4 - core index']
  #allocation1 [shape = 'u32[72,128]{1,0:T(1,128)}', space=vmem, size = 0x9000, scoped, tag = 'internal scratch']
  %s0 = inlined_call_operand.vmem [shape: bf16[2,10,10,8], index: 0, kind: input, shape index: {}]
  %s1 = inlined_call_operand.vmem [shape: f32[2,8,8,8], index: 1, kind: input, shape index: {}]
  %s2 = inlined_call_operand.vmem [shape: bf16[72,8], index: 2, kind: input, shape index: {}]
  %s3 = inlined_call_operand.vmem [shape: f32[1,8], index: 3, kind: input, shape index: {}]
  %s4 = inlined_call_operand.vmem [shape: f32[1,8], index: 4, kind: input, shape index: {}]
  %s5 = inlined_call_operand.vmem [shape: f32[1,8], index: 5, kind: input, shape index: {}]
  %s6 = inlined_call_operand.vmem [shape: bf16[8,8], index: 6, kind: input, shape index: {}]
  %s7 = inlined_call_operand.vmem [shape: f32[1,8], index: 7, kind: input, shape index: {}]
  %s8 = inlined_call_operand.vmem [shape: f32[128,8], index: 8, kind: output, shape index: {}]
  %s9 = sld [smem:[#allocation0]]
  $region65: #{transunet_encoder_conv_block.7} parent=0
    _
  %s11 = ssub.s32 1, %s9
  %s12 = scalar_select 0, %s11, %s9
  loop: start=0, step=1, limit=6
  $region2: #{transunet_encoder_conv_block.7} parent=0 // loop_pre_header
    _
  $region3: #{transunet_encoder_conv_block.7} parent=0 // loop_header
    %s14 = sphi 0, %s18
    %p15 = scmp.ge.s32.totalorder %s14, 6
    %s21 = sphi 0, %s33
    %s22 = sphi 0, %s29
    %s23 = sphi 0, %s21
    %s24 = sphi 0, %s22
    %s25 = sphi 0, %s23
    %s26 = sphi 0, %s24
    %s36 = sphi 0, %s38
    %s39 = sphi 0, %s36
    %s40 = sphi 0, %s39
    %s56 = sphi 0, %s40
    %s62 = sphi 0, %s64
    %s65 = sphi 0, %s62
    %s66 = sphi 0, %s65
    %s82 = sphi 0, %s66
    %s86 = sphi 0, %s86
    %s88 = sphi 0, %s86
    %s89 = sphi 0, %s88
    %s103 = sphi 0, %s89
    %s107 = sphi 0, %s107
    %s109 = sphi 0, %s107
    %s110 = sphi 0, %s109
    %s124 = sphi 0, %s110
    %s128 = sphi 0, %s128
    %s130 = sphi 0, %s128
    %s131 = sphi 0, %s130
    %s145 = sphi 0, %s131
    %s149 = sphi 0, %s149
    %s151 = sphi 0, %s149
    %s152 = sphi 0, %s151
    %s166 = sphi 0, %s152
    %s170 = sphi 0, %s170
    %s172 = sphi 0, %s170
    %s173 = sphi 0, %s172
    %s187 = sphi 0, %s173
    %s191 = sphi 0, %s191
    %s193 = sphi 0, %s191
    %s194 = sphi 0, %s193
    %s208 = sphi 0, %s194
    %s218 = sphi 0, %s220
    %s221 = sphi 0, %s218
    %s222 = sphi 0, %s221
    %s238 = sphi 0, %s222
  $region4: #{transunet_encoder_conv_block.7} parent=0 // loop_header_branch
    %17 = sbr.rel (%p15) target = $region8
  $region5: #{transunet_encoder_conv_block.7} parent=0 // loop_body
    %s19 = ssub.s32 %s14, 1
    %s20 = ssub.s32 %s14, 2
    %s27 = sadd.s32 1, %s22
    %p28 = scmp.ge.s32.totalorder %s27, 2
    %s29 = scalar_select %p28, 0, %s27
    %s30 = sadd.s32 1, %s21
    %s31 = scalar_select %p28, %s30, %s21
    %p32 = scmp.ge.s32.totalorder %s31, 2
    %s33 = scalar_select %p32, 0, %s31
    %s34 = ssub.s32 %s21, %s33
    %p35 = scmp.eq.s32.totalorder %s34, 0
    %s37 = sadd.s32 %s36, 1
    %s38 = scalar_select %p35, %s36, %s37
    %p41 = pneg %p35
    %p42 = scmp.eq.s32.totalorder %s14, 3
    %p43 = por %p41, %p42
    %p44 = scmp.ne.s32.totalorder %s36, %s39
    %p45 = scmp.eq.s32.totalorder %s14, 0
    %p46 = por %p44, %p45
    %p47 = scmp.ne.s32.totalorder %s36, %s39
    %p48 = scmp.eq.s32.totalorder %s19, 3
    %p49 = por %p47, %p48
    %p50 = scmp.ne.s32.totalorder %s39, %s40
    %p51 = scmp.eq.s32.totalorder %s19, 0
    %p52 = por %p50, %p51
    %p53 = scmp.ne.s32.totalorder %s39, %s40
    %p54 = scmp.eq.s32.totalorder %s20, 3
    %p55 = por %p53, %p54
    %p57 = scmp.ne.s32.totalorder %s40, %s56
    %p58 = scmp.eq.s32.totalorder %s20, 0
    %p59 = por %p57, %p58
    %s60 = ssub.s32 %s21, %s33
    %p61 = scmp.eq.s32.totalorder %s60, 0
    %s63 = sadd.s32 %s62, 1
    %s64 = scalar_select %p61, %s62, %s63
    %p67 = pneg %p61
    %p68 = scmp.eq.s32.totalorder %s14, 3
    %p69 = por %p67, %p68
    %p70 = scmp.ne.s32.totalorder %s62, %s65
    %p71 = scmp.eq.s32.totalorder %s14, 0
    %p72 = por %p70, %p71
    %p73 = scmp.ne.s32.totalorder %s62, %s65
    %p74 = scmp.eq.s32.totalorder %s19, 3
    %p75 = por %p73, %p74
    %p76 = scmp.ne.s32.totalorder %s65, %s66
    %p77 = scmp.eq.s32.totalorder %s19, 0
    %p78 = por %p76, %p77
    %p79 = scmp.ne.s32.totalorder %s65, %s66
    %p80 = scmp.eq.s32.totalorder %s20, 3
    %p81 = por %p79, %p80
    %p83 = scmp.ne.s32.totalorder %s66, %s82
    %p84 = scmp.eq.s32.totalorder %s20, 0
    %p85 = por %p83, %p84
    %s87 = sadd.s32 %s86, 1
    %p90 = scmp.eq.s32.totalorder %s14, 3
    %p91 = scmp.ne.s32.totalorder %s86, %s88
    %p92 = scmp.eq.s32.totalorder %s14, 0
    %p93 = por %p91, %p92
    %p94 = scmp.ne.s32.totalorder %s86, %s88
    %p95 = scmp.eq.s32.totalorder %s19, 3
    %p96 = por %p94, %p95
    %p97 = scmp.ne.s32.totalorder %s88, %s89
    %p98 = scmp.eq.s32.totalorder %s19, 0
    %p99 = por %p97, %p98
    %p100 = scmp.ne.s32.totalorder %s88, %s89
    %p101 = scmp.eq.s32.totalorder %s20, 3
    %p102 = por %p100, %p101
    %p104 = scmp.ne.s32.totalorder %s89, %s103
    %p105 = scmp.eq.s32.totalorder %s20, 0
    %p106 = por %p104, %p105
    %s108 = sadd.s32 %s107, 1
    %p111 = scmp.eq.s32.totalorder %s14, 3
    %p112 = scmp.ne.s32.totalorder %s107, %s109
    %p113 = scmp.eq.s32.totalorder %s14, 0
    %p114 = por %p112, %p113
    %p115 = scmp.ne.s32.totalorder %s107, %s109
    %p116 = scmp.eq.s32.totalorder %s19, 3
    %p117 = por %p115, %p116
    %p118 = scmp.ne.s32.totalorder %s109, %s110
    %p119 = scmp.eq.s32.totalorder %s19, 0
    %p120 = por %p118, %p119
    %p121 = scmp.ne.s32.totalorder %s109, %s110
    %p122 = scmp.eq.s32.totalorder %s20, 3
    %p123 = por %p121, %p122
    %p125 = scmp.ne.s32.totalorder %s110, %s124
    %p126 = scmp.eq.s32.totalorder %s20, 0
    %p127 = por %p125, %p126
    %s129 = sadd.s32 %s128, 1
    %p132 = scmp.eq.s32.totalorder %s14, 3
    %p133 = scmp.ne.s32.totalorder %s128, %s130
    %p134 = scmp.eq.s32.totalorder %s14, 0
    %p135 = por %p133, %p134
    %p136 = scmp.ne.s32.totalorder %s128, %s130
    %p137 = scmp.eq.s32.totalorder %s19, 3
    %p138 = por %p136, %p137
    %p139 = scmp.ne.s32.totalorder %s130, %s131
    %p140 = scmp.eq.s32.totalorder %s19, 0
    %p141 = por %p139, %p140
    %p142 = scmp.ne.s32.totalorder %s130, %s131
    %p143 = scmp.eq.s32.totalorder %s20, 3
    %p144 = por %p142, %p143
    %p146 = scmp.ne.s32.totalorder %s131, %s145
    %p147 = scmp.eq.s32.totalorder %s20, 0
    %p148 = por %p146, %p147
    %s150 = sadd.s32 %s149, 1
    %p153 = scmp.eq.s32.totalorder %s14, 3
    %p154 = scmp.ne.s32.totalorder %s149, %s151
    %p155 = scmp.eq.s32.totalorder %s14, 0
    %p156 = por %p154, %p155
    %p157 = scmp.ne.s32.totalorder %s149, %s151
    %p158 = scmp.eq.s32.totalorder %s19, 3
    %p159 = por %p157, %p158
    %p160 = scmp.ne.s32.totalorder %s151, %s152
    %p161 = scmp.eq.s32.totalorder %s19, 0
    %p162 = por %p160, %p161
    %p163 = scmp.ne.s32.totalorder %s151, %s152
    %p164 = scmp.eq.s32.totalorder %s20, 3
    %p165 = por %p163, %p164
    %p167 = scmp.ne.s32.totalorder %s152, %s166
    %p168 = scmp.eq.s32.totalorder %s20, 0
    %p169 = por %p167, %p168
    %s171 = sadd.s32 %s170, 1
    %p174 = scmp.eq.s32.totalorder %s14, 3
    %p175 = scmp.ne.s32.totalorder %s170, %s172
    %p176 = scmp.eq.s32.totalorder %s14, 0
    %p177 = por %p175, %p176
    %p178 = scmp.ne.s32.totalorder %s170, %s172
    %p179 = scmp.eq.s32.totalorder %s19, 3
    %p180 = por %p178, %p179
    %p181 = scmp.ne.s32.totalorder %s172, %s173
    %p182 = scmp.eq.s32.totalorder %s19, 0
    %p183 = por %p181, %p182
    %p184 = scmp.ne.s32.totalorder %s172, %s173
    %p185 = scmp.eq.s32.totalorder %s20, 3
    %p186 = por %p184, %p185
    %p188 = scmp.ne.s32.totalorder %s173, %s187
    %p189 = scmp.eq.s32.totalorder %s20, 0
    %p190 = por %p188, %p189
    %s192 = sadd.s32 %s191, 1
    %p195 = scmp.eq.s32.totalorder %s14, 3
    %p196 = scmp.ne.s32.totalorder %s191, %s193
    %p197 = scmp.eq.s32.totalorder %s14, 0
    %p198 = por %p196, %p197
    %p199 = scmp.ne.s32.totalorder %s191, %s193
    %p200 = scmp.eq.s32.totalorder %s19, 3
    %p201 = por %p199, %p200
    %p202 = scmp.ne.s32.totalorder %s193, %s194
    %p203 = scmp.eq.s32.totalorder %s19, 0
    %p204 = por %p202, %p203
    %p205 = scmp.ne.s32.totalorder %s193, %s194
    %p206 = scmp.eq.s32.totalorder %s20, 3
    %p207 = por %p205, %p206
    %p209 = scmp.ne.s32.totalorder %s194, %s208
    %p210 = scmp.eq.s32.totalorder %s20, 0
    %p211 = por %p209, %p210
    %s212 = smul.u32 %s21, 2
    %s213 = sadd.s32 %s212, %s22
    %s214 = smul.u32 %s33, 2
    %s215 = sadd.s32 %s214, %s29
    %s216 = ssub.s32 %s213, %s215
    %p217 = scmp.eq.s32.totalorder %s216, 0
    %s219 = sadd.s32 %s218, 1
    %s220 = scalar_select %p217, %s218, %s219
    %p223 = pneg %p217
    %p224 = scmp.eq.s32.totalorder %s14, 3
    %p225 = por %p223, %p224
    %p226 = scmp.ne.s32.totalorder %s218, %s221
    %p227 = scmp.eq.s32.totalorder %s14, 0
    %p228 = por %p226, %p227
    %p229 = scmp.ne.s32.totalorder %s218, %s221
    %p230 = scmp.eq.s32.totalorder %s19, 3
    %p231 = por %p229, %p230
    %p232 = scmp.ne.s32.totalorder %s221, %s222
    %p233 = scmp.eq.s32.totalorder %s19, 0
    %p234 = por %p232, %p233
    %p235 = scmp.ne.s32.totalorder %s221, %s222
    %p236 = scmp.eq.s32.totalorder %s20, 3
    %p237 = por %p235, %p236
    %p239 = scmp.ne.s32.totalorder %s222, %s238
    %p240 = scmp.eq.s32.totalorder %s20, 0
    %p241 = por %p239, %p240
    %p242 = scmp.le.s32.totalorder 1, %s14
    %p243 = scmp.lt.s32.totalorder %s14, 5
    %p244 = pnand %p242, %p243
    %p245 = pneg %p244
    // Predicated region
    $region9: #{transunet_encoder_conv_block.7} parent=5 // pred_check
      _
    $region10: #{transunet_encoder_conv_block.7} parent=5 // pred_check_branch
      %247 = sbr.rel (%p244) target = $region12
    $region11: #{transunet_encoder_conv_block.7} parent=5 // pred_region
      %s248 = ssub.s32 %s14, 1
      // Predicated region
      $region13: #{transunet_encoder_conv_block.7} parent=11 // pred_check
        %p249 = pneg %p99
      $region14: #{transunet_encoder_conv_block.7} parent=11 // pred_check_branch
        %251 = sbr.rel (%p249) target = $region16
      $region15: #{transunet_encoder_conv_block.7} parent=11 // pred_region
        _
      $region16: #{transunet_encoder_conv_block.7} parent=11 // pred_fallthru
        _
      // Predicated region
      $region17: #{transunet_encoder_conv_block.7} parent=11 // pred_check
        %p252 = pneg %p120
      $region18: #{transunet_encoder_conv_block.7} parent=11 // pred_check_branch
        %254 = sbr.rel (%p252) target = $region20
      $region19: #{transunet_encoder_conv_block.7} parent=11 // pred_region
        _
      $region20: #{transunet_encoder_conv_block.7} parent=11 // pred_fallthru
        _
      // Predicated region
      $region21: #{transunet_encoder_conv_block.7} parent=11 // pred_check
        %p255 = pneg %p141
      $region22: #{transunet_encoder_conv_block.7} parent=11 // pred_check_branch
        %257 = sbr.rel (%p255) target = $region24
      $region23: #{transunet_encoder_conv_block.7} parent=11 // pred_region
        _
      $region24: #{transunet_encoder_conv_block.7} parent=11 // pred_fallthru
        _
      // Predicated region
      $region25: #{transunet_encoder_conv_block.7} parent=11 // pred_check
        %p258 = pneg %p162
      $region26: #{transunet_encoder_conv_block.7} parent=11 // pred_check_branch
        %260 = sbr.rel (%p258) target = $region28
      $region27: #{transunet_encoder_conv_block.7} parent=11 // pred_region
        _
      $region28: #{transunet_encoder_conv_block.7} parent=11 // pred_fallthru
        _
      // Predicated region
      $region29: #{transunet_encoder_conv_block.7} parent=11 // pred_check
        %p261 = pneg %p183
      $region30: #{transunet_encoder_conv_block.7} parent=11 // pred_check_branch
        %263 = sbr.rel (%p261) target = $region32
      $region31: #{transunet_encoder_conv_block.7} parent=11 // pred_region
        _
      $region32: #{transunet_encoder_conv_block.7} parent=11 // pred_fallthru
        _
      // Predicated region
      $region33: #{transunet_encoder_conv_block.7} parent=11 // pred_check
        %p264 = pneg %p204
      $region34: #{transunet_encoder_conv_block.7} parent=11 // pred_check_branch
        %266 = sbr.rel (%p264) target = $region36
      $region35: #{transunet_encoder_conv_block.7} parent=11 // pred_region
        _
      $region36: #{transunet_encoder_conv_block.7} parent=11 // pred_fallthru
        _
    $region12: #{transunet_encoder_conv_block.7} parent=5 // pred_fallthru
      _
    %p267 = scmp.lt.s32.totalorder %s14, 4
    // Predicated region
    $region37: #{transunet_encoder_conv_block.7} parent=5 // pred_check
      %p268 = pneg %p267
    $region38: #{transunet_encoder_conv_block.7} parent=5 // pred_check_branch
      %270 = sbr.rel (%p268) target = $region40
    $region39: #{transunet_encoder_conv_block.7} parent=5 // pred_region
      // Predicated region
      $region41: #{transunet_encoder_conv_block.7} parent=39 // pred_check
        %p271 = pneg %p46
      $region42: #{transunet_encoder_conv_block.7} parent=39 // pred_check_branch
        %273 = sbr.rel (%p271) target = $region44
      $region43: #{transunet_encoder_conv_block.7} parent=39 // pred_region
        %p274 = scmp.lt.s32.totalorder %s21, 1
        %s275 = scalar_select %p274, %s21, 1
        %s276 = smul.addr %s275, 20
        %s277 = smul.addr %s276, 4
        %s278 = scalar_lea.vmem %s0, %s277
      $region44: #{transunet_encoder_conv_block.7} parent=39 // pred_fallthru
        _
      // Predicated region
      $region45: #{transunet_encoder_conv_block.7} parent=39 // pred_check
        %p279 = pneg %p72
      $region46: #{transunet_encoder_conv_block.7} parent=39 // pred_check_branch
        %281 = sbr.rel (%p279) target = $region48
      $region47: #{transunet_encoder_conv_block.7} parent=39 // pred_region
        %p282 = scmp.lt.s32.totalorder %s21, 1
        %s283 = scalar_select %p282, %s21, 1
        %s284 = smul.addr %s283, 8
        %s285 = smul.addr %s284, 8
        %s286 = scalar_lea.vmem %s1, %s285
      $region48: #{transunet_encoder_conv_block.7} parent=39 // pred_fallthru
        _
    $region40: #{transunet_encoder_conv_block.7} parent=5 // pred_fallthru
      _
    %p287 = scmp.le.s32.totalorder 1, %s14
    %p288 = scmp.lt.s32.totalorder %s14, 5
    %p289 = pnand %p287, %p288
    %p290 = pneg %p289
    // Predicated region
    $region49: #{transunet_encoder_conv_block.7} parent=5 // pred_check
      _
    $region50: #{transunet_encoder_conv_block.7} parent=5 // pred_check_branch
      %292 = sbr.rel (%p289) target = $region52
    $region51: #{transunet_encoder_conv_block.7} parent=5 // pred_region
      %s293 = ssub.s32 %s14, 1
      %p294 = scmp.lt.s32.totalorder %s23, 1
      %s295 = scalar_select %p294, %s23, 1
      %s296 = smul.addr %s295, 20
      %s297 = smul.addr %s296, 4
      %s298 = scalar_lea.vmem %s0, %s297
      %p299 = pneg %p52
      %p300 = pneg %p49
      %p301 = scmp.lt.s32.totalorder %s23, 1
      %s302 = scalar_select %p301, %s23, 1
      %s303 = smul.addr %s302, 8
      %s304 = smul.addr %s303, 8
      %s305 = scalar_lea.vmem %s1, %s304
      %p306 = pneg %p78
      %p307 = pneg %p75
      %p308 = pneg %p99
      %p309 = pneg %p96
      %p310 = pneg %p120
      %p311 = pneg %p117
      %p312 = pneg %p141
      %p313 = pneg %p138
      %p314 = pneg %p162
      %p315 = pneg %p159
      %p316 = pneg %p183
      %p317 = pneg %p180
      %p318 = pneg %p204
      %p319 = pneg %p201
      %p320 = pneg %p234
      %p321 = pneg %p231
      %s322 = smul.u32 %s23, 2
      %s323 = sadd.s32 %s322, %s24
      %s324 = smul.u32 4, %s323
      %p325 = scmp.lt.s32.totalorder %s324, 15
      %s326 = scalar_select %p325, %s324, 15
      %s327 = smul.addr %s326, 8
      %s328 = scalar_lea.vmem %s8, %s327
      %p329 = scmp.lt.s32.totalorder %s23, 1
      %s330 = scalar_select %p329, %s23, 1
      %s331 = smul.addr %s330, 20
      %s332 = smul.addr %s331, 4
      %s333 = scalar_lea.vmem %s0, %s332
      %p334 = scmp.lt.s32.totalorder %s23, 1
      %s335 = scalar_select %p334, %s23, 1
      %s336 = smul.addr %s335, 8
      %s337 = smul.addr %s336, 8
      %s338 = scalar_lea.vmem %s1, %s337
      %s339 = smul.u32 %s23, 2
      %s340 = sadd.s32 %s339, %s24
      %s341 = smul.u32 4, %s340
      %p342 = scmp.lt.s32.totalorder %s341, 15
      %s343 = scalar_select %p342, %s341, 15
      %s344 = smul.addr %s343, 8
      %s345 = scalar_lea.vmem %s8, %s344
      %s346 = smul.u32 %s23, 2
      %s347 = sadd.s32 %s346, %s24
      %s348 = smul.u32 4, %s347
      %s350 = smul.u32 %s24, 4
      %s351 = smul.u32 %s350, 2
      %s352 = smul.addr %s351, 4
      %s353 = scalar_lea.vmem %s333, %s352
      %v354 = vld [vmem:[%s353] sm:$0xf]
      %v355 = vld [vmem:[%s353 + $0x4] sm:$0x1]
      %v356 = vld [vmem:[%s353 + $0x8] sm:$0xf]
      %v357 = vld [vmem:[%s353 + $0xc] sm:$0x1]
      %v358 = vld [vmem:[%s353 + $0x10] sm:$0xf]
      %v359 = vld [vmem:[%s353 + $0x14] sm:$0x1]
      %v360 = vld [vmem:[%s353 + $0x18] sm:$0xf]
      %v361 = vld [vmem:[%s353 + $0x1c] sm:$0x1]
      %v362 = vld [vmem:[%s353 + $0x20] sm:$0xf]
      %v363 = vld [vmem:[%s353 + $0x24] sm:$0x1]
      %v364 = vld [vmem:[%s353 + $0x28] sm:$0xf]
      %v365 = vld [vmem:[%s353 + $0x2c] sm:$0x1]
      %vm366 = vsmask.f32 3328
      %vm367 = vsmask.f32 7440
      %vm368 = vmor %vm366, %vm367
      %v370 = vshrl.u32 %v354, 16
      %v372 = vrot.slane %v370, 4
      %v373 = vshll.u32 %v354, 16
      %v375 = vrot.slane %v373, 5
      %v376 = vor.u32 %v372, %v375
      %v377 = vrot.slane %v376, 4
      %v379 = vshll.u32 %v355, 16
      %v381 = vrot.slane %v379, 5
      %v382 = vsel %vm368, %v377, %v381
      %v384 = vshrl.u32 %v356, 16
      %v386 = vrot.slane %v384, 4
      %v387 = vshll.u32 %v356, 16
      %v389 = vrot.slane %v387, 5
      %v390 = vor.u32 %v386, %v389
      %v391 = vrot.slane %v390, 4
      %v393 = vshll.u32 %v357, 16
      %v395 = vrot.slane %v393, 5
      %v396 = vsel %vm368, %v391, %v395
      %v398 = vshrl.u32 %v358, 16
      %v400 = vrot.slane %v398, 4
      %v401 = vshll.u32 %v358, 16
      %v403 = vrot.slane %v401, 5
      %v404 = vor.u32 %v400, %v403
      %v405 = vrot.slane %v404, 4
      %v407 = vshll.u32 %v359, 16
      %v409 = vrot.slane %v407, 5
      %v410 = vsel %vm368, %v405, %v409
      %v412 = vshrl.u32 %v360, 16
      %v414 = vrot.slane %v412, 4
      %v415 = vshll.u32 %v360, 16
      %v417 = vrot.slane %v415, 5
      %v418 = vor.u32 %v414, %v417
      %v419 = vrot.slane %v418, 4
      %v421 = vshll.u32 %v361, 16
      %v423 = vrot.slane %v421, 5
      %v424 = vsel %vm368, %v419, %v423
      %vm433 = vcmask 1042432
      %vm434 = vcmask 1046532
      %vm435 = vmor %vm433, %vm434
      %v436 = vrot.slane %v354, 5
      %v437 = vrot.slane %v436, 4
      %v438 = vrot.slane %v355, 5
      %v439 = vsel %vm435, %v437, %v438
      %v440 = vrot.slane %v356, 5
      %v441 = vrot.slane %v440, 4
      %v442 = vrot.slane %v357, 5
      %v443 = vsel %vm435, %v441, %v442
      %v444 = vrot.slane %v358, 5
      %v445 = vrot.slane %v444, 4
      %v446 = vrot.slane %v359, 5
      %v447 = vsel %vm435, %v445, %v446
      %v448 = vrot.slane %v360, 5
      %v449 = vrot.slane %v448, 4
      %v450 = vrot.slane %v361, 5
      %v451 = vsel %vm435, %v449, %v450
      %v453 = vshrl.u32 %v362, 16
      %v455 = vrot.slane %v453, 4
      %v456 = vshll.u32 %v362, 16
      %v458 = vrot.slane %v456, 5
      %v459 = vor.u32 %v455, %v458
      %v460 = vrot.slane %v459, 4
      %v462 = vshll.u32 %v363, 16
      %v464 = vrot.slane %v462, 5
      %v465 = vsel %vm368, %v460, %v464
      %v468 = vrot.slane %v362, 5
      %v469 = vrot.slane %v468, 4
      %v470 = vrot.slane %v363, 5
      %v471 = vsel %vm435, %v469, %v470
      %v473 = vshrl.u32 %v364, 16
      %v475 = vrot.slane %v473, 4
      %v476 = vshll.u32 %v364, 16
      %v478 = vrot.slane %v476, 5
      %v479 = vor.u32 %v475, %v478
      %v480 = vrot.slane %v479, 4
      %v482 = vshll.u32 %v365, 16
      %v484 = vrot.slane %v482, 5
      %v485 = vsel %vm368, %v480, %v484
      %v488 = vrot.slane %v364, 5
      %v489 = vrot.slane %v488, 4
      %v490 = vrot.slane %v365, 5
      %v491 = vsel %vm435, %v489, %v490
      %v492 = vunpack.c.l.b16 %v354
      %v493 = vunpack.c.l.b16 %v356
      %v494 = vunpack.c.l.b16 %v358
      %v495 = vunpack.c.l.b16 %v360
      %v496 = vpack.c.b16 %v493, %v492
      %v497 = vpack.c.b16 %v495, %v494
      %v498 = vunpack.c.l.b16 %v382
      %v499 = vunpack.c.l.b16 %v396
      %v500 = vunpack.c.l.b16 %v410
      %v501 = vunpack.c.l.b16 %v424
      %v502 = vpack.c.b16 %v499, %v498
      %v503 = vpack.c.b16 %v501, %v500
      %504 = vrot.lane.b32.xlu0 %v502, 8
      %v505 = vpop.permute.xlu0 %504
      %506 = vrot.lane.b32.xlu0 %v503, 8
      %v507 = vpop.permute.xlu0 %506
      %v508 = vunpack.c.l.b16 %v439
      %v509 = vunpack.c.l.b16 %v443
      %v510 = vunpack.c.l.b16 %v447
      %v511 = vunpack.c.l.b16 %v451
      %v512 = vpack.c.b16 %v509, %v508
      %v513 = vpack.c.b16 %v511, %v510
      %514 = vrot.lane.b32.xlu0 %v512, 16
      %v515 = vpop.permute.xlu0 %514
      %516 = vrot.lane.b32.xlu0 %v513, 16
      %v517 = vpop.permute.xlu0 %516
      %v518 = vunpack.c.l.b16 %v362
      %v519 = vpack.c.b16 %v494, %v493
      %v520 = vpack.c.b16 %v518, %v495
      %521 = vrot.lane.b32.xlu0 %v519, 24
      %v522 = vpop.permute.xlu0 %521
      %523 = vrot.lane.b32.xlu0 %v520, 24
      %v524 = vpop.permute.xlu0 %523
      %v525 = vunpack.c.l.b16 %v465
      %v526 = vpack.c.b16 %v500, %v499
      %v527 = vpack.c.b16 %v525, %v501
      %528 = vrot.lane.b32.xlu0 %v526, 32
      %v529 = vpop.permute.xlu0 %528
      %530 = vrot.lane.b32.xlu0 %v527, 32
      %v531 = vpop.permute.xlu0 %530
      %v532 = vunpack.c.l.b16 %v471
      %v533 = vpack.c.b16 %v510, %v509
      %v534 = vpack.c.b16 %v532, %v511
      %535 = vrot.lane.b32.xlu0 %v533, 40
      %v536 = vpop.permute.xlu0 %535
      %537 = vrot.lane.b32.xlu0 %v534, 40
      %v538 = vpop.permute.xlu0 %537
      %v539 = vunpack.c.l.b16 %v364
      %v540 = vpack.c.b16 %v539, %v518
      %541 = vrot.lane.b32.xlu0 %v497, 48
      %v542 = vpop.permute.xlu0 %541
      %543 = vrot.lane.b32.xlu0 %v540, 48
      %v544 = vpop.permute.xlu0 %543
      %v545 = vunpack.c.l.b16 %v485
      %v546 = vpack.c.b16 %v545, %v525
      %547 = vrot.lane.b32.xlu0 %v503, 56
      %v548 = vpop.permute.xlu0 %547
      %549 = vrot.lane.b32.xlu0 %v546, 56
      %v550 = vpop.permute.xlu0 %549
      %v551 = vunpack.c.l.b16 %v491
      %v552 = vpack.c.b16 %v551, %v532
      %553 = vrot.lane.b32.xlu0 %v513, 64
      %v554 = vpop.permute.xlu0 %553
      %555 = vrot.lane.b32.xlu0 %v552, 64
      %v556 = vpop.permute.xlu0 %555
      %vm557 = vcmask 64512
      %v560 = vsel %vm557, %v496, %v505
      %v563 = vsel %vm557, %v497, %v507
      %vm564 = vcmask 130048
      %v566 = vsel %vm564, %v560, %v515
      %v568 = vsel %vm564, %v563, %v517
      %vm569 = vcmask 195584
      %v571 = vsel %vm569, %v566, %v522
      %v573 = vsel %vm569, %v568, %v524
      %vm574 = vcmask 261120
      %v576 = vsel %vm574, %v571, %v529
      %v578 = vsel %vm574, %v573, %v531
      %vm579 = vcmask 326656
      %v581 = vsel %vm579, %v576, %v536
      %v583 = vsel %vm579, %v578, %v538
      %vm584 = vcmask 392192
      %v586 = vsel %vm584, %v581, %v542
      %v588 = vsel %vm584, %v583, %v544
      %vm589 = vcmask 457728
      %v591 = vsel %vm589, %v586, %v548
      %v593 = vsel %vm589, %v588, %v550
      %vm594 = vcmask 523264
      %v596 = vsel %vm594, %v591, %v554
      %v598 = vsel %vm594, %v593, %v556
      %v599 = vld [vmem:[%s2] sm:$0xf]
      %v600 = vld [vmem:[%s2 + $0x4] sm:$0xf]
      %v601 = vld [vmem:[%s2 + $0x8] sm:$0xf]
      %v602 = vld [vmem:[%s2 + $0xc] sm:$0xf]
      %v603 = vld [vmem:[%s2 + $0x10] sm:$0xf]
      %v604 = vld [vmem:[%s2 + $0x14] sm:$0xf]
      %v605 = vld [vmem:[%s2 + $0x18] sm:$0xf]
      %v606 = vld [vmem:[%s2 + $0x1c] sm:$0xf]
      %v607 = vld [vmem:[%s2 + $0x20] sm:$0xf]
      %v608 = vld [vmem:[%s3] sm:$0x1]
      %v610 = vperm.slane %v608, 0
      %v621 = vunpack.c.l.b16 %v599
      %v622 = vunpack.c.l.b16 %v600
      %v623 = vunpack.c.l.b16 %v601
      %v624 = vunpack.c.l.b16 %v602
      %v625 = vunpack.c.l.b16 %v603
      %v626 = vunpack.c.l.b16 %v604
      %v627 = vunpack.c.l.b16 %v605
      %v628 = vunpack.c.l.b16 %v606
      %v629 = vunpack.c.l.b16 %v607
      %v630 = vpack.c.b16 %v622, %v621
      %v631 = vpack.c.b16 %v624, %v623
      %v632 = vpack.c.b16 %v626, %v625
      %v633 = vpack.c.b16 %v628, %v627
      %v634 = vpack.c.b16 %v629, %v629
      %vm639 = vcmask 588800
      %v640 = vsel %vm639, %v596, 0
      %v642 = vsel %vm639, %v598, 0
      %vm644 = vcmask 1043456
      %v646 = vsel %vm644, %v634, 0
      %648 = vmatpush.bf16.msra.mxu0 0
      %649 = vmatpush.bf16.msra.mxu0 0
      %650 = vmatpush.bf16.msra.mxu0 0
      %651 = vmatpush.bf16.msra.mxu0 %v646
      %652 = vmatpush.bf16.msra.mxu0 %v633
      %653 = vmatpush.bf16.msra.mxu0 %v632
      %654 = vmatpush.bf16.msra.mxu0 %v631
      %655 = vmatpush.bf16.msra.mxu0 %v630
      %656 = vmatmul.bf16.gmra.mxu0 %v640
      %v657 = vpop.f32.mrf.mxu0
      %v658 = vadd.f32 %v610, %v657
      %v659 = vpop.f32.mrf.mxu0
      %v660 = vadd.f32 %v610, %v659
      %661 = vmatmul.bf16.gmra.mxu0 %v642
      %v662 = vpop.f32.mrf.mxu0
      %v663 = vadd.f32 %v610, %v662
      %v664 = vpop.f32.mrf.mxu0
      %v665 = vadd.f32 %v610, %v664
      %666 = vdwg.mxu0
      %v667 = vld [vmem:[%s4] sm:$0x1]
      %v669 = vperm.slane %v667, 0
      %v671 = vmul.f32 %v658, %v669
      %v672 = vmul.f32 %v660, %v669
      %v673 = vmul.f32 %v663, %v669
      %v674 = vmul.f32 %v665, %v669
      %v675 = vld [vmem:[%s5] sm:$0x1]
      %v677 = vperm.slane %v675, 0
      %v679 = vadd.f32 %v671, %v677
      %v680 = vadd.f32 %v672, %v677
      %v681 = vadd.f32 %v673, %v677
      %v682 = vadd.f32 %v674, %v677
      %v683 = vmax.f32 %v679, 0.0
      %v684 = vmax.f32 %v680, 0.0
      %v685 = vmax.f32 %v681, 0.0
      %v686 = vmax.f32 %v682, 0.0
      %v687 = vpack.c.bf16 %v684, %v683
      %v688 = vpack.c.bf16 %v686, %v685
      %v689 = vld [vmem:[%s6] sm:$0xf]
      %v690 = vld [vmem:[%s7] sm:$0x1]
      %v692 = vperm.slane %v690, 0
      %v695 = vsel %vm557, %v687, 0
      %v698 = vsel %vm557, %v688, 0
      %v701 = vsel %vm644, %v689, 0
      %703 = vmatpush.bf16.msra.mxu0 0
      %704 = vmatpush.bf16.msra.mxu0 0
      %705 = vmatpush.bf16.msra.mxu0 0
      %706 = vmatpush.bf16.msra.mxu0 0
      %707 = vmatpush.bf16.msra.mxu0 0
      %708 = vmatpush.bf16.msra.mxu0 0
      %709 = vmatpush.bf16.msra.mxu0 0
      %710 = vmatpush.bf16.msra.mxu0 %v701
      %711 = vmatmul.bf16.gmra.mxu0 %v695
      %v712 = vpop.f32.mrf.mxu0
      %v713 = vadd.f32 %v692, %v712
      %v714 = vpop.f32.mrf.mxu0
      %v715 = vadd.f32 %v692, %v714
      %716 = vmatmul.bf16.gmra.mxu0 %v698
      %v717 = vpop.f32.mrf.mxu0
      %v718 = vadd.f32 %v692, %v717
      %v719 = vpop.f32.mrf.mxu0
      %v720 = vadd.f32 %v692, %v719
      %721 = vdwg.mxu0
      %s722 = smul.u32 %s350, 8
      %s723 = scalar_lea.vmem %s338, %s722
      %v724 = vld [vmem:[%s723] sm:$0xff]
      %v725 = vld [vmem:[%s723 + $0x8] sm:$0xff]
      %v726 = vld [vmem:[%s723 + $0x10] sm:$0xff]
      %v727 = vld [vmem:[%s723 + $0x18] sm:$0xff]
      %v728 = vadd.f32 %v713, %v724
      %v729 = vadd.f32 %v715, %v725
      %v730 = vadd.f32 %v718, %v726
      %v731 = vadd.f32 %v720, %v727
      %732 = vst.msk [vmem:[%s345] sm:$0xff] %vm557, %v728
      %733 = vst.msk [vmem:[%s345 + $0x8] sm:$0xff] %vm557, %v729
      %734 = vst.msk [vmem:[%s345 + $0x10] sm:$0xff] %vm557, %v730
      %735 = vst.msk [vmem:[%s345 + $0x18] sm:$0xff] %vm557, %v731
      %s736 = smul.u32 %s23, 2
      %s737 = sadd.s32 %s736, %s24
      %s738 = smul.u32 4, %s737
      %p739 = scmp.lt.s32.totalorder %s738, 15
      %s740 = scalar_select %p739, %s738, 15
      %s741 = smul.addr %s740, 8
      %s742 = scalar_lea.vmem %s8, %s741
      // Predicated region
      $region53: #{transunet_encoder_conv_block.7} parent=51 // pred_check
        %p743 = pneg %p231
      $region54: #{transunet_encoder_conv_block.7} parent=51 // pred_check_branch
        %745 = sbr.rel (%p743) target = $region56
      $region55: #{transunet_encoder_conv_block.7} parent=51 // pred_region
        %s746 = smul.u32 %s23, 2
        %s747 = sadd.s32 %s746, %s24
        %s748 = smul.u32 4, %s747
      $region56: #{transunet_encoder_conv_block.7} parent=51 // pred_fallthru
        _
    $region52: #{transunet_encoder_conv_block.7} parent=5 // pred_fallthru
      _
    %p749 = scmp.le.s32.totalorder 2, %s14
    // Predicated region
    $region57: #{transunet_encoder_conv_block.7} parent=5 // pred_check
      %p750 = pneg %p749
    $region58: #{transunet_encoder_conv_block.7} parent=5 // pred_check_branch
      %752 = sbr.rel (%p750) target = $region60
    $region59: #{transunet_encoder_conv_block.7} parent=5 // pred_region
      %s753 = ssub.s32 %s14, 2
      // Predicated region
      $region61: #{transunet_encoder_conv_block.7} parent=59 // pred_check
        %p754 = pneg %p237
      $region62: #{transunet_encoder_conv_block.7} parent=59 // pred_check_branch
        %756 = sbr.rel (%p754) target = $region64
      $region63: #{transunet_encoder_conv_block.7} parent=59 // pred_region
        %s757 = smul.u32 %s25, 2
        %s758 = sadd.s32 %s757, %s26
        %s759 = smul.u32 4, %s758
        %p760 = scmp.lt.s32.totalorder %s759, 15
        %s761 = scalar_select %p760, %s759, 15
        %s762 = smul.addr %s761, 8
        %s763 = scalar_lea.vmem %s8, %s762
      $region64: #{transunet_encoder_conv_block.7} parent=59 // pred_fallthru
        _
    $region60: #{transunet_encoder_conv_block.7} parent=5 // pred_fallthru
      _
  $region6: #{transunet_encoder_conv_block.7} parent=0 // loop_footer
    %s18 = sadd.s32 1, %s14
  $region7: #{transunet_encoder_conv_block.7} parent=0 // loop_footer_branch
    %13 = sbr.rel target = $region3
  $region8: #{transunet_encoder_conv_block.7} parent=0 // loop_exit
    _

</llo_original>
